<compile_context>
chip_gen: v7x
topology: tpu7x:2x2x1
jax: 0.10.0
libtpu: 0.0.40
codegen_flags: <defaults>
</compile_context>

<pallas_src>
import functools
import math

import jax
import jax.numpy as jnp
from jax.experimental import pallas as pl
from jax.experimental.pallas import tpu as pltpu


def _round_up(x, m):
    return ((x + m - 1) // m) * m


# ----------------------------------------------------------------------------
# Pallas kernel 1: single-K-tile fused matmul (optionally two chained matmuls)
#   out = [relu]( relu?(A) @ W1 + b1  [-> relu -> @ W2 + b2]  [+ residual] )
#   bf16 MXU operands, f32 epilogue math, bf16/f32 store.
# ----------------------------------------------------------------------------
def _fused_kernel(*refs, input_relu, mid_relu, output_relu, two_mm, has_res):
    it = iter(refs)
    a_ref = next(it)
    w1_ref = next(it)
    b1_ref = next(it)
    w2_ref = next(it) if two_mm else None
    b2_ref = next(it) if two_mm else None
    res_ref = next(it) if has_res else None
    o_ref = next(it)

    a = a_ref[...]
    if input_relu:
        a = jnp.maximum(a, jnp.zeros((), a.dtype))
    t = jnp.dot(a, w1_ref[...], preferred_element_type=jnp.float32) + b1_ref[...]
    if two_mm:
        if mid_relu:
            t = jnp.maximum(t, 0.0)
        t = jnp.dot(t.astype(w2_ref.dtype), w2_ref[...],
                    preferred_element_type=jnp.float32) + b2_ref[...]
    if has_res:
        t = t + res_ref[...].astype(jnp.float32)
    if output_relu:
        t = jnp.maximum(t, 0.0)
    o_ref[...] = t.astype(o_ref.dtype)


def fused_matmul(a, w1, b1, *, w2=None, b2=None, residual=None,
                 input_relu=False, mid_relu=False, output_relu=False,
                 out_dtype=jnp.bfloat16, max_tm=512):
    """a:(M,K) @ w1:(K,N1) + b1 [-> relu -> @ w2:(N1,N) + b2] [+ residual:(M,N)].

    Single K tile (all layers in this model have padded K <= 256, so the full
    (tm, Kp) operand fits VMEM comfortably); weights / biases are resident
    across M blocks.  Grid is a single 'parallel' axis over M.
    """
    M, K = a.shape
    N1 = w1.shape[1]
    two_mm = w2 is not None
    N = w2.shape[1] if two_mm else N1
    has_res = residual is not None

    Kp = _round_up(K, 128)
    N1p = _round_up(N1, 128)
    Np = _round_up(N, 128)

    # M tile: aim for >= 2 blocks once M is large enough (keeps both v7x
    # TensorCores busy); at the toy shapes this collapses to a single block.
    Mru = _round_up(M, 8)
    if Mru >= 2 * max_tm:
        tm = max_tm
    elif Mru >= 256:
        tm = _round_up((Mru + 1) // 2, 8)
    else:
        tm = Mru
    Mp = _round_up(Mru, tm)

    a_p = jnp.pad(a, ((0, Mp - M), (0, Kp - K))).astype(jnp.bfloat16)
    w1_p = jnp.pad(w1, ((0, Kp - K), (0, N1p - N1))).astype(jnp.bfloat16)
    b1_p = jnp.pad(b1.astype(jnp.float32), (0, N1p - N1)).reshape(1, N1p)

    ins = [a_p, w1_p, b1_p]
    in_specs = [
        pl.BlockSpec((tm, Kp), lambda i: (i, 0)),
        pl.BlockSpec((Kp, N1p), lambda i: (0, 0)),     # resident across M blocks
        pl.BlockSpec((1, N1p), lambda i: (0, 0)),
    ]
    if two_mm:
        w2_p = jnp.pad(w2, ((0, N1p - N1), (0, Np - N))).astype(jnp.bfloat16)
        b2_p = jnp.pad(b2.astype(jnp.float32), (0, Np - N)).reshape(1, Np)
        ins += [w2_p, b2_p]
        in_specs += [pl.BlockSpec((N1p, Np), lambda i: (0, 0)),
                     pl.BlockSpec((1, Np), lambda i: (0, 0))]
    if has_res:
        ins.append(jnp.pad(residual, ((0, Mp - M), (0, Np - N))))   # bf16 or f32 as-is
        in_specs.append(pl.BlockSpec((tm, Np), lambda i: (i, 0)))

    kernel = functools.partial(_fused_kernel, input_relu=input_relu,
                               mid_relu=mid_relu, output_relu=output_relu,
                               two_mm=two_mm, has_res=has_res)
    out = pl.pallas_call(
        kernel,
        out_shape=jax.ShapeDtypeStruct((Mp, Np), out_dtype),
        grid=(Mp // tm,),
        in_specs=in_specs,
        out_specs=pl.BlockSpec((tm, Np), lambda i: (i, 0)),
        compiler_params=pltpu.CompilerParams(
            dimension_semantics=("parallel",),
            vmem_limit_bytes=32 * 1024 * 1024),
    )(*ins)
    # TODO(synk): output is sliced back to (M, N) and re-padded by the next
    # layer's im2col; carrying the lane-padded slab end-to-end needs an
    # in-kernel halo'd direct-conv (manual DMA) instead of XLA im2col glue.
    return out[:M, :N]


# ----------------------------------------------------------------------------
# Pallas kernel 2: vector quantization (nearest codebook entry)
#   Transposed (D, M) layout: M rides the 128-lane axis, so indices / squared
#   errors / codes are lane-dense full-width stores.  Codebook resident.
# ----------------------------------------------------------------------------
def _vq_kernel(flatT_ref, emb_ref, e2_ref, zqT_ref, inds_ref, sq_ref):
    flatT = flatT_ref[...]                    # (D, tm) f32
    emb = emb_ref[...]                        # (E, D)  f32 (resident)
    e2 = e2_ref[...]                          # (E, 1)  precomputed ||emb||^2

    # argmin_e ||x_m - emb_e||^2 == argmin_e (||emb_e||^2 - 2 emb_e . x_m)
    cross = jnp.dot(emb, flatT, preferred_element_type=jnp.float32)    # (E, tm)
    d2 = e2 - 2.0 * cross                                              # (E, tm)

    row = jax.lax.broadcasted_iota(jnp.int32, d2.shape, 0)             # (E, tm)
    dmin = jnp.min(d2, axis=0, keepdims=True)                          # (1, tm)
    big = jnp.int32(2 ** 30)
    inds = jnp.min(jnp.where(d2 <= dmin, row, big), axis=0, keepdims=True)
    inds_ref[...] = inds                                               # (1, tm)

    onehot = (row == inds).astype(jnp.float32)                         # (E, tm)
    zqT = jax.lax.dot_general(emb, onehot, (((0,), (0,)), ((), ())),
                              preferred_element_type=jnp.float32)      # (D, tm)
    zqT_ref[...] = zqT

    diff = flatT - zqT
    sq_ref[...] = jnp.sum(diff * diff, axis=0, keepdims=True)          # (1, tm)


def vq_quantize(flat, embedding):
    """flat:(M,D) -> (zq:(M,D), inds:(M,), rowsq:(M,))."""
    M, D = flat.shape
    E, _ = embedding.shape

    tm = min(1024, _round_up(M, 128))          # deep M tiles amortize grid-step cost
    Mp = _round_up(M, tm)

    flatT = jnp.pad(flat.astype(jnp.float32).T, ((0, 0), (0, Mp - M)))  # (D, Mp)
    emb = embedding.astype(jnp.float32)
    e2 = jnp.sum(emb * emb, axis=1, keepdims=True)                      # hoisted

    zqT, inds, sq = pl.pallas_call(
        _vq_kernel,
        out_shape=(jax.ShapeDtypeStruct((D, Mp), jnp.float32),
                   jax.ShapeDtypeStruct((1, Mp), jnp.int32),
                   jax.ShapeDtypeStruct((1, Mp), jnp.float32)),
        grid=(Mp // tm,),
        in_specs=[pl.BlockSpec((D, tm), lambda i: (0, i)),
                  pl.BlockSpec((E, D), lambda i: (0, 0)),
                  pl.BlockSpec((E, 1), lambda i: (0, 0))],
        out_specs=(pl.BlockSpec((D, tm), lambda i: (0, i)),
                   pl.BlockSpec((1, tm), lambda i: (0, i)),
                   pl.BlockSpec((1, tm), lambda i: (0, i))),
        compiler_params=pltpu.CompilerParams(
            dimension_semantics=("parallel",),
            vmem_limit_bytes=32 * 1024 * 1024),
    )(flatT, emb, e2)

    return zqT[:, :M].T, inds[0, :M], sq[0, :M]


# ----------------------------------------------------------------------------
# Conv / ResBlock / ConvTranspose wrappers (im2col glue + fused Pallas matmul)
# ----------------------------------------------------------------------------
def _im2col(x, kh, kw, stride, pad):
    """NHWC im2col -> (N*Hout*Wout, kh*kw*C), tap-major column order."""
    N, H, W, C = x.shape
    if pad:
        x = jnp.pad(x, ((0, 0), (pad, pad), (pad, pad), (0, 0)))
    Hp, Wp = H + 2 * pad, W + 2 * pad
    Hout = (Hp - kh) // stride + 1
    Wout = (Wp - kw) // stride + 1
    # TODO(synk): the kh*kw tap copies are still materialized in HBM by XLA;
    # removing them needs an in-kernel tap loop over a halo'd spatial tile.
    cols = []
    for i in range(kh):
        for j in range(kw):
            cols.append(x[:, i:i + (Hout - 1) * stride + 1:stride,
                             j:j + (Wout - 1) * stride + 1:stride, :])
    a = jnp.concatenate(cols, axis=-1).reshape(N * Hout * Wout, kh * kw * C)
    return a, Hout, Wout


def conv2d(x, w, b, *, stride, pad, input_relu=False, output_relu=False,
           out_dtype=jnp.bfloat16):
    """x: NHWC.  w: PyTorch layout (Cout, Cin, kh, kw).  b: (Cout,)."""
    N = x.shape[0]
    Cout, Cin, kh, kw = w.shape
    a, Hout, Wout = _im2col(x, kh, kw, stride, pad)
    wmat = jnp.transpose(w, (2, 3, 1, 0)).reshape(kh * kw * Cin, Cout)
    out = fused_matmul(a, wmat, b, input_relu=input_relu,
                       output_relu=output_relu, out_dtype=out_dtype)
    return out.reshape(N, Hout, Wout, Cout)


def resblock(x, w1, b1, w2, b2, out_dtype=jnp.bfloat16):
    """x + conv1x1(relu(conv3x3(relu(x)))) as ONE pallas_call (fused ResBlock)."""
    N, H, W, C = x.shape
    Cr = w1.shape[0]
    a, _, _ = _im2col(x, 3, 3, 1, 1)                       # relu applied in-kernel
    w1m = jnp.transpose(w1, (2, 3, 1, 0)).reshape(9 * C, Cr)
    w2m = jnp.transpose(w2, (2, 3, 1, 0)).reshape(Cr, C)   # 1x1 conv
    res = x.reshape(N * H * W, C)
    out = fused_matmul(a, w1m, b1, w2=w2m, b2=b2, residual=res,
                       input_relu=True, mid_relu=True, out_dtype=out_dtype)
    return out.reshape(N, H, W, C)


def _convT_fused_weight(w):
    """ConvTranspose2d(k=4,s=2,p=1) weight (Cin,Cout,4,4) -> equivalent stride-1
    3x3 conv weight (4*Cout, Cin, 3, 3) producing all 4 output phases at once.

    Output position (2i+r, 2j+c) reads input (i-1+di, j-1+dj) with transposed
    kernel index a = r+3-2*di, b = c+3-2*dj (invalid taps are zero)."""
    Cin, Cout, kh, kw = w.shape
    assert kh == 4 and kw == 4
    wc = jnp.zeros((2, 2, Cout, Cin, 3, 3), jnp.float32)
    for di in range(3):
        for r in range(2):
            a = r + 3 - 2 * di
            if not 0 <= a < 4:
                continue
            for dj in range(3):
                for c in range(2):
                    b = c + 3 - 2 * dj
                    if not 0 <= b < 4:
                        continue
                    wc = wc.at[r, c, :, :, di, dj].set(w[:, :, a, b].T)
    return wc.reshape(4 * Cout, Cin, 3, 3)


def conv_transpose2d(x, w, b, *, input_relu=False, output_relu=False,
                     out_dtype=jnp.bfloat16):
    """x: NHWC.  w: PyTorch ConvTranspose2d layout (Cin, Cout, 4, 4), s=2, p=1.

    All s^2=4 phases merged into one stride-1 3x3 conv (one pallas_call) with
    4*Cout output columns, then interleaved with a reshape (no strided scatters).
    """
    N, H, W, Cin = x.shape
    Cout = w.shape[1]
    wc = _convT_fused_weight(w)                    # (4*Cout, Cin, 3, 3)
    bb = jnp.tile(b, 4)                            # same bias for every phase
    y = conv2d(x, wc, bb, stride=1, pad=1, input_relu=input_relu,
               output_relu=output_relu, out_dtype=out_dtype)   # (N, H, W, 4*Cout)
    y = y.reshape(N, H, W, 2, 2, Cout).transpose(0, 1, 3, 2, 4, 5)
    return y.reshape(N, 2 * H, 2 * W, Cout)


# ----------------------------------------------------------------------------
# Parameter init (deterministic, PyTorch-like uniform fan-in init)
# ----------------------------------------------------------------------------
def init_params(key, nEmbeds, embedDim, nResidLayers, nResidHiddens, nHiddens):
    keys = iter(jax.random.split(key, 64))

    def conv_init(cout, cin, k):
        bound = 1.0 / math.sqrt(cin * k * k)
        w = jax.random.uniform(next(keys), (cout, cin, k, k), jnp.float32, -bound, bound)
        b = jax.random.uniform(next(keys), (cout,), jnp.float32, -bound, bound)
        return w, b

    def convT_init(cin, cout, k):
        bound = 1.0 / math.sqrt(cout * k * k)
        w = jax.random.uniform(next(keys), (cin, cout, k, k), jnp.float32, -bound, bound)
        b = jax.random.uniform(next(keys), (cout,), jnp.float32, -bound, bound)
        return w, b

    p = {}
    p["enc1"] = conv_init(nHiddens, 3, 4)
    p["enc2"] = conv_init(nHiddens, nHiddens, 4)
    p["enc_res"] = [conv_init(nResidHiddens, nHiddens, 3) + conv_init(nHiddens, nResidHiddens, 1)
                    for _ in range(nResidLayers)]
    p["enc3"] = conv_init(embedDim, nHiddens, 1)
    p["embedding"] = jax.random.uniform(
        next(keys), (nEmbeds, embedDim), jnp.float32, -1.0 / nEmbeds, 1.0 / nEmbeds)
    p["dec_res"] = [conv_init(nResidHiddens, embedDim, 3) + conv_init(embedDim, nResidHiddens, 1)
                    for _ in range(nResidLayers)]
    p["dec1"] = convT_init(embedDim, nHiddens, 4)
    p["dec2"] = convT_init(nHiddens, 3, 4)
    return p


# ----------------------------------------------------------------------------
# Full VQ-VAE forward
# ----------------------------------------------------------------------------
def vq_vae_forward(params, img):
    # layout: img is NCHW like PyTorch; compute in NHWC; recon returned NCHW.
    x = jnp.transpose(img, (0, 2, 3, 1))

    # --- encoder ---
    h = conv2d(x, *params["enc1"], stride=2, pad=1, output_relu=True)
    h = conv2d(h, *params["enc2"], stride=2, pad=1, output_relu=True)
    for (w1, b1, w2, b2) in params["enc_res"]:
        h = resblock(h, w1, b1, w2, b2)                       # one pallas_call each
    # ResStack trailing ReLU folded into the 1x1 projection's input
    z_e = conv2d(h, *params["enc3"], stride=1, pad=0, input_relu=True,
                 out_dtype=jnp.float32)

    # --- codebook (VQ straight-through, forward values) ---
    N, Hh, Ww, D = z_e.shape
    flat = z_e.reshape(N * Hh * Ww, D)           # same (n, h, w) row order as torch
    zq_flat, inds, rowsq = vq_quantize(flat, params["embedding"])
    vq_loss = 1.25 * rowsq.reshape(N, Hh * Ww).sum(axis=1) / (Hh * Ww * D)
    # straight-through estimator: forward value is exactly z_q
    z_q = zq_flat.reshape(N, Hh, Ww, D)

    # --- decoder ---
    d = z_q
    for (w1, b1, w2, b2) in params["dec_res"]:
        d = resblock(d, w1, b1, w2, b2)                       # one pallas_call each
    # ResStack trailing ReLU + decoder ReLU folded into transposed-conv input
    d = conv_transpose2d(d, *params["dec1"], input_relu=True, output_relu=True)
    recon = conv_transpose2d(d, *params["dec2"], out_dtype=jnp.float32)

    recon = jnp.transpose(recon, (0, 3, 1, 2))   # back to NCHW
    inds = inds.reshape(-1, 1)
    # TODO(synk): PyTorch returns indices as int64; returned here as int32 (x64 off).
    # TODO(synk): forward-only -- no stop_gradient/custom_vjp, so gradients of the
    # straight-through estimator / VQ loss are not reproduced.
    return recon, vq_loss, inds


if __name__ == "__main__":
    nEmbeds, embedDim, nResidLayers, nResidHiddens, nHiddens = 16, 8, 2, 8, 16

    key = jax.random.PRNGKey(0)
    kp, kx = jax.random.split(key)
    params = init_params(kp, nEmbeds, embedDim, nResidLayers, nResidHiddens, nHiddens)
    img = jax.random.normal(kx, (2, 3, 16, 16), jnp.float32)   # NCHW input

    fwd = jax.jit(vq_vae_forward)
    recon, vq_loss, inds = fwd(params, img)
    jax.block_until_ready((recon, vq_loss, inds))

    assert recon.shape == (2, 3, 16, 16)
    assert vq_loss.shape == (2,)
    assert inds.shape == (2 * 4 * 4, 1)
    print("KERNEL_OK")
</pallas_src>

<mosaic_0001>
module attributes {stable_mosaic.version = 11 : i64} {
  func.func @_fused_kernel(%arg0: i32, %arg1: memref<128x128xbf16, #tpu.memory_space<vmem>>, %arg2: memref<128x128xbf16, #tpu.memory_space<vmem>>, %arg3: memref<1x128xf32, #tpu.memory_space<vmem>>, %arg4: memref<128x128xbf16, #tpu.memory_space<vmem>>) attributes {dimension_semantics = [#tpu.dimension_semantics<parallel>], iteration_bounds = array<i64: 1>, scalar_prefetch = 0 : i64, scratch_operands = 0 : i64, tpu.core_type = #tpu.core_type<tc>, window_params = [{transform_indices = @transform_0, window_bounds = array<i64: 128, 128>}, {pipeline_mode = #tpu.pipeline_mode<synchronous>, transform_indices = @transform_1, window_bounds = array<i64: 128, 128>}, {pipeline_mode = #tpu.pipeline_mode<synchronous>, transform_indices = @transform_2, window_bounds = array<i64: 1, 128>}, {transform_indices = @transform_3, window_bounds = array<i64: 128, 128>}]} {
    %c0 = arith.constant 0 : index
    %c0_0 = arith.constant 0 : index
    %0 = vector.load %arg1[%c0, %c0_0] : memref<128x128xbf16, #tpu.memory_space<vmem>>, vector<128x128xbf16>
    %c0_1 = arith.constant 0 : index
    %c0_2 = arith.constant 0 : index
    %1 = vector.load %arg2[%c0_1, %c0_2] : memref<128x128xbf16, #tpu.memory_space<vmem>>, vector<128x128xbf16>
    %cst = arith.constant dense<0.000000e+00> : vector<128x128xf32>
    %2 = tpu.matmul %0, %1, %cst {dimension_numbers = #tpu.dot_dimension_numbers<[1], [0], [0], [1], [0, 0, 1, 1], [], []>} : vector<128x128xbf16>, vector<128x128xbf16>, vector<128x128xf32> -> vector<128x128xf32>
    %c0_3 = arith.constant 0 : index
    %c0_4 = arith.constant 0 : index
    %3 = vector.load %arg3[%c0_3, %c0_4] : memref<1x128xf32, #tpu.memory_space<vmem>>, vector<1x128xf32>
    %4 = vector.broadcast %3 : vector<1x128xf32> to vector<128x128xf32>
    %5 = arith.addf %2, %4 : vector<128x128xf32>
    %cst_5 = arith.constant 0.000000e+00 : f32
    %6 = vector.broadcast %cst_5 : f32 to vector<128x128xf32>
    %7 = arith.maximumf %5, %6 : vector<128x128xf32>
    %8 = arith.truncf %7 : vector<128x128xf32> to vector<128x128xbf16>
    %c0_6 = arith.constant 0 : index
    %c0_7 = arith.constant 0 : index
    %9 = vector.load %arg4[%c0_6, %c0_7] : memref<128x128xbf16, #tpu.memory_space<vmem>>, vector<128x128xbf16>
    tpu.vector_store %arg4[%c0_6, %c0_7], %8 {strides = array<i32>} : memref<128x128xbf16, #tpu.memory_space<vmem>>, vector<128x128xbf16>,
    return
  }
  func.func @transform_0(%arg0: i32) -> (i32, i32) {
    %c0_i32 = arith.constant 0 : i32
    %c0_i32_0 = arith.constant 0 : i32
    return %arg0, %c0_i32 : i32, i32
  }
  func.func @transform_1(%arg0: i32) -> (i32, i32) {
    %c0_i32 = arith.constant 0 : i32
    %c0_i32_0 = arith.constant 0 : i32
    %c0_i32_1 = arith.constant 0 : i32
    return %c0_i32, %c0_i32_0 : i32, i32
  }
  func.func @transform_2(%arg0: i32) -> (i32, i32) {
    %c0_i32 = arith.constant 0 : i32
    %c0_i32_0 = arith.constant 0 : i32
    %c0_i32_1 = arith.constant 0 : i32
    return %c0_i32, %c0_i32_0 : i32, i32
  }
  func.func @transform_3(%arg0: i32) -> (i32, i32) {
    %c0_i32 = arith.constant 0 : i32
    %c0_i32_0 = arith.constant 0 : i32
    return %arg0, %c0_i32 : i32, i32
  }
}

module attributes {stable_mosaic.version = 11 : i64} {
  func.func @_fused_kernel(%arg0: i32, %arg1: memref<32x256xbf16, #tpu.memory_space<vmem>>, %arg2: memref<256x128xbf16, #tpu.memory_space<vmem>>, %arg3: memref<1x128xf32, #tpu.memory_space<vmem>>, %arg4: memref<32x128xbf16, #tpu.memory_space<vmem>>) attributes {dimension_semantics = [#tpu.dimension_semantics<parallel>], iteration_bounds = array<i64: 1>, scalar_prefetch = 0 : i64, scratch_operands = 0 : i64, tpu.core_type = #tpu.core_type<tc>, window_params = [{transform_indices = @transform_0, window_bounds = array<i64: 32, 256>}, {pipeline_mode = #tpu.pipeline_mode<synchronous>, transform_indices = @transform_1, window_bounds = array<i64: 256, 128>}, {pipeline_mode = #tpu.pipeline_mode<synchronous>, transform_indices = @transform_2, window_bounds = array<i64: 1, 128>}, {transform_indices = @transform_3, window_bounds = array<i64: 32, 128>}]} {
    %c0 = arith.constant 0 : index
    %c0_0 = arith.constant 0 : index
    %0 = vector.load %arg1[%c0, %c0_0] : memref<32x256xbf16, #tpu.memory_space<vmem>>, vector<32x256xbf16>
    %c0_1 = arith.constant 0 : index
    %c0_2 = arith.constant 0 : index
    %1 = vector.load %arg2[%c0_1, %c0_2] : memref<256x128xbf16, #tpu.memory_space<vmem>>, vector<256x128xbf16>
    %cst = arith.constant dense<0.000000e+00> : vector<32x128xf32>
    %2 = tpu.matmul %0, %1, %cst {dimension_numbers = #tpu.dot_dimension_numbers<[1], [0], [0], [1], [0, 0, 1, 1], [], []>} : vector<32x256xbf16>, vector<256x128xbf16>, vector<32x128xf32> -> vector<32x128xf32>
    %c0_3 = arith.constant 0 : index
    %c0_4 = arith.constant 0 : index
    %3 = vector.load %arg3[%c0_3, %c0_4] : memref<1x128xf32, #tpu.memory_space<vmem>>, vector<1x128xf32>
    %4 = vector.broadcast %3 : vector<1x128xf32> to vector<32x128xf32>
    %5 = arith.addf %2, %4 : vector<32x128xf32>
    %cst_5 = arith.constant 0.000000e+00 : f32
    %6 = vector.broadcast %cst_5 : f32 to vector<32x128xf32>
    %7 = arith.maximumf %5, %6 : vector<32x128xf32>
    %8 = arith.truncf %7 : vector<32x128xf32> to vector<32x128xbf16>
    %c0_6 = arith.constant 0 : index
    %c0_7 = arith.constant 0 : index
    %9 = vector.load %arg4[%c0_6, %c0_7] : memref<32x128xbf16, #tpu.memory_space<vmem>>, vector<32x128xbf16>
    tpu.vector_store %arg4[%c0_6, %c0_7], %8 {strides = array<i32>} : memref<32x128xbf16, #tpu.memory_space<vmem>>, vector<32x128xbf16>,
    return
  }
  func.func @transform_0(%arg0: i32) -> (i32, i32) {
    %c0_i32 = arith.constant 0 : i32
    %c0_i32_0 = arith.constant 0 : i32
    return %arg0, %c0_i32 : i32, i32
  }
  func.func @transform_1(%arg0: i32) -> (i32, i32) {
    %c0_i32 = arith.constant 0 : i32
    %c0_i32_0 = arith.constant 0 : i32
    %c0_i32_1 = arith.constant 0 : i32
    return %c0_i32, %c0_i32_0 : i32, i32
  }
  func.func @transform_2(%arg0: i32) -> (i32, i32) {
    %c0_i32 = arith.constant 0 : i32
    %c0_i32_0 = arith.constant 0 : i32
    %c0_i32_1 = arith.constant 0 : i32
    return %c0_i32, %c0_i32_0 : i32, i32
  }
  func.func @transform_3(%arg0: i32) -> (i32, i32) {
    %c0_i32 = arith.constant 0 : i32
    %c0_i32_0 = arith.constant 0 : i32
    return %arg0, %c0_i32 : i32, i32
  }
}

module attributes {stable_mosaic.version = 11 : i64} {
  func.func @_fused_kernel(%arg0: i32, %arg1: memref<32x128xbf16, #tpu.memory_space<vmem>>, %arg2: memref<128x128xbf16, #tpu.memory_space<vmem>>, %arg3: memref<1x128xf32, #tpu.memory_space<vmem>>, %arg4: memref<32x128xf32, #tpu.memory_space<vmem>>) attributes {dimension_semantics = [#tpu.dimension_semantics<parallel>], iteration_bounds = array<i64: 1>, scalar_prefetch = 0 : i64, scratch_operands = 0 : i64, tpu.core_type = #tpu.core_type<tc>, window_params = [{transform_indices = @transform_0, window_bounds = array<i64: 32, 128>}, {pipeline_mode = #tpu.pipeline_mode<synchronous>, transform_indices = @transform_1, window_bounds = array<i64: 128, 128>}, {pipeline_mode = #tpu.pipeline_mode<synchronous>, transform_indices = @transform_2, window_bounds = array<i64: 1, 128>}, {transform_indices = @transform_3, window_bounds = array<i64: 32, 128>}]} {
    %c0 = arith.constant 0 : index
    %c0_0 = arith.constant 0 : index
    %0 = vector.load %arg1[%c0, %c0_0] : memref<32x128xbf16, #tpu.memory_space<vmem>>, vector<32x128xbf16>
    %cst = arith.constant 0.000000e+00 : bf16
    %1 = vector.broadcast %cst : bf16 to vector<32x128xbf16>
    %2 = arith.maximumf %0, %1 : vector<32x128xbf16>
    %c0_1 = arith.constant 0 : index
    %c0_2 = arith.constant 0 : index
    %3 = vector.load %arg2[%c0_1, %c0_2] : memref<128x128xbf16, #tpu.memory_space<vmem>>, vector<128x128xbf16>
    %cst_3 = arith.constant dense<0.000000e+00> : vector<32x128xf32>
    %4 = tpu.matmul %2, %3, %cst_3 {dimension_numbers = #tpu.dot_dimension_numbers<[1], [0], [0], [1], [0, 0, 1, 1], [], []>} : vector<32x128xbf16>, vector<128x128xbf16>, vector<32x128xf32> -> vector<32x128xf32>
    %c0_4 = arith.constant 0 : index
    %c0_5 = arith.constant 0 : index
    %5 = vector.load %arg3[%c0_4, %c0_5] : memref<1x128xf32, #tpu.memory_space<vmem>>, vector<1x128xf32>
    %6 = vector.broadcast %5 : vector<1x128xf32> to vector<32x128xf32>
    %7 = arith.addf %4, %6 : vector<32x128xf32>
    %c0_6 = arith.constant 0 : index
    %c0_7 = arith.constant 0 : index
    %8 = vector.load %arg4[%c0_6, %c0_7] : memref<32x128xf32, #tpu.memory_space<vmem>>, vector<32x128xf32>
    tpu.vector_store %arg4[%c0_6, %c0_7], %7 {strides = array<i32>} : memref<32x128xf32, #tpu.memory_space<vmem>>, vector<32x128xf32>,
    return
  }
  func.func @transform_0(%arg0: i32) -> (i32, i32) {
    %c0_i32 = arith.constant 0 : i32
    %c0_i32_0 = arith.constant 0 : i32
    return %arg0, %c0_i32 : i32, i32
  }
  func.func @transform_1(%arg0: i32) -> (i32, i32) {
    %c0_i32 = arith.constant 0 : i32
    %c0_i32_0 = arith.constant 0 : i32
    %c0_i32_1 = arith.constant 0 : i32
    return %c0_i32, %c0_i32_0 : i32, i32
  }
  func.func @transform_2(%arg0: i32) -> (i32, i32) {
    %c0_i32 = arith.constant 0 : i32
    %c0_i32_0 = arith.constant 0 : i32
    %c0_i32_1 = arith.constant 0 : i32
    return %c0_i32, %c0_i32_0 : i32, i32
  }
  func.func @transform_3(%arg0: i32) -> (i32, i32) {
    %c0_i32 = arith.constant 0 : i32
    %c0_i32_0 = arith.constant 0 : i32
    return %arg0, %c0_i32 : i32, i32
  }
}

module attributes {stable_mosaic.version = 11 : i64} {
  func.func @_fused_kernel(%arg0: i32, %arg1: memref<32x256xbf16, #tpu.memory_space<vmem>>, %arg2: memref<256x128xbf16, #tpu.memory_space<vmem>>, %arg3: memref<1x128xf32, #tpu.memory_space<vmem>>, %arg4: memref<128x128xbf16, #tpu.memory_space<vmem>>, %arg5: memref<1x128xf32, #tpu.memory_space<vmem>>, %arg6: memref<32x128xbf16, #tpu.memory_space<vmem>>, %arg7: memref<32x128xbf16, #tpu.memory_space<vmem>>) attributes {dimension_semantics = [#tpu.dimension_semantics<parallel>], iteration_bounds = array<i64: 1>, scalar_prefetch = 0 : i64, scratch_operands = 0 : i64, tpu.core_type = #tpu.core_type<tc>, window_params = [{transform_indices = @transform_0, window_bounds = array<i64: 32, 256>}, {pipeline_mode = #tpu.pipeline_mode<synchronous>, transform_indices = @transform_1, window_bounds = array<i64: 256, 128>}, {pipeline_mode = #tpu.pipeline_mode<synchronous>, transform_indices = @transform_2, window_bounds = array<i64: 1, 128>}, {pipeline_mode = #tpu.pipeline_mode<synchronous>, transform_indices = @transform_3, window_bounds = array<i64: 128, 128>}, {pipeline_mode = #tpu.pipeline_mode<synchronous>, transform_indices = @transform_4, window_bounds = array<i64: 1, 128>}, {transform_indices = @transform_5, window_bounds = array<i64: 32, 128>}, {transform_indices = @transform_6, window_bounds = array<i64: 32, 128>}]} {
    %c0 = arith.constant 0 : index
    %c0_0 = arith.constant 0 : index
    %0 = vector.load %arg1[%c0, %c0_0] : memref<32x256xbf16, #tpu.memory_space<vmem>>, vector<32x256xbf16>
    %cst = arith.constant 0.000000e+00 : bf16
    %1 = vector.broadcast %cst : bf16 to vector<32x256xbf16>
    %2 = arith.maximumf %0, %1 : vector<32x256xbf16>
    %c0_1 = arith.constant 0 : index
    %c0_2 = arith.constant 0 : index
    %3 = vector.load %arg2[%c0_1, %c0_2] : memref<256x128xbf16, #tpu.memory_space<vmem>>, vector<256x128xbf16>
    %cst_3 = arith.constant dense<0.000000e+00> : vector<32x128xf32>
    %4 = tpu.matmul %2, %3, %cst_3 {dimension_numbers = #tpu.dot_dimension_numbers<[1], [0], [0], [1], [0, 0, 1, 1], [], []>} : vector<32x256xbf16>, vector<256x128xbf16>, vector<32x128xf32> -> vector<32x128xf32>
    %c0_4 = arith.constant 0 : index
    %c0_5 = arith.constant 0 : index
    %5 = vector.load %arg3[%c0_4, %c0_5] : memref<1x128xf32, #tpu.memory_space<vmem>>, vector<1x128xf32>
    %6 = vector.broadcast %5 : vector<1x128xf32> to vector<32x128xf32>
    %7 = arith.addf %4, %6 : vector<32x128xf32>
    %cst_6 = arith.constant 0.000000e+00 : f32
    %8 = vector.broadcast %cst_6 : f32 to vector<32x128xf32>
    %9 = arith.maximumf %7, %8 : vector<32x128xf32>
    %10 = arith.truncf %9 : vector<32x128xf32> to vector<32x128xbf16>
    %c0_7 = arith.constant 0 : index
    %c0_8 = arith.constant 0 : index
    %11 = vector.load %arg4[%c0_7, %c0_8] : memref<128x128xbf16, #tpu.memory_space<vmem>>, vector<128x128xbf16>
    %cst_9 = arith.constant dense<0.000000e+00> : vector<32x128xf32>
    %12 = tpu.matmul %10, %11, %cst_9 {dimension_numbers = #tpu.dot_dimension_numbers<[1], [0], [0], [1], [0, 0, 1, 1], [], []>} : vector<32x128xbf16>, vector<128x128xbf16>, vector<32x128xf32> -> vector<32x128xf32>
    %c0_10 = arith.constant 0 : index
    %c0_11 = arith.constant 0 : index
    %13 = vector.load %arg5[%c0_10, %c0_11] : memref<1x128xf32, #tpu.memory_space<vmem>>, vector<1x128xf32>
    %14 = vector.broadcast %13 : vector<1x128xf32> to vector<32x128xf32>
    %15 = arith.addf %12, %14 : vector<32x128xf32>
    %c0_12 = arith.constant 0 : index
    %c0_13 = arith.constant 0 : index
    %16 = vector.load %arg6[%c0_12, %c0_13] : memref<32x128xbf16, #tpu.memory_space<vmem>>, vector<32x128xbf16>
    %17 = arith.extf %16 : vector<32x128xbf16> to vector<32x128xf32>
    %18 = arith.addf %15, %17 : vector<32x128xf32>
    %19 = arith.truncf %18 : vector<32x128xf32> to vector<32x128xbf16>
    %c0_14 = arith.constant 0 : index
    %c0_15 = arith.constant 0 : index
    %20 = vector.load %arg7[%c0_14, %c0_15] : memref<32x128xbf16, #tpu.memory_space<vmem>>, vector<32x128xbf16>
    tpu.vector_store %arg7[%c0_14, %c0_15], %19 {strides = array<i32>} : memref<32x128xbf16, #tpu.memory_space<vmem>>, vector<32x128xbf16>,
    return
  }
  func.func @transform_0(%arg0: i32) -> (i32, i32) {
    %c0_i32 = arith.constant 0 : i32
    %c0_i32_0 = arith.constant 0 : i32
    return %arg0, %c0_i32 : i32, i32
  }
  func.func @transform_1(%arg0: i32) -> (i32, i32) {
    %c0_i32 = arith.constant 0 : i32
    %c0_i32_0 = arith.constant 0 : i32
    %c0_i32_1 = arith.constant 0 : i32
    return %c0_i32, %c0_i32_0 : i32, i32
  }
  func.func @transform_2(%arg0: i32) -> (i32, i32) {
    %c0_i32 = arith.constant 0 : i32
    %c0_i32_0 = arith.constant 0 : i32
    %c0_i32_1 = arith.constant 0 : i32
    return %c0_i32, %c0_i32_0 : i32, i32
  }
  func.func @transform_3(%arg0: i32) -> (i32, i32) {
    %c0_i32 = arith.constant 0 : i32
    %c0_i32_0 = arith.constant 0 : i32
    %c0_i32_1 = arith.constant 0 : i32
    return %c0_i32, %c0_i32_0 : i32, i32
  }
  func.func @transform_4(%arg0: i32) -> (i32, i32) {
    %c0_i32 = arith.constant 0 : i32
    %c0_i32_0 = arith.constant 0 : i32
    %c0_i32_1 = arith.constant 0 : i32
    return %c0_i32, %c0_i32_0 : i32, i32
  }
  func.func @transform_5(%arg0: i32) -> (i32, i32) {
    %c0_i32 = arith.constant 0 : i32
    %c0_i32_0 = arith.constant 0 : i32
    return %arg0, %c0_i32 : i32, i32
  }
  func.func @transform_6(%arg0: i32) -> (i32, i32) {
    %c0_i32 = arith.constant 0 : i32
    %c0_i32_0 = arith.constant 0 : i32
    return %arg0, %c0_i32 : i32, i32
  }
}

module attributes {stable_mosaic.version = 11 : i64} {
  func.func @_vq_kernel(%arg0: i32, %arg1: memref<8x128xf32, #tpu.memory_space<vmem>>, %arg2: memref<16x8xf32, #tpu.memory_space<vmem>>, %arg3: memref<16x1xf32, #tpu.memory_space<vmem>>, %arg4: memref<8x128xf32, #tpu.memory_space<vmem>>, %arg5: memref<1x128xi32, #tpu.memory_space<vmem>>, %arg6: memref<1x128xf32, #tpu.memory_space<vmem>>) attributes {dimension_semantics = [#tpu.dimension_semantics<parallel>], iteration_bounds = array<i64: 1>, scalar_prefetch = 0 : i64, scratch_operands = 0 : i64, tpu.core_type = #tpu.core_type<tc>, window_params = [{transform_indices = @transform_0, window_bounds = array<i64: 8, 128>}, {pipeline_mode = #tpu.pipeline_mode<synchronous>, transform_indices = @transform_1, window_bounds = array<i64: 16, 8>}, {pipeline_mode = #tpu.pipeline_mode<synchronous>, transform_indices = @transform_2, window_bounds = array<i64: 16, 1>}, {transform_indices = @transform_3, window_bounds = array<i64: 8, 128>}, {transform_indices = @transform_4, window_bounds = array<i64: 1, 128>}, {transform_indices = @transform_5, window_bounds = array<i64: 1, 128>}]} {
    %c0 = arith.constant 0 : index
    %c0_0 = arith.constant 0 : index
    %0 = vector.load %arg1[%c0, %c0_0] : memref<8x128xf32, #tpu.memory_space<vmem>>, vector<8x128xf32>
    %c0_1 = arith.constant 0 : index
    %c0_2 = arith.constant 0 : index
    %1 = vector.load %arg2[%c0_1, %c0_2] : memref<16x8xf32, #tpu.memory_space<vmem>>, vector<16x8xf32>
    %c0_3 = arith.constant 0 : index
    %c0_4 = arith.constant 0 : index
    %2 = vector.load %arg3[%c0_3, %c0_4] : memref<16x1xf32, #tpu.memory_space<vmem>>, vector<16x1xf32>
    %cst = arith.constant dense<0.000000e+00> : vector<16x128xf32>
    %3 = tpu.matmul %1, %0, %cst {dimension_numbers = #tpu.dot_dimension_numbers<[1], [0], [0], [1], [0, 0, 1, 1], [], []>} : vector<16x8xf32>, vector<8x128xf32>, vector<16x128xf32> -> vector<16x128xf32>
    %cst_5 = arith.constant 2.000000e+00 : f32
    %4 = vector.broadcast %cst_5 : f32 to vector<16x128xf32>
    %5 = arith.mulf %4, %3 : vector<16x128xf32>
    %6 = vector.broadcast %2 : vector<16x1xf32> to vector<16x128xf32>
    %7 = arith.subf %6, %5 : vector<16x128xf32>
    %8 = tpu.iota {dimensions = array<i32: 0>} : vector<16x128xi32>
    %cst_6 = arith.constant dense<0x7F800000> : vector<128xf32>
    %9 = vector.multi_reduction <minimumf>, %7, %cst_6 [0] : vector<16x128xf32> to vector<128xf32>
    %10 = vector.shape_cast %9 : vector<128xf32> to vector<1x128xf32>
    %11 = vector.broadcast %10 : vector<1x128xf32> to vector<16x128xf32>
    %12 = arith.cmpf ole, %7, %11 : vector<16x128xf32>
    %c1073741824_i32 = arith.constant 1073741824 : i32
    %13 = vector.broadcast %c1073741824_i32 : i32 to vector<16x128xi32>
    %14 = arith.select %12, %8, %13 : vector<16x128xi1>, vector<16x128xi32>
    %cst_7 = arith.constant dense<2147483647> : vector<128xi32>
    %15 = vector.multi_reduction <minsi>, %14, %cst_7 [0] : vector<16x128xi32> to vector<128xi32>
    %16 = vector.shape_cast %15 : vector<128xi32> to vector<1x128xi32>
    %c0_8 = arith.constant 0 : index
    %c0_9 = arith.constant 0 : index
    %17 = vector.load %arg5[%c0_8, %c0_9] : memref<1x128xi32, #tpu.memory_space<vmem>>, vector<1x128xi32>
    tpu.vector_store %arg5[%c0_8, %c0_9], %16 {strides = array<i32>} : memref<1x128xi32, #tpu.memory_space<vmem>>, vector<1x128xi32>,
    %18 = vector.broadcast %16 : vector<1x128xi32> to vector<16x128xi32>
    %19 = arith.cmpi eq, %8, %18 : vector<16x128xi32>
    %20 = arith.extui %19 : vector<16x128xi1> to vector<16x128xi32>
    %21 = arith.sitofp %20 : vector<16x128xi32> to vector<16x128xf32>
    %cst_10 = arith.constant dense<0.000000e+00> : vector<8x128xf32>
    %22 = tpu.matmul %1, %21, %cst_10 {dimension_numbers = #tpu.dot_dimension_numbers<[0], [0], [1], [1], [0, 1, 1, 1], [], []>} : vector<16x8xf32>, vector<16x128xf32>, vector<8x128xf32> -> vector<8x128xf32>
    %c0_11 = arith.constant 0 : index
    %c0_12 = arith.constant 0 : index
    %23 = vector.load %arg4[%c0_11, %c0_12] : memref<8x128xf32, #tpu.memory_space<vmem>>, vector<8x128xf32>
    tpu.vector_store %arg4[%c0_11, %c0_12], %22 {strides = array<i32>} : memref<8x128xf32, #tpu.memory_space<vmem>>, vector<8x128xf32>,
    %24 = arith.subf %0, %22 : vector<8x128xf32>
    %25 = arith.mulf %24, %24 : vector<8x128xf32>
    %cst_13 = arith.constant dense<0.000000e+00> : vector<128xf32>
    %26 = vector.multi_reduction <add>, %25, %cst_13 [0] : vector<8x128xf32> to vector<128xf32>
    %27 = vector.shape_cast %26 : vector<128xf32> to vector<1x128xf32>
    %c0_14 = arith.constant 0 : index
    %c0_15 = arith.constant 0 : index
    %28 = vector.load %arg6[%c0_14, %c0_15] : memref<1x128xf32, #tpu.memory_space<vmem>>, vector<1x128xf32>
    tpu.vector_store %arg6[%c0_14, %c0_15], %27 {strides = array<i32>} : memref<1x128xf32, #tpu.memory_space<vmem>>, vector<1x128xf32>,
    return
  }
  func.func @transform_0(%arg0: i32) -> (i32, i32) {
    %c0_i32 = arith.constant 0 : i32
    %c0_i32_0 = arith.constant 0 : i32
    return %c0_i32, %arg0 : i32, i32
  }
  func.func @transform_1(%arg0: i32) -> (i32, i32) {
    %c0_i32 = arith.constant 0 : i32
    %c0_i32_0 = arith.constant 0 : i32
    %c0_i32_1 = arith.constant 0 : i32
    return %c0_i32, %c0_i32_0 : i32, i32
  }
  func.func @transform_2(%arg0: i32) -> (i32, i32) {
    %c0_i32 = arith.constant 0 : i32
    %c0_i32_0 = arith.constant 0 : i32
    %c0_i32_1 = arith.constant 0 : i32
    return %c0_i32, %c0_i32_0 : i32, i32
  }
  func.func @transform_3(%arg0: i32) -> (i32, i32) {
    %c0_i32 = arith.constant 0 : i32
    %c0_i32_0 = arith.constant 0 : i32
    return %c0_i32, %arg0 : i32, i32
  }
  func.func @transform_4(%arg0: i32) -> (i32, i32) {
    %c0_i32 = arith.constant 0 : i32
    %c0_i32_0 = arith.constant 0 : i32
    return %c0_i32, %arg0 : i32, i32
  }
  func.func @transform_5(%arg0: i32) -> (i32, i32) {
    %c0_i32 = arith.constant 0 : i32
    %c0_i32_0 = arith.constant 0 : i32
    return %c0_i32, %arg0 : i32, i32
  }
}

module attributes {stable_mosaic.version = 11 : i64} {
  func.func @_fused_kernel(%arg0: i32, %arg1: memref<32x128xbf16, #tpu.memory_space<vmem>>, %arg2: memref<128x128xbf16, #tpu.memory_space<vmem>>, %arg3: memref<1x128xf32, #tpu.memory_space<vmem>>, %arg4: memref<128x128xbf16, #tpu.memory_space<vmem>>, %arg5: memref<1x128xf32, #tpu.memory_space<vmem>>, %arg6: memref<32x128xf32, #tpu.memory_space<vmem>>, %arg7: memref<32x128xbf16, #tpu.memory_space<vmem>>) attributes {dimension_semantics = [#tpu.dimension_semantics<parallel>], iteration_bounds = array<i64: 1>, scalar_prefetch = 0 : i64, scratch_operands = 0 : i64, tpu.core_type = #tpu.core_type<tc>, window_params = [{transform_indices = @transform_0, window_bounds = array<i64: 32, 128>}, {pipeline_mode = #tpu.pipeline_mode<synchronous>, transform_indices = @transform_1, window_bounds = array<i64: 128, 128>}, {pipeline_mode = #tpu.pipeline_mode<synchronous>, transform_indices = @transform_2, window_bounds = array<i64: 1, 128>}, {pipeline_mode = #tpu.pipeline_mode<synchronous>, transform_indices = @transform_3, window_bounds = array<i64: 128, 128>}, {pipeline_mode = #tpu.pipeline_mode<synchronous>, transform_indices = @transform_4, window_bounds = array<i64: 1, 128>}, {transform_indices = @transform_5, window_bounds = array<i64: 32, 128>}, {transform_indices = @transform_6, window_bounds = array<i64: 32, 128>}]} {
    %c0 = arith.constant 0 : index
    %c0_0 = arith.constant 0 : index
    %0 = vector.load %arg1[%c0, %c0_0] : memref<32x128xbf16, #tpu.memory_space<vmem>>, vector<32x128xbf16>
    %cst = arith.constant 0.000000e+00 : bf16
    %1 = vector.broadcast %cst : bf16 to vector<32x128xbf16>
    %2 = arith.maximumf %0, %1 : vector<32x128xbf16>
    %c0_1 = arith.constant 0 : index
    %c0_2 = arith.constant 0 : index
    %3 = vector.load %arg2[%c0_1, %c0_2] : memref<128x128xbf16, #tpu.memory_space<vmem>>, vector<128x128xbf16>
    %cst_3 = arith.constant dense<0.000000e+00> : vector<32x128xf32>
    %4 = tpu.matmul %2, %3, %cst_3 {dimension_numbers = #tpu.dot_dimension_numbers<[1], [0], [0], [1], [0, 0, 1, 1], [], []>} : vector<32x128xbf16>, vector<128x128xbf16>, vector<32x128xf32> -> vector<32x128xf32>
    %c0_4 = arith.constant 0 : index
    %c0_5 = arith.constant 0 : index
    %5 = vector.load %arg3[%c0_4, %c0_5] : memref<1x128xf32, #tpu.memory_space<vmem>>, vector<1x128xf32>
    %6 = vector.broadcast %5 : vector<1x128xf32> to vector<32x128xf32>
    %7 = arith.addf %4, %6 : vector<32x128xf32>
    %cst_6 = arith.constant 0.000000e+00 : f32
    %8 = vector.broadcast %cst_6 : f32 to vector<32x128xf32>
    %9 = arith.maximumf %7, %8 : vector<32x128xf32>
    %10 = arith.truncf %9 : vector<32x128xf32> to vector<32x128xbf16>
    %c0_7 = arith.constant 0 : index
    %c0_8 = arith.constant 0 : index
    %11 = vector.load %arg4[%c0_7, %c0_8] : memref<128x128xbf16, #tpu.memory_space<vmem>>, vector<128x128xbf16>
    %cst_9 = arith.constant dense<0.000000e+00> : vector<32x128xf32>
    %12 = tpu.matmul %10, %11, %cst_9 {dimension_numbers = #tpu.dot_dimension_numbers<[1], [0], [0], [1], [0, 0, 1, 1], [], []>} : vector<32x128xbf16>, vector<128x128xbf16>, vector<32x128xf32> -> vector<32x128xf32>
    %c0_10 = arith.constant 0 : index
    %c0_11 = arith.constant 0 : index
    %13 = vector.load %arg5[%c0_10, %c0_11] : memref<1x128xf32, #tpu.memory_space<vmem>>, vector<1x128xf32>
    %14 = vector.broadcast %13 : vector<1x128xf32> to vector<32x128xf32>
    %15 = arith.addf %12, %14 : vector<32x128xf32>
    %c0_12 = arith.constant 0 : index
    %c0_13 = arith.constant 0 : index
    %16 = vector.load %arg6[%c0_12, %c0_13] : memref<32x128xf32, #tpu.memory_space<vmem>>, vector<32x128xf32>
    %17 = arith.addf %15, %16 : vector<32x128xf32>
    %18 = arith.truncf %17 : vector<32x128xf32> to vector<32x128xbf16>
    %c0_14 = arith.constant 0 : index
    %c0_15 = arith.constant 0 : index
    %19 = vector.load %arg7[%c0_14, %c0_15] : memref<32x128xbf16, #tpu.memory_space<vmem>>, vector<32x128xbf16>
    tpu.vector_store %arg7[%c0_14, %c0_15], %18 {strides = array<i32>} : memref<32x128xbf16, #tpu.memory_space<vmem>>, vector<32x128xbf16>,
    return
  }
  func.func @transform_0(%arg0: i32) -> (i32, i32) {
    %c0_i32 = arith.constant 0 : i32
    %c0_i32_0 = arith.constant 0 : i32
    return %arg0, %c0_i32 : i32, i32
  }
  func.func @transform_1(%arg0: i32) -> (i32, i32) {
    %c0_i32 = arith.constant 0 : i32
    %c0_i32_0 = arith.constant 0 : i32
    %c0_i32_1 = arith.constant 0 : i32
    return %c0_i32, %c0_i32_0 : i32, i32
  }
  func.func @transform_2(%arg0: i32) -> (i32, i32) {
    %c0_i32 = arith.constant 0 : i32
    %c0_i32_0 = arith.constant 0 : i32
    %c0_i32_1 = arith.constant 0 : i32
    return %c0_i32, %c0_i32_0 : i32, i32
  }
  func.func @transform_3(%arg0: i32) -> (i32, i32) {
    %c0_i32 = arith.constant 0 : i32
    %c0_i32_0 = arith.constant 0 : i32
    %c0_i32_1 = arith.constant 0 : i32
    return %c0_i32, %c0_i32_0 : i32, i32
  }
  func.func @transform_4(%arg0: i32) -> (i32, i32) {
    %c0_i32 = arith.constant 0 : i32
    %c0_i32_0 = arith.constant 0 : i32
    %c0_i32_1 = arith.constant 0 : i32
    return %c0_i32, %c0_i32_0 : i32, i32
  }
  func.func @transform_5(%arg0: i32) -> (i32, i32) {
    %c0_i32 = arith.constant 0 : i32
    %c0_i32_0 = arith.constant 0 : i32
    return %arg0, %c0_i32 : i32, i32
  }
  func.func @transform_6(%arg0: i32) -> (i32, i32) {
    %c0_i32 = arith.constant 0 : i32
    %c0_i32_0 = arith.constant 0 : i32
    return %arg0, %c0_i32 : i32, i32
  }
}

module attributes {stable_mosaic.version = 11 : i64} {
  func.func @_fused_kernel(%arg0: i32, %arg1: memref<32x128xbf16, #tpu.memory_space<vmem>>, %arg2: memref<128x128xbf16, #tpu.memory_space<vmem>>, %arg3: memref<1x128xf32, #tpu.memory_space<vmem>>, %arg4: memref<128x128xbf16, #tpu.memory_space<vmem>>, %arg5: memref<1x128xf32, #tpu.memory_space<vmem>>, %arg6: memref<32x128xbf16, #tpu.memory_space<vmem>>, %arg7: memref<32x128xbf16, #tpu.memory_space<vmem>>) attributes {dimension_semantics = [#tpu.dimension_semantics<parallel>], iteration_bounds = array<i64: 1>, scalar_prefetch = 0 : i64, scratch_operands = 0 : i64, tpu.core_type = #tpu.core_type<tc>, window_params = [{transform_indices = @transform_0, window_bounds = array<i64: 32, 128>}, {pipeline_mode = #tpu.pipeline_mode<synchronous>, transform_indices = @transform_1, window_bounds = array<i64: 128, 128>}, {pipeline_mode = #tpu.pipeline_mode<synchronous>, transform_indices = @transform_2, window_bounds = array<i64: 1, 128>}, {pipeline_mode = #tpu.pipeline_mode<synchronous>, transform_indices = @transform_3, window_bounds = array<i64: 128, 128>}, {pipeline_mode = #tpu.pipeline_mode<synchronous>, transform_indices = @transform_4, window_bounds = array<i64: 1, 128>}, {transform_indices = @transform_5, window_bounds = array<i64: 32, 128>}, {transform_indices = @transform_6, window_bounds = array<i64: 32, 128>}]} {
    %c0 = arith.constant 0 : index
    %c0_0 = arith.constant 0 : index
    %0 = vector.load %arg1[%c0, %c0_0] : memref<32x128xbf16, #tpu.memory_space<vmem>>, vector<32x128xbf16>
    %cst = arith.constant 0.000000e+00 : bf16
    %1 = vector.broadcast %cst : bf16 to vector<32x128xbf16>
    %2 = arith.maximumf %0, %1 : vector<32x128xbf16>
    %c0_1 = arith.constant 0 : index
    %c0_2 = arith.constant 0 : index
    %3 = vector.load %arg2[%c0_1, %c0_2] : memref<128x128xbf16, #tpu.memory_space<vmem>>, vector<128x128xbf16>
    %cst_3 = arith.constant dense<0.000000e+00> : vector<32x128xf32>
    %4 = tpu.matmul %2, %3, %cst_3 {dimension_numbers = #tpu.dot_dimension_numbers<[1], [0], [0], [1], [0, 0, 1, 1], [], []>} : vector<32x128xbf16>, vector<128x128xbf16>, vector<32x128xf32> -> vector<32x128xf32>
    %c0_4 = arith.constant 0 : index
    %c0_5 = arith.constant 0 : index
    %5 = vector.load %arg3[%c0_4, %c0_5] : memref<1x128xf32, #tpu.memory_space<vmem>>, vector<1x128xf32>
    %6 = vector.broadcast %5 : vector<1x128xf32> to vector<32x128xf32>
    %7 = arith.addf %4, %6 : vector<32x128xf32>
    %cst_6 = arith.constant 0.000000e+00 : f32
    %8 = vector.broadcast %cst_6 : f32 to vector<32x128xf32>
    %9 = arith.maximumf %7, %8 : vector<32x128xf32>
    %10 = arith.truncf %9 : vector<32x128xf32> to vector<32x128xbf16>
    %c0_7 = arith.constant 0 : index
    %c0_8 = arith.constant 0 : index
    %11 = vector.load %arg4[%c0_7, %c0_8] : memref<128x128xbf16, #tpu.memory_space<vmem>>, vector<128x128xbf16>
    %cst_9 = arith.constant dense<0.000000e+00> : vector<32x128xf32>
    %12 = tpu.matmul %10, %11, %cst_9 {dimension_numbers = #tpu.dot_dimension_numbers<[1], [0], [0], [1], [0, 0, 1, 1], [], []>} : vector<32x128xbf16>, vector<128x128xbf16>, vector<32x128xf32> -> vector<32x128xf32>
    %c0_10 = arith.constant 0 : index
    %c0_11 = arith.constant 0 : index
    %13 = vector.load %arg5[%c0_10, %c0_11] : memref<1x128xf32, #tpu.memory_space<vmem>>, vector<1x128xf32>
    %14 = vector.broadcast %13 : vector<1x128xf32> to vector<32x128xf32>
    %15 = arith.addf %12, %14 : vector<32x128xf32>
    %c0_12 = arith.constant 0 : index
    %c0_13 = arith.constant 0 : index
    %16 = vector.load %arg6[%c0_12, %c0_13] : memref<32x128xbf16, #tpu.memory_space<vmem>>, vector<32x128xbf16>
    %17 = arith.extf %16 : vector<32x128xbf16> to vector<32x128xf32>
    %18 = arith.addf %15, %17 : vector<32x128xf32>
    %19 = arith.truncf %18 : vector<32x128xf32> to vector<32x128xbf16>
    %c0_14 = arith.constant 0 : index
    %c0_15 = arith.constant 0 : index
    %20 = vector.load %arg7[%c0_14, %c0_15] : memref<32x128xbf16, #tpu.memory_space<vmem>>, vector<32x128xbf16>
    tpu.vector_store %arg7[%c0_14, %c0_15], %19 {strides = array<i32>} : memref<32x128xbf16, #tpu.memory_space<vmem>>, vector<32x128xbf16>,
    return
  }
  func.func @transform_0(%arg0: i32) -> (i32, i32) {
    %c0_i32 = arith.constant 0 : i32
    %c0_i32_0 = arith.constant 0 : i32
    return %arg0, %c0_i32 : i32, i32
  }
  func.func @transform_1(%arg0: i32) -> (i32, i32) {
    %c0_i32 = arith.constant 0 : i32
    %c0_i32_0 = arith.constant 0 : i32
    %c0_i32_1 = arith.constant 0 : i32
    return %c0_i32, %c0_i32_0 : i32, i32
  }
  func.func @transform_2(%arg0: i32) -> (i32, i32) {
    %c0_i32 = arith.constant 0 : i32
    %c0_i32_0 = arith.constant 0 : i32
    %c0_i32_1 = arith.constant 0 : i32
    return %c0_i32, %c0_i32_0 : i32, i32
  }
  func.func @transform_3(%arg0: i32) -> (i32, i32) {
    %c0_i32 = arith.constant 0 : i32
    %c0_i32_0 = arith.constant 0 : i32
    %c0_i32_1 = arith.constant 0 : i32
    return %c0_i32, %c0_i32_0 : i32, i32
  }
  func.func @transform_4(%arg0: i32) -> (i32, i32) {
    %c0_i32 = arith.constant 0 : i32
    %c0_i32_0 = arith.constant 0 : i32
    %c0_i32_1 = arith.constant 0 : i32
    return %c0_i32, %c0_i32_0 : i32, i32
  }
  func.func @transform_5(%arg0: i32) -> (i32, i32) {
    %c0_i32 = arith.constant 0 : i32
    %c0_i32_0 = arith.constant 0 : i32
    return %arg0, %c0_i32 : i32, i32
  }
  func.func @transform_6(%arg0: i32) -> (i32, i32) {
    %c0_i32 = arith.constant 0 : i32
    %c0_i32_0 = arith.constant 0 : i32
    return %arg0, %c0_i32 : i32, i32
  }
}

module attributes {stable_mosaic.version = 11 : i64} {
  func.func @_fused_kernel(%arg0: i32, %arg1: memref<32x128xbf16, #tpu.memory_space<vmem>>, %arg2: memref<128x128xbf16, #tpu.memory_space<vmem>>, %arg3: memref<1x128xf32, #tpu.memory_space<vmem>>, %arg4: memref<32x128xbf16, #tpu.memory_space<vmem>>) attributes {dimension_semantics = [#tpu.dimension_semantics<parallel>], iteration_bounds = array<i64: 1>, scalar_prefetch = 0 : i64, scratch_operands = 0 : i64, tpu.core_type = #tpu.core_type<tc>, window_params = [{transform_indices = @transform_0, window_bounds = array<i64: 32, 128>}, {pipeline_mode = #tpu.pipeline_mode<synchronous>, transform_indices = @transform_1, window_bounds = array<i64: 128, 128>}, {pipeline_mode = #tpu.pipeline_mode<synchronous>, transform_indices = @transform_2, window_bounds = array<i64: 1, 128>}, {transform_indices = @transform_3, window_bounds = array<i64: 32, 128>}]} {
    %c0 = arith.constant 0 : index
    %c0_0 = arith.constant 0 : index
    %0 = vector.load %arg1[%c0, %c0_0] : memref<32x128xbf16, #tpu.memory_space<vmem>>, vector<32x128xbf16>
    %cst = arith.constant 0.000000e+00 : bf16
    %1 = vector.broadcast %cst : bf16 to vector<32x128xbf16>
    %2 = arith.maximumf %0, %1 : vector<32x128xbf16>
    %c0_1 = arith.constant 0 : index
    %c0_2 = arith.constant 0 : index
    %3 = vector.load %arg2[%c0_1, %c0_2] : memref<128x128xbf16, #tpu.memory_space<vmem>>, vector<128x128xbf16>
    %cst_3 = arith.constant dense<0.000000e+00> : vector<32x128xf32>
    %4 = tpu.matmul %2, %3, %cst_3 {dimension_numbers = #tpu.dot_dimension_numbers<[1], [0], [0], [1], [0, 0, 1, 1], [], []>} : vector<32x128xbf16>, vector<128x128xbf16>, vector<32x128xf32> -> vector<32x128xf32>
    %c0_4 = arith.constant 0 : index
    %c0_5 = arith.constant 0 : index
    %5 = vector.load %arg3[%c0_4, %c0_5] : memref<1x128xf32, #tpu.memory_space<vmem>>, vector<1x128xf32>
    %6 = vector.broadcast %5 : vector<1x128xf32> to vector<32x128xf32>
    %7 = arith.addf %4, %6 : vector<32x128xf32>
    %cst_6 = arith.constant 0.000000e+00 : f32
    %8 = vector.broadcast %cst_6 : f32 to vector<32x128xf32>
    %9 = arith.maximumf %7, %8 : vector<32x128xf32>
    %10 = arith.truncf %9 : vector<32x128xf32> to vector<32x128xbf16>
    %c0_7 = arith.constant 0 : index
    %c0_8 = arith.constant 0 : index
    %11 = vector.load %arg4[%c0_7, %c0_8] : memref<32x128xbf16, #tpu.memory_space<vmem>>, vector<32x128xbf16>
    tpu.vector_store %arg4[%c0_7, %c0_8], %10 {strides = array<i32>} : memref<32x128xbf16, #tpu.memory_space<vmem>>, vector<32x128xbf16>,
    return
  }
  func.func @transform_0(%arg0: i32) -> (i32, i32) {
    %c0_i32 = arith.constant 0 : i32
    %c0_i32_0 = arith.constant 0 : i32
    return %arg0, %c0_i32 : i32, i32
  }
  func.func @transform_1(%arg0: i32) -> (i32, i32) {
    %c0_i32 = arith.constant 0 : i32
    %c0_i32_0 = arith.constant 0 : i32
    %c0_i32_1 = arith.constant 0 : i32
    return %c0_i32, %c0_i32_0 : i32, i32
  }
  func.func @transform_2(%arg0: i32) -> (i32, i32) {
    %c0_i32 = arith.constant 0 : i32
    %c0_i32_0 = arith.constant 0 : i32
    %c0_i32_1 = arith.constant 0 : i32
    return %c0_i32, %c0_i32_0 : i32, i32
  }
  func.func @transform_3(%arg0: i32) -> (i32, i32) {
    %c0_i32 = arith.constant 0 : i32
    %c0_i32_0 = arith.constant 0 : i32
    return %arg0, %c0_i32 : i32, i32
  }
}

module attributes {stable_mosaic.version = 11 : i64} {
  func.func @_fused_kernel(%arg0: i32, %arg1: memref<128x256xbf16, #tpu.memory_space<vmem>>, %arg2: memref<256x128xbf16, #tpu.memory_space<vmem>>, %arg3: memref<1x128xf32, #tpu.memory_space<vmem>>, %arg4: memref<128x128xf32, #tpu.memory_space<vmem>>) attributes {dimension_semantics = [#tpu.dimension_semantics<parallel>], iteration_bounds = array<i64: 1>, scalar_prefetch = 0 : i64, scratch_operands = 0 : i64, tpu.core_type = #tpu.core_type<tc>, window_params = [{transform_indices = @transform_0, window_bounds = array<i64: 128, 256>}, {pipeline_mode = #tpu.pipeline_mode<synchronous>, transform_indices = @transform_1, window_bounds = array<i64: 256, 128>}, {pipeline_mode = #tpu.pipeline_mode<synchronous>, transform_indices = @transform_2, window_bounds = array<i64: 1, 128>}, {transform_indices = @transform_3, window_bounds = array<i64: 128, 128>}]} {
    %c0 = arith.constant 0 : index
    %c0_0 = arith.constant 0 : index
    %0 = vector.load %arg1[%c0, %c0_0] : memref<128x256xbf16, #tpu.memory_space<vmem>>, vector<128x256xbf16>
    %c0_1 = arith.constant 0 : index
    %c0_2 = arith.constant 0 : index
    %1 = vector.load %arg2[%c0_1, %c0_2] : memref<256x128xbf16, #tpu.memory_space<vmem>>, vector<256x128xbf16>
    %cst = arith.constant dense<0.000000e+00> : vector<128x128xf32>
    %2 = tpu.matmul %0, %1, %cst {dimension_numbers = #tpu.dot_dimension_numbers<[1], [0], [0], [1], [0, 0, 1, 1], [], []>} : vector<128x256xbf16>, vector<256x128xbf16>, vector<128x128xf32> -> vector<128x128xf32>
    %c0_3 = arith.constant 0 : index
    %c0_4 = arith.constant 0 : index
    %3 = vector.load %arg3[%c0_3, %c0_4] : memref<1x128xf32, #tpu.memory_space<vmem>>, vector<1x128xf32>
    %4 = vector.broadcast %3 : vector<1x128xf32> to vector<128x128xf32>
    %5 = arith.addf %2, %4 : vector<128x128xf32>
    %c0_5 = arith.constant 0 : index
    %c0_6 = arith.constant 0 : index
    %6 = vector.load %arg4[%c0_5, %c0_6] : memref<128x128xf32, #tpu.memory_space<vmem>>, vector<128x128xf32>
    tpu.vector_store %arg4[%c0_5, %c0_6], %5 {strides = array<i32>} : memref<128x128xf32, #tpu.memory_space<vmem>>, vector<128x128xf32>,
    return
  }
  func.func @transform_0(%arg0: i32) -> (i32, i32) {
    %c0_i32 = arith.constant 0 : i32
    %c0_i32_0 = arith.constant 0 : i32
    return %arg0, %c0_i32 : i32, i32
  }
  func.func @transform_1(%arg0: i32) -> (i32, i32) {
    %c0_i32 = arith.constant 0 : i32
    %c0_i32_0 = arith.constant 0 : i32
    %c0_i32_1 = arith.constant 0 : i32
    return %c0_i32, %c0_i32_0 : i32, i32
  }
  func.func @transform_2(%arg0: i32) -> (i32, i32) {
    %c0_i32 = arith.constant 0 : i32
    %c0_i32_0 = arith.constant 0 : i32
    %c0_i32_1 = arith.constant 0 : i32
    return %c0_i32, %c0_i32_0 : i32, i32
  }
  func.func @transform_3(%arg0: i32) -> (i32, i32) {
    %c0_i32 = arith.constant 0 : i32
    %c0_i32_0 = arith.constant 0 : i32
    return %arg0, %c0_i32 : i32, i32
  }
}

</mosaic_0001>

<llo_original>
// kernel: vq_vae_forward.10
$region0: #{vq_vae_forward.10}
  #allocation0 [shape = 'u32[]', space=smem, size = 0x4, offset = 0x4, fixed_abs, tag = 'smem constant byte address 0x4 - core index']
  #allocation1 [shape = 'u32[144,128]{1,0:T(1,128)}', space=vmem, size = 0x12000, scoped, tag = 'internal scratch']
  %s0 = inlined_call_operand.vmem [shape: bf16[128,128], index: 0, kind: input, shape index: {}]
  %s1 = inlined_call_operand.vmem [shape: bf16[128,128], index: 1, kind: input, shape index: {}]
  %s2 = inlined_call_operand.vmem [shape: f32[1,128], index: 2, kind: input, shape index: {}]
  %s3 = inlined_call_operand.vmem [shape: bf16[128,128], index: 3, kind: output, shape index: {}]
  %s4 = sld [smem:[#allocation0]]
  $region22: #{vq_vae_forward.10} parent=0
    _
  %s6 = ssub.s32 1, %s4
  %s7 = scalar_select 0, %s6, %s4
  // Predicated region
  $region2: #{vq_vae_forward.10} parent=0 // pred_check
    _
  $region3: #{vq_vae_forward.10} parent=0 // pred_check_branch
    %9 = sbr.rel (0) target = $region5
  $region4: #{vq_vae_forward.10} parent=0 // pred_region
    _
  $region5: #{vq_vae_forward.10} parent=0 // pred_fallthru
    _
  // Predicated region
  $region6: #{vq_vae_forward.10} parent=0 // pred_check
    _
  $region7: #{vq_vae_forward.10} parent=0 // pred_check_branch
    %11 = sbr.rel (0) target = $region9
  $region8: #{vq_vae_forward.10} parent=0 // pred_region
    _
  $region9: #{vq_vae_forward.10} parent=0 // pred_fallthru
    _
  // Predicated region
  $region10: #{vq_vae_forward.10} parent=0 // pred_check
    _
  $region11: #{vq_vae_forward.10} parent=0 // pred_check_branch
    %13 = sbr.rel (0) target = $region13
  $region12: #{vq_vae_forward.10} parent=0 // pred_region
    _
  $region13: #{vq_vae_forward.10} parent=0 // pred_fallthru
    _
  %v15 = vld [vmem:[%s0] sm:$0xf]
  %v16 = vld [vmem:[%s0 + $0x4] sm:$0xf]
  %v17 = vld [vmem:[%s0 + $0x8] sm:$0xf]
  %v18 = vld [vmem:[%s0 + $0xc] sm:$0xf]
  %v19 = vld [vmem:[%s0 + $0x10] sm:$0xf]
  %v20 = vld [vmem:[%s0 + $0x14] sm:$0xf]
  %v21 = vld [vmem:[%s0 + $0x18] sm:$0xf]
  %v22 = vld [vmem:[%s0 + $0x1c] sm:$0xf]
  %v23 = vld [vmem:[%s0 + $0x20] sm:$0xf]
  %v24 = vld [vmem:[%s0 + $0x24] sm:$0xf]
  %v25 = vld [vmem:[%s0 + $0x28] sm:$0xf]
  %v26 = vld [vmem:[%s0 + $0x2c] sm:$0xf]
  %v27 = vld [vmem:[%s0 + $0x30] sm:$0xf]
  %v28 = vld [vmem:[%s0 + $0x34] sm:$0xf]
  %v29 = vld [vmem:[%s0 + $0x38] sm:$0xf]
  %v30 = vld [vmem:[%s0 + $0x3c] sm:$0xf]
  %v31 = vld [vmem:[%s1] sm:$0xf]
  %v32 = vld [vmem:[%s1 + $0x4] sm:$0xf]
  %v33 = vld [vmem:[%s1 + $0x8] sm:$0xf]
  %v34 = vld [vmem:[%s1 + $0xc] sm:$0xf]
  %v35 = vld [vmem:[%s1 + $0x10] sm:$0xf]
  %v36 = vld [vmem:[%s1 + $0x14] sm:$0xf]
  %v37 = vld [vmem:[%s1 + $0x18] sm:$0xf]
  %v38 = vld [vmem:[%s1 + $0x1c] sm:$0xf]
  %v39 = vld [vmem:[%s1 + $0x20] sm:$0xf]
  %v40 = vld [vmem:[%s1 + $0x24] sm:$0xf]
  %v41 = vld [vmem:[%s1 + $0x28] sm:$0xf]
  %v42 = vld [vmem:[%s1 + $0x2c] sm:$0xf]
  %v43 = vld [vmem:[%s1 + $0x30] sm:$0xf]
  %v44 = vld [vmem:[%s1 + $0x34] sm:$0xf]
  %v45 = vld [vmem:[%s1 + $0x38] sm:$0xf]
  %v46 = vld [vmem:[%s1 + $0x3c] sm:$0xf]
  %v47 = vld [vmem:[%s2] sm:$0x1]
  %v49 = vlaneseq
  %v50 = vshrl.u32 %v49, 7
  %v51 = vsub.s32 0, %v50
  %v52 = vrot.slane %v47, %v51
  %v70 = vunpack.c.l.b16 %v15
  %v71 = vunpack.c.l.b16 %v16
  %v72 = vunpack.c.l.b16 %v17
  %v73 = vunpack.c.l.b16 %v18
  %v74 = vunpack.c.l.b16 %v19
  %v75 = vunpack.c.l.b16 %v20
  %v76 = vunpack.c.l.b16 %v21
  %v77 = vunpack.c.l.b16 %v22
  %v78 = vunpack.c.l.b16 %v23
  %v79 = vunpack.c.l.b16 %v24
  %v80 = vunpack.c.l.b16 %v25
  %v81 = vunpack.c.l.b16 %v26
  %v82 = vunpack.c.l.b16 %v27
  %v83 = vunpack.c.l.b16 %v28
  %v84 = vunpack.c.l.b16 %v29
  %v85 = vunpack.c.l.b16 %v30
  %v86 = vpack.c.b16 %v71, %v70
  %v87 = vpack.c.b16 %v73, %v72
  %v88 = vpack.c.b16 %v75, %v74
  %v89 = vpack.c.b16 %v77, %v76
  %v90 = vpack.c.b16 %v79, %v78
  %v91 = vpack.c.b16 %v81, %v80
  %v92 = vpack.c.b16 %v83, %v82
  %v93 = vpack.c.b16 %v85, %v84
  %v118 = vunpack.c.l.b16 %v31
  %v119 = vunpack.c.l.b16 %v32
  %v120 = vunpack.c.l.b16 %v33
  %v121 = vunpack.c.l.b16 %v34
  %v122 = vunpack.c.l.b16 %v35
  %v123 = vunpack.c.l.b16 %v36
  %v124 = vunpack.c.l.b16 %v37
  %v125 = vunpack.c.l.b16 %v38
  %v126 = vunpack.c.l.b16 %v39
  %v127 = vunpack.c.l.b16 %v40
  %v128 = vunpack.c.l.b16 %v41
  %v129 = vunpack.c.l.b16 %v42
  %v130 = vunpack.c.l.b16 %v43
  %v131 = vunpack.c.l.b16 %v44
  %v132 = vunpack.c.l.b16 %v45
  %v133 = vunpack.c.l.b16 %v46
  %v134 = vpack.c.b16 %v119, %v118
  %v135 = vpack.c.b16 %v121, %v120
  %v136 = vpack.c.b16 %v123, %v122
  %v137 = vpack.c.b16 %v125, %v124
  %v138 = vpack.c.b16 %v127, %v126
  %v139 = vpack.c.b16 %v129, %v128
  %v140 = vpack.c.b16 %v131, %v130
  %v141 = vpack.c.b16 %v133, %v132
  %150 = vmatprep.subr.bf16.mxu0 0
  %151 = vmatpush1.bf16.msra.mxu0 %v134
  %152 = vmatprep.subr.bf16.mxu0 0
  %153 = vmatpush1.bf16.msra.mxu0 %v135
  %154 = vmatprep.subr.bf16.mxu0 0
  %155 = vmatpush1.bf16.msra.mxu0 %v136
  %156 = vmatprep.subr.bf16.mxu0 0
  %157 = vmatpush1.bf16.msra.mxu0 %v137
  %158 = vmatprep.subr.bf16.mxu0 0
  %159 = vmatpush1.bf16.msra.mxu0 %v138
  %160 = vmatprep.subr.bf16.mxu0 0
  %161 = vmatpush1.bf16.msra.mxu0 %v139
  %162 = vmatprep.subr.bf16.mxu0 0
  %163 = vmatpush1.bf16.msra.mxu0 %v140
  %164 = vmatprep.subr.bf16.mxu0 0
  %165 = vmatpush1.bf16.msra.mxu0 %v141
  %166 = vmatprep.subr.bf16.mxu0 0
  %167 = vmatpush1.bf16.msra.mxu0 0
  %168 = vmatprep.subr.bf16.mxu0 0
  %169 = vmatpush1.bf16.msra.mxu0 0
  %170 = vmatprep.subr.bf16.mxu0 0
  %171 = vmatpush1.bf16.msra.mxu0 0
  %172 = vmatprep.subr.bf16.mxu0 0
  %173 = vmatpush1.bf16.msra.mxu0 0
  %174 = vmatprep.subr.bf16.mxu0 0
  %175 = vmatpush1.bf16.msra.mxu0 0
  %176 = vmatprep.subr.bf16.mxu0 0
  %177 = vmatpush1.bf16.msra.mxu0 0
  %178 = vmatprep.subr.bf16.mxu0 0
  %179 = vmatpush1.bf16.msra.mxu0 0
  %180 = vmatprep.subr.bf16.mxu0 0
  %181 = vmatpush1.bf16.msra.mxu0 0
  %182 = vmatprep.mubr.bf16.mxu0 0
  %183 = vmatmul.mubr.bf16.gmra.mrb[0].mxu0 %v86
  %v184 = vpop.f32.mrb[0].mxu0
  %v185 = vadd.f32 %v52, %v184
  %v186 = vpop.f32.mrb[0].mxu0
  %v187 = vpop.f32.mrb[0].mxu0
  %v188 = vadd.f32 %v52, %v187
  %v189 = vpop.f32.mrb[0].mxu0
  %190 = vmatprep.mubr.bf16.mxu0 0
  %191 = vmatmul.mubr.bf16.gmra.mrb[0].mxu0 %v87
  %v192 = vpop.f32.mrb[0].mxu0
  %v193 = vadd.f32 %v52, %v192
  %v194 = vpop.f32.mrb[0].mxu0
  %v195 = vpop.f32.mrb[0].mxu0
  %v196 = vadd.f32 %v52, %v195
  %v197 = vpop.f32.mrb[0].mxu0
  %198 = vmatprep.mubr.bf16.mxu0 0
  %199 = vmatmul.mubr.bf16.gmra.mrb[0].mxu0 %v88
  %v200 = vpop.f32.mrb[0].mxu0
  %v201 = vadd.f32 %v52, %v200
  %v202 = vpop.f32.mrb[0].mxu0
  %v203 = vpop.f32.mrb[0].mxu0
  %v204 = vadd.f32 %v52, %v203
  %v205 = vpop.f32.mrb[0].mxu0
  %206 = vmatprep.mubr.bf16.mxu0 0
  %207 = vmatmul.mubr.bf16.gmra.mrb[0].mxu0 %v89
  %v208 = vpop.f32.mrb[0].mxu0
  %v209 = vadd.f32 %v52, %v208
  %v210 = vpop.f32.mrb[0].mxu0
  %v211 = vpop.f32.mrb[0].mxu0
  %v212 = vadd.f32 %v52, %v211
  %v213 = vpop.f32.mrb[0].mxu0
  %214 = vmatprep.mubr.bf16.mxu0 0
  %215 = vmatmul.mubr.bf16.gmra.mrb[0].mxu0 %v90
  %v216 = vpop.f32.mrb[0].mxu0
  %v217 = vadd.f32 %v52, %v216
  %v218 = vpop.f32.mrb[0].mxu0
  %v219 = vpop.f32.mrb[0].mxu0
  %v220 = vadd.f32 %v52, %v219
  %v221 = vpop.f32.mrb[0].mxu0
  %222 = vmatprep.mubr.bf16.mxu0 0
  %223 = vmatmul.mubr.bf16.gmra.mrb[0].mxu0 %v91
  %v224 = vpop.f32.mrb[0].mxu0
  %v225 = vadd.f32 %v52, %v224
  %v226 = vpop.f32.mrb[0].mxu0
  %v227 = vpop.f32.mrb[0].mxu0
  %v228 = vadd.f32 %v52, %v227
  %v229 = vpop.f32.mrb[0].mxu0
  %230 = vmatprep.mubr.bf16.mxu0 0
  %231 = vmatmul.mubr.bf16.gmra.mrb[0].mxu0 %v92
  %v232 = vpop.f32.mrb[0].mxu0
  %v233 = vadd.f32 %v52, %v232
  %v234 = vpop.f32.mrb[0].mxu0
  %v235 = vpop.f32.mrb[0].mxu0
  %v236 = vadd.f32 %v52, %v235
  %v237 = vpop.f32.mrb[0].mxu0
  %238 = vmatprep.mubr.bf16.mxu0 0
  %239 = vmatmul.mubr.bf16.gmra.mrb[0].mxu0 %v93
  %v240 = vpop.f32.mrb[0].mxu0
  %v241 = vadd.f32 %v52, %v240
  %v242 = vpop.f32.mrb[0].mxu0
  %v243 = vpop.f32.mrb[0].mxu0
  %v244 = vadd.f32 %v52, %v243
  %v245 = vpop.f32.mrb[0].mxu0
  %246 = vdwg.mxu0
  %v247 = vmax.f32 %v185, 0.0
  %v248 = vmax.f32 %v188, 0.0
  %v249 = vmax.f32 %v193, 0.0
  %v250 = vmax.f32 %v196, 0.0
  %v251 = vmax.f32 %v201, 0.0
  %v252 = vmax.f32 %v204, 0.0
  %v253 = vmax.f32 %v209, 0.0
  %v254 = vmax.f32 %v212, 0.0
  %v255 = vmax.f32 %v217, 0.0
  %v256 = vmax.f32 %v220, 0.0
  %v257 = vmax.f32 %v225, 0.0
  %v258 = vmax.f32 %v228, 0.0
  %v259 = vmax.f32 %v233, 0.0
  %v260 = vmax.f32 %v236, 0.0
  %v261 = vmax.f32 %v241, 0.0
  %v262 = vmax.f32 %v244, 0.0
  %v263 = vpack.c.bf16 %v248, %v247
  %v264 = vpack.c.bf16 %v250, %v249
  %v265 = vpack.c.bf16 %v252, %v251
  %v266 = vpack.c.bf16 %v254, %v253
  %v267 = vpack.c.bf16 %v256, %v255
  %v268 = vpack.c.bf16 %v258, %v257
  %v269 = vpack.c.bf16 %v260, %v259
  %v270 = vpack.c.bf16 %v262, %v261
  %v279 = vunpack.c.l.b16 %v263
  %v280 = vunpack.c.h.b16 %v263
  %v281 = vunpack.c.l.b16 %v264
  %v282 = vunpack.c.h.b16 %v264
  %v283 = vunpack.c.l.b16 %v265
  %v284 = vunpack.c.h.b16 %v265
  %v285 = vunpack.c.l.b16 %v266
  %v286 = vunpack.c.h.b16 %v266
  %v287 = vunpack.c.l.b16 %v267
  %v288 = vunpack.c.h.b16 %v267
  %v289 = vunpack.c.l.b16 %v268
  %v290 = vunpack.c.h.b16 %v268
  %v291 = vunpack.c.l.b16 %v269
  %v292 = vunpack.c.h.b16 %v269
  %v293 = vunpack.c.l.b16 %v270
  %v294 = vunpack.c.h.b16 %v270
  %v295 = vpack.c.b16 %v279, %v279
  %v296 = vpack.c.b16 %v280, %v280
  %v297 = vpack.c.b16 %v281, %v281
  %v298 = vpack.c.b16 %v282, %v282
  %v299 = vpack.c.b16 %v283, %v283
  %v300 = vpack.c.b16 %v284, %v284
  %v301 = vpack.c.b16 %v285, %v285
  %v302 = vpack.c.b16 %v286, %v286
  %v303 = vpack.c.b16 %v287, %v287
  %v304 = vpack.c.b16 %v288, %v288
  %v305 = vpack.c.b16 %v289, %v289
  %v306 = vpack.c.b16 %v290, %v290
  %v307 = vpack.c.b16 %v291, %v291
  %v308 = vpack.c.b16 %v292, %v292
  %v309 = vpack.c.b16 %v293, %v293
  %v310 = vpack.c.b16 %v294, %v294
  %327 = vst [vmem:[%s3] sm:$0xf] %v295
  %328 = vst [vmem:[%s3 + $0x4] sm:$0xf] %v296
  %329 = vst [vmem:[%s3 + $0x8] sm:$0xf] %v297
  %330 = vst [vmem:[%s3 + $0xc] sm:$0xf] %v298
  %331 = vst [vmem:[%s3 + $0x10] sm:$0xf] %v299
  %332 = vst [vmem:[%s3 + $0x14] sm:$0xf] %v300
  %333 = vst [vmem:[%s3 + $0x18] sm:$0xf] %v301
  %334 = vst [vmem:[%s3 + $0x1c] sm:$0xf] %v302
  %335 = vst [vmem:[%s3 + $0x20] sm:$0xf] %v303
  %336 = vst [vmem:[%s3 + $0x24] sm:$0xf] %v304
  %337 = vst [vmem:[%s3 + $0x28] sm:$0xf] %v305
  %338 = vst [vmem:[%s3 + $0x2c] sm:$0xf] %v306
  %339 = vst [vmem:[%s3 + $0x30] sm:$0xf] %v307
  %340 = vst [vmem:[%s3 + $0x34] sm:$0xf] %v308
  %341 = vst [vmem:[%s3 + $0x38] sm:$0xf] %v309
  %342 = vst [vmem:[%s3 + $0x3c] sm:$0xf] %v310
  // Predicated region
  $region14: #{vq_vae_forward.10} parent=0 // pred_check
    _
  $region15: #{vq_vae_forward.10} parent=0 // pred_check_branch
    %344 = sbr.rel (0) target = $region17
  $region16: #{vq_vae_forward.10} parent=0 // pred_region
    _
  $region17: #{vq_vae_forward.10} parent=0 // pred_fallthru
    _
  // Predicated region
  $region18: #{vq_vae_forward.10} parent=0 // pred_check
    _
  $region19: #{vq_vae_forward.10} parent=0 // pred_check_branch
    %346 = sbr.rel (0) target = $region21
  $region20: #{vq_vae_forward.10} parent=0 // pred_region
    _
  $region21: #{vq_vae_forward.10} parent=0 // pred_fallthru
    _

// kernel: vq_vae_forward.11
$region0: #{vq_vae_forward.11}
  #allocation0 [shape = 'u32[]', space=smem, size = 0x4, offset = 0x4, fixed_abs, tag = 'smem constant byte address 0x4 - core index']
  #allocation1 [shape = 'u32[144,128]{1,0:T(1,128)}', space=vmem, size = 0x12000, scoped, tag = 'internal scratch']
  %s0 = inlined_call_operand.vmem [shape: bf16[32,256], index: 0, kind: input, shape index: {}]
  %s1 = inlined_call_operand.vmem [shape: bf16[256,128], index: 1, kind: input, shape index: {}]
  %s2 = inlined_call_operand.vmem [shape: f32[1,128], index: 2, kind: input, shape index: {}]
  %s3 = inlined_call_operand.vmem [shape: bf16[32,128], index: 3, kind: output, shape index: {}]
  %s4 = sld [smem:[#allocation0]]
  $region22: #{vq_vae_forward.11} parent=0
    _
  %s6 = ssub.s32 1, %s4
  %s7 = scalar_select 0, %s6, %s4
  // Predicated region
  $region2: #{vq_vae_forward.11} parent=0 // pred_check
    _
  $region3: #{vq_vae_forward.11} parent=0 // pred_check_branch
    %9 = sbr.rel (0) target = $region5
  $region4: #{vq_vae_forward.11} parent=0 // pred_region
    _
  $region5: #{vq_vae_forward.11} parent=0 // pred_fallthru
    _
  // Predicated region
  $region6: #{vq_vae_forward.11} parent=0 // pred_check
    _
  $region7: #{vq_vae_forward.11} parent=0 // pred_check_branch
    %11 = sbr.rel (0) target = $region9
  $region8: #{vq_vae_forward.11} parent=0 // pred_region
    _
  $region9: #{vq_vae_forward.11} parent=0 // pred_fallthru
    _
  // Predicated region
  $region10: #{vq_vae_forward.11} parent=0 // pred_check
    _
  $region11: #{vq_vae_forward.11} parent=0 // pred_check_branch
    %13 = sbr.rel (0) target = $region13
  $region12: #{vq_vae_forward.11} parent=0 // pred_region
    _
  $region13: #{vq_vae_forward.11} parent=0 // pred_fallthru
    _
  %v15 = vld [vmem:[%s0] sm:$0xff]
  %v16 = vld [vmem:[%s0 + $0x8] sm:$0xff]
  %v17 = vld [vmem:[%s0 + $0x10] sm:$0xff]
  %v18 = vld [vmem:[%s0 + $0x18] sm:$0xff]
  %v19 = vld [vmem:[%s1] sm:$0xf]
  %v20 = vld [vmem:[%s1 + $0x4] sm:$0xf]
  %v21 = vld [vmem:[%s1 + $0x8] sm:$0xf]
  %v22 = vld [vmem:[%s1 + $0xc] sm:$0xf]
  %v23 = vld [vmem:[%s1 + $0x10] sm:$0xf]
  %v24 = vld [vmem:[%s1 + $0x14] sm:$0xf]
  %v25 = vld [vmem:[%s1 + $0x18] sm:$0xf]
  %v26 = vld [vmem:[%s1 + $0x1c] sm:$0xf]
  %v27 = vld [vmem:[%s1 + $0x20] sm:$0xf]
  %v28 = vld [vmem:[%s1 + $0x24] sm:$0xf]
  %v29 = vld [vmem:[%s1 + $0x28] sm:$0xf]
  %v30 = vld [vmem:[%s1 + $0x2c] sm:$0xf]
  %v31 = vld [vmem:[%s1 + $0x30] sm:$0xf]
  %v32 = vld [vmem:[%s1 + $0x34] sm:$0xf]
  %v33 = vld [vmem:[%s1 + $0x38] sm:$0xf]
  %v34 = vld [vmem:[%s1 + $0x3c] sm:$0xf]
  %v35 = vld [vmem:[%s1 + $0x40] sm:$0xf]
  %v36 = vld [vmem:[%s1 + $0x44] sm:$0xf]
  %v37 = vld [vmem:[%s1 + $0x48] sm:$0xf]
  %v38 = vld [vmem:[%s1 + $0x4c] sm:$0xf]
  %v39 = vld [vmem:[%s1 + $0x50] sm:$0xf]
  %v40 = vld [vmem:[%s1 + $0x54] sm:$0xf]
  %v41 = vld [vmem:[%s1 + $0x58] sm:$0xf]
  %v42 = vld [vmem:[%s1 + $0x5c] sm:$0xf]
  %v43 = vld [vmem:[%s1 + $0x60] sm:$0xf]
  %v44 = vld [vmem:[%s1 + $0x64] sm:$0xf]
  %v45 = vld [vmem:[%s1 + $0x68] sm:$0xf]
  %v46 = vld [vmem:[%s1 + $0x6c] sm:$0xf]
  %v47 = vld [vmem:[%s1 + $0x70] sm:$0xf]
  %v48 = vld [vmem:[%s1 + $0x74] sm:$0xf]
  %v49 = vld [vmem:[%s1 + $0x78] sm:$0xf]
  %v50 = vld [vmem:[%s1 + $0x7c] sm:$0xf]
  %v51 = vld [vmem:[%s2] sm:$0x1]
  %v53 = vlaneseq
  %v54 = vshrl.u32 %v53, 7
  %v55 = vsub.s32 0, %v54
  %v56 = vrot.slane %v51, %v55
  %v62 = vunpack.c.l.b16 %v15
  %v63 = vunpack.c.h.b16 %v15
  %v64 = vunpack.c.l.b16 %v16
  %v65 = vunpack.c.h.b16 %v16
  %v66 = vunpack.c.l.b16 %v17
  %v67 = vunpack.c.h.b16 %v17
  %v68 = vunpack.c.l.b16 %v18
  %v69 = vunpack.c.h.b16 %v18
  %v70 = vpack.c.b16 %v64, %v62
  %v71 = vpack.c.b16 %v65, %v63
  %v72 = vpack.c.b16 %v68, %v66
  %v73 = vpack.c.b16 %v69, %v67
  %v110 = vunpack.c.l.b16 %v19
  %v111 = vunpack.c.l.b16 %v20
  %v112 = vunpack.c.l.b16 %v21
  %v113 = vunpack.c.l.b16 %v22
  %v114 = vunpack.c.l.b16 %v23
  %v115 = vunpack.c.l.b16 %v24
  %v116 = vunpack.c.l.b16 %v25
  %v117 = vunpack.c.l.b16 %v26
  %v118 = vunpack.c.l.b16 %v27
  %v119 = vunpack.c.l.b16 %v28
  %v120 = vunpack.c.l.b16 %v29
  %v121 = vunpack.c.l.b16 %v30
  %v122 = vunpack.c.l.b16 %v31
  %v123 = vunpack.c.l.b16 %v32
  %v124 = vunpack.c.l.b16 %v33
  %v125 = vunpack.c.l.b16 %v34
  %v126 = vunpack.c.l.b16 %v35
  %v127 = vunpack.c.l.b16 %v36
  %v128 = vunpack.c.l.b16 %v37
  %v129 = vunpack.c.l.b16 %v38
  %v130 = vunpack.c.l.b16 %v39
  %v131 = vunpack.c.l.b16 %v40
  %v132 = vunpack.c.l.b16 %v41
  %v133 = vunpack.c.l.b16 %v42
  %v134 = vunpack.c.l.b16 %v43
  %v135 = vunpack.c.l.b16 %v44
  %v136 = vunpack.c.l.b16 %v45
  %v137 = vunpack.c.l.b16 %v46
  %v138 = vunpack.c.l.b16 %v47
  %v139 = vunpack.c.l.b16 %v48
  %v140 = vunpack.c.l.b16 %v49
  %v141 = vunpack.c.l.b16 %v50
  %v142 = vpack.c.b16 %v111, %v110
  %v143 = vpack.c.b16 %v113, %v112
  %v144 = vpack.c.b16 %v115, %v114
  %v145 = vpack.c.b16 %v117, %v116
  %v146 = vpack.c.b16 %v119, %v118
  %v147 = vpack.c.b16 %v121, %v120
  %v148 = vpack.c.b16 %v123, %v122
  %v149 = vpack.c.b16 %v125, %v124
  %v150 = vpack.c.b16 %v127, %v126
  %v151 = vpack.c.b16 %v129, %v128
  %v152 = vpack.c.b16 %v131, %v130
  %v153 = vpack.c.b16 %v133, %v132
  %v154 = vpack.c.b16 %v135, %v134
  %v155 = vpack.c.b16 %v137, %v136
  %v156 = vpack.c.b16 %v139, %v138
  %v157 = vpack.c.b16 %v141, %v140
  %174 = vmatprep.subr.bf16.mxu0 0
  %175 = vmatpush1.bf16.msra.mxu0 %v142
  %176 = vmatprep.subr.bf16.mxu0 0
  %177 = vmatpush1.bf16.msra.mxu0 %v143
  %178 = vmatprep.subr.bf16.mxu0 0
  %179 = vmatpush1.bf16.msra.mxu0 %v144
  %180 = vmatprep.subr.bf16.mxu0 0
  %181 = vmatpush1.bf16.msra.mxu0 %v145
  %182 = vmatprep.subr.bf16.mxu0 0
  %183 = vmatpush1.bf16.msra.mxu0 %v146
  %184 = vmatprep.subr.bf16.mxu0 0
  %185 = vmatpush1.bf16.msra.mxu0 %v147
  %186 = vmatprep.subr.bf16.mxu0 0
  %187 = vmatpush1.bf16.msra.mxu0 %v148
  %188 = vmatprep.subr.bf16.mxu0 0
  %189 = vmatpush1.bf16.msra.mxu0 %v149
  %190 = vmatprep.subr.bf16.mxu0 0
  %191 = vmatpush1.bf16.msra.mxu0 %v150
  %192 = vmatprep.subr.bf16.mxu0 0
  %193 = vmatpush1.bf16.msra.mxu0 %v151
  %194 = vmatprep.subr.bf16.mxu0 0
  %195 = vmatpush1.bf16.msra.mxu0 %v152
  %196 = vmatprep.subr.bf16.mxu0 0
  %197 = vmatpush1.bf16.msra.mxu0 %v153
  %198 = vmatprep.subr.bf16.mxu0 0
  %199 = vmatpush1.bf16.msra.mxu0 %v154
  %200 = vmatprep.subr.bf16.mxu0 0
  %201 = vmatpush1.bf16.msra.mxu0 %v155
  %202 = vmatprep.subr.bf16.mxu0 0
  %203 = vmatpush1.bf16.msra.mxu0 %v156
  %204 = vmatprep.subr.bf16.mxu0 0
  %205 = vmatpush1.bf16.msra.mxu0 %v157
  %206 = vmatprep.mubr.bf16.mxu0 %v71
  %207 = vmatmul.mubr.bf16.gmra.mrb[0].mxu0 %v70
  %v208 = vpop.f32.mrb[0].mxu0
  %v209 = vadd.f32 %v56, %v208
  %v210 = vpop.f32.mrb[0].mxu0
  %v211 = vpop.f32.mrb[0].mxu0
  %v212 = vadd.f32 %v56, %v211
  %v213 = vpop.f32.mrb[0].mxu0
  %214 = vmatprep.mubr.bf16.mxu0 %v73
  %215 = vmatmul.mubr.bf16.gmra.mrb[0].mxu0 %v72
  %v216 = vpop.f32.mrb[0].mxu0
  %v217 = vadd.f32 %v56, %v216
  %v218 = vpop.f32.mrb[0].mxu0
  %v219 = vpop.f32.mrb[0].mxu0
  %v220 = vadd.f32 %v56, %v219
  %v221 = vpop.f32.mrb[0].mxu0
  %222 = vdwg.mxu0
  %v223 = vmax.f32 %v209, 0.0
  %v224 = vmax.f32 %v212, 0.0
  %v225 = vmax.f32 %v217, 0.0
  %v226 = vmax.f32 %v220, 0.0
  %v227 = vpack.c.bf16 %v224, %v223
  %v228 = vpack.c.bf16 %v226, %v225
  %v231 = vunpack.c.l.b16 %v227
  %v232 = vunpack.c.h.b16 %v227
  %v233 = vunpack.c.l.b16 %v228
  %v234 = vunpack.c.h.b16 %v228
  %v235 = vpack.c.b16 %v231, %v231
  %v236 = vpack.c.b16 %v232, %v232
  %v237 = vpack.c.b16 %v233, %v233
  %v238 = vpack.c.b16 %v234, %v234
  %243 = vst [vmem:[%s3] sm:$0xf] %v235
  %244 = vst [vmem:[%s3 + $0x4] sm:$0xf] %v236
  %245 = vst [vmem:[%s3 + $0x8] sm:$0xf] %v237
  %246 = vst [vmem:[%s3 + $0xc] sm:$0xf] %v238
  // Predicated region
  $region14: #{vq_vae_forward.11} parent=0 // pred_check
    _
  $region15: #{vq_vae_forward.11} parent=0 // pred_check_branch
    %248 = sbr.rel (0) target = $region17
  $region16: #{vq_vae_forward.11} parent=0 // pred_region
    _
  $region17: #{vq_vae_forward.11} parent=0 // pred_fallthru
    _
  // Predicated region
  $region18: #{vq_vae_forward.11} parent=0 // pred_check
    _
  $region19: #{vq_vae_forward.11} parent=0 // pred_check_branch
    %250 = sbr.rel (0) target = $region21
  $region20: #{vq_vae_forward.11} parent=0 // pred_region
    _
  $region21: #{vq_vae_forward.11} parent=0 // pred_fallthru
    _

// kernel: vq_vae_forward.14
$region0: #{vq_vae_forward.14}
  #allocation0 [shape = 'u32[]', space=smem, size = 0x4, offset = 0x4, fixed_abs, tag = 'smem constant byte address 0x4 - core index']
  #allocation1 [shape = 'u32[144,128]{1,0:T(1,128)}', space=vmem, size = 0x12000, scoped, tag = 'internal scratch']
  %s0 = inlined_call_operand.vmem [shape: bf16[32,128], index: 0, kind: input, shape index: {}]
  %s1 = inlined_call_operand.vmem [shape: bf16[128,128], index: 1, kind: input, shape index: {}]
  %s2 = inlined_call_operand.vmem [shape: f32[1,128], index: 2, kind: input, shape index: {}]
  %s3 = inlined_call_operand.vmem [shape: f32[32,128], index: 3, kind: output, shape index: {}]
  %s4 = sld [smem:[#allocation0]]
  $region22: #{vq_vae_forward.14} parent=0
    _
  %s6 = ssub.s32 1, %s4
  %s7 = scalar_select 0, %s6, %s4
  // Predicated region
  $region2: #{vq_vae_forward.14} parent=0 // pred_check
    _
  $region3: #{vq_vae_forward.14} parent=0 // pred_check_branch
    %9 = sbr.rel (0) target = $region5
  $region4: #{vq_vae_forward.14} parent=0 // pred_region
    _
  $region5: #{vq_vae_forward.14} parent=0 // pred_fallthru
    _
  // Predicated region
  $region6: #{vq_vae_forward.14} parent=0 // pred_check
    _
  $region7: #{vq_vae_forward.14} parent=0 // pred_check_branch
    %11 = sbr.rel (0) target = $region9
  $region8: #{vq_vae_forward.14} parent=0 // pred_region
    _
  $region9: #{vq_vae_forward.14} parent=0 // pred_fallthru
    _
  // Predicated region
  $region10: #{vq_vae_forward.14} parent=0 // pred_check
    _
  $region11: #{vq_vae_forward.14} parent=0 // pred_check_branch
    %13 = sbr.rel (0) target = $region13
  $region12: #{vq_vae_forward.14} parent=0 // pred_region
    _
  $region13: #{vq_vae_forward.14} parent=0 // pred_fallthru
    _
  %v15 = vld [vmem:[%s0] sm:$0xf]
  %v16 = vld [vmem:[%s0 + $0x4] sm:$0xf]
  %v17 = vld [vmem:[%s0 + $0x8] sm:$0xf]
  %v18 = vld [vmem:[%s0 + $0xc] sm:$0xf]
  %v19 = vmax.bf16 %v15, 0
  %v20 = vmax.bf16 %v16, 0
  %v21 = vmax.bf16 %v17, 0
  %v22 = vmax.bf16 %v18, 0
  %v23 = vld [vmem:[%s1] sm:$0xf]
  %v24 = vld [vmem:[%s1 + $0x4] sm:$0xf]
  %v25 = vld [vmem:[%s1 + $0x8] sm:$0xf]
  %v26 = vld [vmem:[%s1 + $0xc] sm:$0xf]
  %v27 = vld [vmem:[%s1 + $0x10] sm:$0xf]
  %v28 = vld [vmem:[%s1 + $0x14] sm:$0xf]
  %v29 = vld [vmem:[%s1 + $0x18] sm:$0xf]
  %v30 = vld [vmem:[%s1 + $0x1c] sm:$0xf]
  %v31 = vld [vmem:[%s1 + $0x20] sm:$0xf]
  %v32 = vld [vmem:[%s1 + $0x24] sm:$0xf]
  %v33 = vld [vmem:[%s1 + $0x28] sm:$0xf]
  %v34 = vld [vmem:[%s1 + $0x2c] sm:$0xf]
  %v35 = vld [vmem:[%s1 + $0x30] sm:$0xf]
  %v36 = vld [vmem:[%s1 + $0x34] sm:$0xf]
  %v37 = vld [vmem:[%s1 + $0x38] sm:$0xf]
  %v38 = vld [vmem:[%s1 + $0x3c] sm:$0xf]
  %v39 = vld [vmem:[%s2] sm:$0x1]
  %v41 = vlaneseq
  %v42 = vshrl.u32 %v41, 7
  %v43 = vsub.s32 0, %v42
  %v44 = vrot.slane %v39, %v43
  %v50 = vunpack.c.l.b16 %v19
  %v51 = vunpack.c.l.b16 %v20
  %v52 = vunpack.c.l.b16 %v21
  %v53 = vunpack.c.l.b16 %v22
  %v54 = vpack.c.b16 %v51, %v50
  %v55 = vpack.c.b16 %v53, %v52
  %v74 = vunpack.c.l.b16 %v23
  %v75 = vunpack.c.l.b16 %v24
  %v76 = vunpack.c.l.b16 %v25
  %v77 = vunpack.c.l.b16 %v26
  %v78 = vunpack.c.l.b16 %v27
  %v79 = vunpack.c.l.b16 %v28
  %v80 = vunpack.c.l.b16 %v29
  %v81 = vunpack.c.l.b16 %v30
  %v82 = vunpack.c.l.b16 %v31
  %v83 = vunpack.c.l.b16 %v32
  %v84 = vunpack.c.l.b16 %v33
  %v85 = vunpack.c.l.b16 %v34
  %v86 = vunpack.c.l.b16 %v35
  %v87 = vunpack.c.l.b16 %v36
  %v88 = vunpack.c.l.b16 %v37
  %v89 = vunpack.c.l.b16 %v38
  %v90 = vpack.c.b16 %v75, %v74
  %v91 = vpack.c.b16 %v77, %v76
  %v92 = vpack.c.b16 %v79, %v78
  %v93 = vpack.c.b16 %v81, %v80
  %v94 = vpack.c.b16 %v83, %v82
  %v95 = vpack.c.b16 %v85, %v84
  %v96 = vpack.c.b16 %v87, %v86
  %v97 = vpack.c.b16 %v89, %v88
  %106 = vmatprep.subr.bf16.mxu0 0
  %107 = vmatpush1.bf16.msra.mxu0 %v90
  %108 = vmatprep.subr.bf16.mxu0 0
  %109 = vmatpush1.bf16.msra.mxu0 %v91
  %110 = vmatprep.subr.bf16.mxu0 0
  %111 = vmatpush1.bf16.msra.mxu0 %v92
  %112 = vmatprep.subr.bf16.mxu0 0
  %113 = vmatpush1.bf16.msra.mxu0 %v93
  %114 = vmatprep.subr.bf16.mxu0 0
  %115 = vmatpush1.bf16.msra.mxu0 %v94
  %116 = vmatprep.subr.bf16.mxu0 0
  %117 = vmatpush1.bf16.msra.mxu0 %v95
  %118 = vmatprep.subr.bf16.mxu0 0
  %119 = vmatpush1.bf16.msra.mxu0 %v96
  %120 = vmatprep.subr.bf16.mxu0 0
  %121 = vmatpush1.bf16.msra.mxu0 %v97
  %122 = vmatprep.subr.bf16.mxu0 0
  %123 = vmatpush1.bf16.msra.mxu0 0
  %124 = vmatprep.subr.bf16.mxu0 0
  %125 = vmatpush1.bf16.msra.mxu0 0
  %126 = vmatprep.subr.bf16.mxu0 0
  %127 = vmatpush1.bf16.msra.mxu0 0
  %128 = vmatprep.subr.bf16.mxu0 0
  %129 = vmatpush1.bf16.msra.mxu0 0
  %130 = vmatprep.subr.bf16.mxu0 0
  %131 = vmatpush1.bf16.msra.mxu0 0
  %132 = vmatprep.subr.bf16.mxu0 0
  %133 = vmatpush1.bf16.msra.mxu0 0
  %134 = vmatprep.subr.bf16.mxu0 0
  %135 = vmatpush1.bf16.msra.mxu0 0
  %136 = vmatprep.subr.bf16.mxu0 0
  %137 = vmatpush1.bf16.msra.mxu0 0
  %138 = vmatprep.mubr.bf16.mxu0 0
  %139 = vmatmul.mubr.bf16.gmra.mrb[0].mxu0 %v54
  %v140 = vpop.f32.mrb[0].mxu0
  %v141 = vadd.f32 %v44, %v140
  %v142 = vpop.f32.mrb[0].mxu0
  %v143 = vpop.f32.mrb[0].mxu0
  %v144 = vadd.f32 %v44, %v143
  %v145 = vpop.f32.mrb[0].mxu0
  %146 = vmatprep.mubr.bf16.mxu0 0
  %147 = vmatmul.mubr.bf16.gmra.mrb[0].mxu0 %v55
  %v148 = vpop.f32.mrb[0].mxu0
  %v149 = vadd.f32 %v44, %v148
  %v150 = vpop.f32.mrb[0].mxu0
  %v151 = vpop.f32.mrb[0].mxu0
  %v152 = vadd.f32 %v44, %v151
  %v153 = vpop.f32.mrb[0].mxu0
  %154 = vdwg.mxu0
  %155 = vst [vmem:[%s3] sm:$0xff] %v141
  %156 = vst [vmem:[%s3 + $0x8] sm:$0xff] %v144
  %157 = vst [vmem:[%s3 + $0x10] sm:$0xff] %v149
  %158 = vst [vmem:[%s3 + $0x18] sm:$0xff] %v152
  // Predicated region
  $region14: #{vq_vae_forward.14} parent=0 // pred_check
    _
  $region15: #{vq_vae_forward.14} parent=0 // pred_check_branch
    %160 = sbr.rel (0) target = $region17
  $region16: #{vq_vae_forward.14} parent=0 // pred_region
    _
  $region17: #{vq_vae_forward.14} parent=0 // pred_fallthru
    _
  // Predicated region
  $region18: #{vq_vae_forward.14} parent=0 // pred_check
    _
  $region19: #{vq_vae_forward.14} parent=0 // pred_check_branch
    %162 = sbr.rel (0) target = $region21
  $region20: #{vq_vae_forward.14} parent=0 // pred_region
    _
  $region21: #{vq_vae_forward.14} parent=0 // pred_fallthru
    _

// kernel: vq_vae_forward.12
$region0: #{vq_vae_forward.12}
  #allocation0 [shape = 'u32[]', space=smem, size = 0x4, offset = 0x4, fixed_abs, tag = 'smem constant byte address 0x4 - core index']
  #allocation1 [shape = 'u32[144,128]{1,0:T(1,128)}', space=vmem, size = 0x12000, scoped, tag = 'internal scratch']
  %s0 = inlined_call_operand.vmem [shape: bf16[32,256], index: 0, kind: input, shape index: {}]
  %s1 = inlined_call_operand.vmem [shape: bf16[256,128], index: 1, kind: input, shape index: {}]
  %s2 = inlined_call_operand.vmem [shape: f32[1,128], index: 2, kind: input, shape index: {}]
  %s3 = inlined_call_operand.vmem [shape: bf16[128,128], index: 3, kind: input, shape index: {}]
  %s4 = inlined_call_operand.vmem [shape: f32[1,128], index: 4, kind: input, shape index: {}]
  %s5 = inlined_call_operand.vmem [shape: bf16[32,128], index: 5, kind: input, shape index: {}]
  %s6 = inlined_call_operand.vmem [shape: bf16[32,128], index: 6, kind: output, shape index: {}]
  %s7 = sld [smem:[#allocation0]]
  $region34: #{vq_vae_forward.12} parent=0
    _
  %s9 = ssub.s32 1, %s7
  %s10 = scalar_select 0, %s9, %s7
  // Predicated region
  $region2: #{vq_vae_forward.12} parent=0 // pred_check
    _
  $region3: #{vq_vae_forward.12} parent=0 // pred_check_branch
    %12 = sbr.rel (0) target = $region5
  $region4: #{vq_vae_forward.12} parent=0 // pred_region
    _
  $region5: #{vq_vae_forward.12} parent=0 // pred_fallthru
    _
  // Predicated region
  $region6: #{vq_vae_forward.12} parent=0 // pred_check
    _
  $region7: #{vq_vae_forward.12} parent=0 // pred_check_branch
    %14 = sbr.rel (0) target = $region9
  $region8: #{vq_vae_forward.12} parent=0 // pred_region
    _
  $region9: #{vq_vae_forward.12} parent=0 // pred_fallthru
    _
  // Predicated region
  $region10: #{vq_vae_forward.12} parent=0 // pred_check
    _
  $region11: #{vq_vae_forward.12} parent=0 // pred_check_branch
    %16 = sbr.rel (0) target = $region13
  $region12: #{vq_vae_forward.12} parent=0 // pred_region
    _
  $region13: #{vq_vae_forward.12} parent=0 // pred_fallthru
    _
  // Predicated region
  $region14: #{vq_vae_forward.12} parent=0 // pred_check
    _
  $region15: #{vq_vae_forward.12} parent=0 // pred_check_branch
    %18 = sbr.rel (0) target = $region17
  $region16: #{vq_vae_forward.12} parent=0 // pred_region
    _
  $region17: #{vq_vae_forward.12} parent=0 // pred_fallthru
    _
  // Predicated region
  $region18: #{vq_vae_forward.12} parent=0 // pred_check
    _
  $region19: #{vq_vae_forward.12} parent=0 // pred_check_branch
    %20 = sbr.rel (0) target = $region21
  $region20: #{vq_vae_forward.12} parent=0 // pred_region
    _
  $region21: #{vq_vae_forward.12} parent=0 // pred_fallthru
    _
  // Predicated region
  $region22: #{vq_vae_forward.12} parent=0 // pred_check
    _
  $region23: #{vq_vae_forward.12} parent=0 // pred_check_branch
    %22 = sbr.rel (0) target = $region25
  $region24: #{vq_vae_forward.12} parent=0 // pred_region
    _
  $region25: #{vq_vae_forward.12} parent=0 // pred_fallthru
    _
  %v24 = vld [vmem:[%s0] sm:$0xff]
  %v25 = vld [vmem:[%s0 + $0x8] sm:$0xff]
  %v26 = vld [vmem:[%s0 + $0x10] sm:$0xff]
  %v27 = vld [vmem:[%s0 + $0x18] sm:$0xff]
  %v28 = vmax.bf16 %v24, 0
  %v29 = vmax.bf16 %v25, 0
  %v30 = vmax.bf16 %v26, 0
  %v31 = vmax.bf16 %v27, 0
  %v32 = vld [vmem:[%s1] sm:$0xf]
  %v33 = vld [vmem:[%s1 + $0x4] sm:$0xf]
  %v34 = vld [vmem:[%s1 + $0x8] sm:$0xf]
  %v35 = vld [vmem:[%s1 + $0xc] sm:$0xf]
  %v36 = vld [vmem:[%s1 + $0x10] sm:$0xf]
  %v37 = vld [vmem:[%s1 + $0x14] sm:$0xf]
  %v38 = vld [vmem:[%s1 + $0x18] sm:$0xf]
  %v39 = vld [vmem:[%s1 + $0x1c] sm:$0xf]
  %v40 = vld [vmem:[%s1 + $0x20] sm:$0xf]
  %v41 = vld [vmem:[%s1 + $0x24] sm:$0xf]
  %v42 = vld [vmem:[%s1 + $0x28] sm:$0xf]
  %v43 = vld [vmem:[%s1 + $0x2c] sm:$0xf]
  %v44 = vld [vmem:[%s1 + $0x30] sm:$0xf]
  %v45 = vld [vmem:[%s1 + $0x34] sm:$0xf]
  %v46 = vld [vmem:[%s1 + $0x38] sm:$0xf]
  %v47 = vld [vmem:[%s1 + $0x3c] sm:$0xf]
  %v48 = vld [vmem:[%s1 + $0x40] sm:$0xf]
  %v49 = vld [vmem:[%s1 + $0x44] sm:$0xf]
  %v50 = vld [vmem:[%s1 + $0x48] sm:$0xf]
  %v51 = vld [vmem:[%s1 + $0x4c] sm:$0xf]
  %v52 = vld [vmem:[%s1 + $0x50] sm:$0xf]
  %v53 = vld [vmem:[%s1 + $0x54] sm:$0xf]
  %v54 = vld [vmem:[%s1 + $0x58] sm:$0xf]
  %v55 = vld [vmem:[%s1 + $0x5c] sm:$0xf]
  %v56 = vld [vmem:[%s1 + $0x60] sm:$0xf]
  %v57 = vld [vmem:[%s1 + $0x64] sm:$0xf]
  %v58 = vld [vmem:[%s1 + $0x68] sm:$0xf]
  %v59 = vld [vmem:[%s1 + $0x6c] sm:$0xf]
  %v60 = vld [vmem:[%s1 + $0x70] sm:$0xf]
  %v61 = vld [vmem:[%s1 + $0x74] sm:$0xf]
  %v62 = vld [vmem:[%s1 + $0x78] sm:$0xf]
  %v63 = vld [vmem:[%s1 + $0x7c] sm:$0xf]
  %v64 = vld [vmem:[%s2] sm:$0x1]
  %v66 = vlaneseq
  %v67 = vshrl.u32 %v66, 7
  %v68 = vsub.s32 0, %v67
  %v69 = vrot.slane %v64, %v68
  %v75 = vunpack.c.l.b16 %v28
  %v76 = vunpack.c.h.b16 %v28
  %v77 = vunpack.c.l.b16 %v29
  %v78 = vunpack.c.h.b16 %v29
  %v79 = vunpack.c.l.b16 %v30
  %v80 = vunpack.c.h.b16 %v30
  %v81 = vunpack.c.l.b16 %v31
  %v82 = vunpack.c.h.b16 %v31
  %v83 = vpack.c.b16 %v77, %v75
  %v84 = vpack.c.b16 %v78, %v76
  %v85 = vpack.c.b16 %v81, %v79
  %v86 = vpack.c.b16 %v82, %v80
  %v123 = vunpack.c.l.b16 %v32
  %v124 = vunpack.c.l.b16 %v33
  %v125 = vunpack.c.l.b16 %v34
  %v126 = vunpack.c.l.b16 %v35
  %v127 = vunpack.c.l.b16 %v36
  %v128 = vunpack.c.l.b16 %v37
  %v129 = vunpack.c.l.b16 %v38
  %v130 = vunpack.c.l.b16 %v39
  %v131 = vunpack.c.l.b16 %v40
  %v132 = vunpack.c.l.b16 %v41
  %v133 = vunpack.c.l.b16 %v42
  %v134 = vunpack.c.l.b16 %v43
  %v135 = vunpack.c.l.b16 %v44
  %v136 = vunpack.c.l.b16 %v45
  %v137 = vunpack.c.l.b16 %v46
  %v138 = vunpack.c.l.b16 %v47
  %v139 = vunpack.c.l.b16 %v48
  %v140 = vunpack.c.l.b16 %v49
  %v141 = vunpack.c.l.b16 %v50
  %v142 = vunpack.c.l.b16 %v51
  %v143 = vunpack.c.l.b16 %v52
  %v144 = vunpack.c.l.b16 %v53
  %v145 = vunpack.c.l.b16 %v54
  %v146 = vunpack.c.l.b16 %v55
  %v147 = vunpack.c.l.b16 %v56
  %v148 = vunpack.c.l.b16 %v57
  %v149 = vunpack.c.l.b16 %v58
  %v150 = vunpack.c.l.b16 %v59
  %v151 = vunpack.c.l.b16 %v60
  %v152 = vunpack.c.l.b16 %v61
  %v153 = vunpack.c.l.b16 %v62
  %v154 = vunpack.c.l.b16 %v63
  %v155 = vpack.c.b16 %v124, %v123
  %v156 = vpack.c.b16 %v126, %v125
  %v157 = vpack.c.b16 %v128, %v127
  %v158 = vpack.c.b16 %v130, %v129
  %v159 = vpack.c.b16 %v132, %v131
  %v160 = vpack.c.b16 %v134, %v133
  %v161 = vpack.c.b16 %v136, %v135
  %v162 = vpack.c.b16 %v138, %v137
  %v163 = vpack.c.b16 %v140, %v139
  %v164 = vpack.c.b16 %v142, %v141
  %v165 = vpack.c.b16 %v144, %v143
  %v166 = vpack.c.b16 %v146, %v145
  %v167 = vpack.c.b16 %v148, %v147
  %v168 = vpack.c.b16 %v150, %v149
  %v169 = vpack.c.b16 %v152, %v151
  %v170 = vpack.c.b16 %v154, %v153
  %187 = vmatprep.subr.bf16.mxu0 0
  %188 = vmatpush1.bf16.msra.mxu0 %v155
  %189 = vmatprep.subr.bf16.mxu0 0
  %190 = vmatpush1.bf16.msra.mxu0 %v156
  %191 = vmatprep.subr.bf16.mxu0 0
  %192 = vmatpush1.bf16.msra.mxu0 %v157
  %193 = vmatprep.subr.bf16.mxu0 0
  %194 = vmatpush1.bf16.msra.mxu0 %v158
  %195 = vmatprep.subr.bf16.mxu0 0
  %196 = vmatpush1.bf16.msra.mxu0 %v159
  %197 = vmatprep.subr.bf16.mxu0 0
  %198 = vmatpush1.bf16.msra.mxu0 %v160
  %199 = vmatprep.subr.bf16.mxu0 0
  %200 = vmatpush1.bf16.msra.mxu0 %v161
  %201 = vmatprep.subr.bf16.mxu0 0
  %202 = vmatpush1.bf16.msra.mxu0 %v162
  %203 = vmatprep.subr.bf16.mxu0 0
  %204 = vmatpush1.bf16.msra.mxu0 %v163
  %205 = vmatprep.subr.bf16.mxu0 0
  %206 = vmatpush1.bf16.msra.mxu0 %v164
  %207 = vmatprep.subr.bf16.mxu0 0
  %208 = vmatpush1.bf16.msra.mxu0 %v165
  %209 = vmatprep.subr.bf16.mxu0 0
  %210 = vmatpush1.bf16.msra.mxu0 %v166
  %211 = vmatprep.subr.bf16.mxu0 0
  %212 = vmatpush1.bf16.msra.mxu0 %v167
  %213 = vmatprep.subr.bf16.mxu0 0
  %214 = vmatpush1.bf16.msra.mxu0 %v168
  %215 = vmatprep.subr.bf16.mxu0 0
  %216 = vmatpush1.bf16.msra.mxu0 %v169
  %217 = vmatprep.subr.bf16.mxu0 0
  %218 = vmatpush1.bf16.msra.mxu0 %v170
  %219 = vmatprep.mubr.bf16.mxu0 %v84
  %220 = vmatmul.mubr.bf16.gmra.mrb[0].mxu0 %v83
  %v221 = vpop.f32.mrb[0].mxu0
  %v222 = vadd.f32 %v69, %v221
  %v223 = vpop.f32.mrb[0].mxu0
  %v224 = vpop.f32.mrb[0].mxu0
  %v225 = vadd.f32 %v69, %v224
  %v226 = vpop.f32.mrb[0].mxu0
  %227 = vmatprep.mubr.bf16.mxu0 %v86
  %228 = vmatmul.mubr.bf16.gmra.mrb[0].mxu0 %v85
  %v229 = vpop.f32.mrb[0].mxu0
  %v230 = vadd.f32 %v69, %v229
  %v231 = vpop.f32.mrb[0].mxu0
  %v232 = vpop.f32.mrb[0].mxu0
  %v233 = vadd.f32 %v69, %v232
  %v234 = vpop.f32.mrb[0].mxu0
  %235 = vdwg.mxu0
  %v236 = vmax.f32 %v222, 0.0
  %v237 = vmax.f32 %v225, 0.0
  %v238 = vmax.f32 %v230, 0.0
  %v239 = vmax.f32 %v233, 0.0
  %v240 = vpack.c.bf16 %v237, %v236
  %v241 = vpack.c.bf16 %v239, %v238
  %v242 = vld [vmem:[%s3] sm:$0xf]
  %v243 = vld [vmem:[%s3 + $0x4] sm:$0xf]
  %v244 = vld [vmem:[%s3 + $0x8] sm:$0xf]
  %v245 = vld [vmem:[%s3 + $0xc] sm:$0xf]
  %v246 = vld [vmem:[%s3 + $0x10] sm:$0xf]
  %v247 = vld [vmem:[%s3 + $0x14] sm:$0xf]
  %v248 = vld [vmem:[%s3 + $0x18] sm:$0xf]
  %v249 = vld [vmem:[%s3 + $0x1c] sm:$0xf]
  %v250 = vld [vmem:[%s3 + $0x20] sm:$0xf]
  %v251 = vld [vmem:[%s3 + $0x24] sm:$0xf]
  %v252 = vld [vmem:[%s3 + $0x28] sm:$0xf]
  %v253 = vld [vmem:[%s3 + $0x2c] sm:$0xf]
  %v254 = vld [vmem:[%s3 + $0x30] sm:$0xf]
  %v255 = vld [vmem:[%s3 + $0x34] sm:$0xf]
  %v256 = vld [vmem:[%s3 + $0x38] sm:$0xf]
  %v257 = vld [vmem:[%s3 + $0x3c] sm:$0xf]
  %v258 = vld [vmem:[%s4] sm:$0x1]
  %v260 = vlaneseq
  %v261 = vshrl.u32 %v260, 7
  %v262 = vsub.s32 0, %v261
  %v263 = vrot.slane %v258, %v262
  %v281 = vunpack.c.l.b16 %v242
  %v282 = vunpack.c.l.b16 %v243
  %v283 = vunpack.c.l.b16 %v244
  %v284 = vunpack.c.l.b16 %v245
  %v285 = vunpack.c.l.b16 %v246
  %v286 = vunpack.c.l.b16 %v247
  %v287 = vunpack.c.l.b16 %v248
  %v288 = vunpack.c.l.b16 %v249
  %v289 = vunpack.c.l.b16 %v250
  %v290 = vunpack.c.l.b16 %v251
  %v291 = vunpack.c.l.b16 %v252
  %v292 = vunpack.c.l.b16 %v253
  %v293 = vunpack.c.l.b16 %v254
  %v294 = vunpack.c.l.b16 %v255
  %v295 = vunpack.c.l.b16 %v256
  %v296 = vunpack.c.l.b16 %v257
  %v297 = vpack.c.b16 %v282, %v281
  %v298 = vpack.c.b16 %v284, %v283
  %v299 = vpack.c.b16 %v286, %v285
  %v300 = vpack.c.b16 %v288, %v287
  %v301 = vpack.c.b16 %v290, %v289
  %v302 = vpack.c.b16 %v292, %v291
  %v303 = vpack.c.b16 %v294, %v293
  %v304 = vpack.c.b16 %v296, %v295
  %313 = vmatprep.subr.bf16.mxu0 0
  %314 = vmatpush1.bf16.msra.mxu0 %v297
  %315 = vmatprep.subr.bf16.mxu0 0
  %316 = vmatpush1.bf16.msra.mxu0 %v298
  %317 = vmatprep.subr.bf16.mxu0 0
  %318 = vmatpush1.bf16.msra.mxu0 %v299
  %319 = vmatprep.subr.bf16.mxu0 0
  %320 = vmatpush1.bf16.msra.mxu0 %v300
  %321 = vmatprep.subr.bf16.mxu0 0
  %322 = vmatpush1.bf16.msra.mxu0 %v301
  %323 = vmatprep.subr.bf16.mxu0 0
  %324 = vmatpush1.bf16.msra.mxu0 %v302
  %325 = vmatprep.subr.bf16.mxu0 0
  %326 = vmatpush1.bf16.msra.mxu0 %v303
  %327 = vmatprep.subr.bf16.mxu0 0
  %328 = vmatpush1.bf16.msra.mxu0 %v304
  %329 = vmatprep.subr.bf16.mxu0 0
  %330 = vmatpush1.bf16.msra.mxu0 0
  %331 = vmatprep.subr.bf16.mxu0 0
  %332 = vmatpush1.bf16.msra.mxu0 0
  %333 = vmatprep.subr.bf16.mxu0 0
  %334 = vmatpush1.bf16.msra.mxu0 0
  %335 = vmatprep.subr.bf16.mxu0 0
  %336 = vmatpush1.bf16.msra.mxu0 0
  %337 = vmatprep.subr.bf16.mxu0 0
  %338 = vmatpush1.bf16.msra.mxu0 0
  %339 = vmatprep.subr.bf16.mxu0 0
  %340 = vmatpush1.bf16.msra.mxu0 0
  %341 = vmatprep.subr.bf16.mxu0 0
  %342 = vmatpush1.bf16.msra.mxu0 0
  %343 = vmatprep.subr.bf16.mxu0 0
  %344 = vmatpush1.bf16.msra.mxu0 0
  %345 = vmatprep.mubr.bf16.mxu0 0
  %346 = vmatmul.mubr.bf16.gmra.mrb[0].mxu0 %v240
  %v347 = vpop.f32.mrb[0].mxu0
  %v348 = vadd.f32 %v263, %v347
  %v349 = vpop.f32.mrb[0].mxu0
  %v350 = vpop.f32.mrb[0].mxu0
  %v351 = vadd.f32 %v263, %v350
  %v352 = vpop.f32.mrb[0].mxu0
  %353 = vmatprep.mubr.bf16.mxu0 0
  %354 = vmatmul.mubr.bf16.gmra.mrb[0].mxu0 %v241
  %v355 = vpop.f32.mrb[0].mxu0
  %v356 = vadd.f32 %v263, %v355
  %v357 = vpop.f32.mrb[0].mxu0
  %v358 = vpop.f32.mrb[0].mxu0
  %v359 = vadd.f32 %v263, %v358
  %v360 = vpop.f32.mrb[0].mxu0
  %361 = vdwg.mxu0
  %v362 = vld [vmem:[%s5] sm:$0xf]
  %v363 = vld [vmem:[%s5 + $0x4] sm:$0xf]
  %v364 = vld [vmem:[%s5 + $0x8] sm:$0xf]
  %v365 = vld [vmem:[%s5 + $0xc] sm:$0xf]
  %v366 = vunpack.c.l.bf16 %v362
  %v367 = vunpack.c.l.bf16 %v363
  %v368 = vunpack.c.l.bf16 %v364
  %v369 = vunpack.c.l.bf16 %v365
  %v370 = vadd.f32 %v348, %v366
  %v371 = vadd.f32 %v351, %v367
  %v372 = vadd.f32 %v356, %v368
  %v373 = vadd.f32 %v359, %v369
  %v374 = vpack.c.bf16 %v371, %v370
  %v375 = vpack.c.bf16 %v373, %v372
  %v378 = vunpack.c.l.b16 %v374
  %v379 = vunpack.c.h.b16 %v374
  %v380 = vunpack.c.l.b16 %v375
  %v381 = vunpack.c.h.b16 %v375
  %v382 = vpack.c.b16 %v378, %v378
  %v383 = vpack.c.b16 %v379, %v379
  %v384 = vpack.c.b16 %v380, %v380
  %v385 = vpack.c.b16 %v381, %v381
  %390 = vst [vmem:[%s6] sm:$0xf] %v382
  %391 = vst [vmem:[%s6 + $0x4] sm:$0xf] %v383
  %392 = vst [vmem:[%s6 + $0x8] sm:$0xf] %v384
  %393 = vst [vmem:[%s6 + $0xc] sm:$0xf] %v385
  // Predicated region
  $region26: #{vq_vae_forward.12} parent=0 // pred_check
    _
  $region27: #{vq_vae_forward.12} parent=0 // pred_check_branch
    %395 = sbr.rel (0) target = $region29
  $region28: #{vq_vae_forward.12} parent=0 // pred_region
    _
  $region29: #{vq_vae_forward.12} parent=0 // pred_fallthru
    _
  // Predicated region
  $region30: #{vq_vae_forward.12} parent=0 // pred_check
    _
  $region31: #{vq_vae_forward.12} parent=0 // pred_check_branch
    %397 = sbr.rel (0) target = $region33
  $region32: #{vq_vae_forward.12} parent=0 // pred_region
    _
  $region33: #{vq_vae_forward.12} parent=0 // pred_fallthru
    _

// kernel: vq_vae_forward.15
$region0: #{vq_vae_forward.15}
  #allocation0 [shape = 'u32[]', space=smem, size = 0x4, offset = 0x4, fixed_abs, tag = 'smem constant byte address 0x4 - core index']
  #allocation1 [shape = 'u32[144,128]{1,0:T(1,128)}', space=vmem, size = 0x12000, scoped, tag = 'internal scratch']
  %s0 = inlined_call_operand.vmem [shape: f32[8,128], index: 0, kind: input, shape index: {}]
  %s1 = inlined_call_operand.vmem [shape: f32[16,8], index: 1, kind: input, shape index: {}]
  %s2 = inlined_call_operand.vmem [shape: f32[16,1], index: 2, kind: input, shape index: {}]
  %s3 = inlined_call_operand.vmem [shape: f32[8,128], index: 3, kind: output, shape index: {0}]
  %s4 = inlined_call_operand.vmem [shape: s32[1,128], index: 4, kind: output, shape index: {1}]
  %s5 = inlined_call_operand.vmem [shape: f32[1,128], index: 5, kind: output, shape index: {2}]
  %6 = xla_tuple %s3, %s4, %s5
  %s7 = sld [smem:[#allocation0]]
  $region38: #{vq_vae_forward.15} parent=0
    _
  %s9 = ssub.s32 1, %s7
  %s10 = scalar_select 0, %s9, %s7
  // Predicated region
  $region2: #{vq_vae_forward.15} parent=0 // pred_check
    _
  $region3: #{vq_vae_forward.15} parent=0 // pred_check_branch
    %12 = sbr.rel (0) target = $region5
  $region4: #{vq_vae_forward.15} parent=0 // pred_region
    _
  $region5: #{vq_vae_forward.15} parent=0 // pred_fallthru
    _
  // Predicated region
  $region6: #{vq_vae_forward.15} parent=0 // pred_check
    _
  $region7: #{vq_vae_forward.15} parent=0 // pred_check_branch
    %14 = sbr.rel (0) target = $region9
  $region8: #{vq_vae_forward.15} parent=0 // pred_region
    _
  $region9: #{vq_vae_forward.15} parent=0 // pred_fallthru
    _
  // Predicated region
  $region10: #{vq_vae_forward.15} parent=0 // pred_check
    _
  $region11: #{vq_vae_forward.15} parent=0 // pred_check_branch
    %16 = sbr.rel (0) target = $region13
  $region12: #{vq_vae_forward.15} parent=0 // pred_region
    _
  $region13: #{vq_vae_forward.15} parent=0 // pred_fallthru
    _
  %v17 = vld [vmem:[%s0] sm:$0xff]
  %v18 = vld [vmem:[%s1] sm:$0xff]
  %v19 = vld [vmem:[%s1 + $0x8] sm:$0xff]
  %v20 = vld [vmem:[%s2] sm:$0xff]
  %v21 = vld [vmem:[%s2 + $0x8] sm:$0xff]
  %vm22 = vcmask 64512
  %v24 = vsel %vm22, %v18, 0
  %v27 = vsel %vm22, %v19, 0
  %29 = vmatprep.subr.mxu0 0.0
  %30 = vmatpush1.msra.mxu0 %v17
  %31 = vmatprep.subr.mxu0 0.0
  %32 = vmatpush1.msra.mxu0 0.0
  %33 = vmatprep.subr.mxu0 0.0
  %34 = vmatpush1.msra.mxu0 0.0
  %35 = vmatprep.subr.mxu0 0.0
  %36 = vmatpush1.msra.mxu0 0.0
  %37 = vmatprep.subr.mxu0 0.0
  %38 = vmatpush1.msra.mxu0 0.0
  %39 = vmatprep.subr.mxu0 0.0
  %40 = vmatpush1.msra.mxu0 0.0
  %41 = vmatprep.subr.mxu0 0.0
  %42 = vmatpush1.msra.mxu0 0.0
  %43 = vmatprep.subr.mxu0 0.0
  %44 = vmatpush1.msra.mxu0 0.0
  %45 = vmatprep.subr.mxu0 0.0
  %46 = vmatpush1.msra.mxu0 0.0
  %47 = vmatprep.subr.mxu0 0.0
  %48 = vmatpush1.msra.mxu0 0.0
  %49 = vmatprep.subr.mxu0 0.0
  %50 = vmatpush1.msra.mxu0 0.0
  %51 = vmatprep.subr.mxu0 0.0
  %52 = vmatpush1.msra.mxu0 0.0
  %53 = vmatprep.subr.mxu0 0.0
  %54 = vmatpush1.msra.mxu0 0.0
  %55 = vmatprep.subr.mxu0 0.0
  %56 = vmatpush1.msra.mxu0 0.0
  %57 = vmatprep.subr.mxu0 0.0
  %58 = vmatpush1.msra.mxu0 0.0
  %59 = vmatprep.subr.mxu0 0.0
  %60 = vmatpush1.msra.mxu0 0.0
  %61 = vmatprep.subr.mxu0 0.0
  %62 = vmatpush1.msra.mxu0 0.0
  %63 = vmatprep.subr.mxu0 0.0
  %64 = vmatpush1.msra.mxu0 0.0
  %65 = vmatprep.subr.mxu0 0.0
  %66 = vmatpush1.msra.mxu0 0.0
  %67 = vmatprep.subr.mxu0 0.0
  %68 = vmatpush1.msra.mxu0 0.0
  %69 = vmatprep.subr.mxu0 0.0
  %70 = vmatpush1.msra.mxu0 0.0
  %71 = vmatprep.subr.mxu0 0.0
  %72 = vmatpush1.msra.mxu0 0.0
  %73 = vmatprep.subr.mxu0 0.0
  %74 = vmatpush1.msra.mxu0 0.0
  %75 = vmatprep.subr.mxu0 0.0
  %76 = vmatpush1.msra.mxu0 0.0
  %77 = vmatprep.subr.mxu0 0.0
  %78 = vmatpush1.msra.mxu0 0.0
  %79 = vmatprep.subr.mxu0 0.0
  %80 = vmatpush1.msra.mxu0 0.0
  %81 = vmatprep.subr.mxu0 0.0
  %82 = vmatpush1.msra.mxu0 0.0
  %83 = vmatprep.subr.mxu0 0.0
  %84 = vmatpush1.msra.mxu0 0.0
  %85 = vmatprep.subr.mxu0 0.0
  %86 = vmatpush1.msra.mxu0 0.0
  %87 = vmatprep.subr.mxu0 0.0
  %88 = vmatpush1.msra.mxu0 0.0
  %89 = vmatprep.subr.mxu0 0.0
  %90 = vmatpush1.msra.mxu0 0.0
  %91 = vmatprep.subr.mxu0 0.0
  %92 = vmatpush1.msra.mxu0 0.0
  %93 = vmatprep.mubr.f32.mxu0 0.0
  %94 = vmatmul.mubr.f32.gmra.mrb[0].mxu0 %v24
  %v95 = vpop.f32.mrb[0].mxu0
  %v96 = vadd.f32 0.0, %v95
  %v97 = vpop.f32.mrb[0].mxu0
  %98 = vmatprep.mubr.f32.mxu0 0.0
  %99 = vmatmul.mubr.f32.gmra.mrb[0].mxu0 %v27
  %v100 = vpop.f32.mrb[0].mxu0
  %v101 = vadd.f32 0.0, %v100
  %v102 = vpop.f32.mrb[0].mxu0
  %103 = vdwg.mxu0
  %v104 = vmul.f32 %v96, 2.0
  %v105 = vmul.f32 %v101, 2.0
  %107 = vset.pattern.permute.xlu0 0
  %108 = vperm.xlu0 %107, %v20
  %v109 = vpop.permute.xlu0 %108
  %112 = vset.pattern.permute.xlu0 0
  %113 = vperm.xlu0 %112, %v21
  %v114 = vpop.permute.xlu0 %113
  %v116 = vsub.f32 %v109, %v104
  %v117 = vsub.f32 %v114, %v105
  %v118 = vlaneseq
  %v119 = vshrl.u32 %v118, 7
  %v120 = vadd.s32 %v119, 8
  %v121 = vmin.f32 %v116, %v117
  %v122 = vrot.slane %v121, 4
  %v123 = vmin.f32 %v121, %v122
  %v124 = vrot.slane %v123, 2
  %v125 = vmin.f32 %v123, %v124
  %v126 = vrot.slane %v125, 1
  %v127 = vmin.f32 %v125, %v126
  %vm128 = vcmp.le.f32.partialorder %v116, %v127
  %vm129 = vcmp.le.f32.partialorder %v117, %v127
  %v130 = vsel %vm128, %v119, 1073741824
  %v131 = vsel %vm129, %v120, 1073741824
  %vm132 = vcmp.lt.s32.totalorder %v130, %v131
  %v133 = vsel %vm132, %v130, %v131
  %v134 = vrot.slane %v133, 4
  %vm135 = vcmp.lt.s32.totalorder %v133, %v134
  %v136 = vsel %vm135, %v133, %v134
  %v137 = vrot.slane %v136, 2
  %vm138 = vcmp.lt.s32.totalorder %v136, %v137
  %v139 = vsel %vm138, %v136, %v137
  %v140 = vrot.slane %v139, 1
  %vm141 = vcmp.lt.s32.totalorder %v139, %v140
  %v142 = vsel %vm141, %v139, %v140
  %143 = vst [vmem:[%s4] sm:$0x1] %v142
  %vm144 = vcmp.eq.s32.totalorder %v119, %v142
  %vm145 = vcmp.eq.s32.totalorder %v120, %v142
  %v146 = vsel %vm144, 1, 0
  %v147 = vsel %vm145, 1, 0
  %v148 = vcvt.s32.f32 %v146
  %v149 = vcvt.s32.f32 %v147
  %150 = vxpose.xlu0.b32.start [1/16] %v18, 128
  %151 = vxpose.xlu0.b32.cont [2/16] %v19, 128
  %152 = vxpose.xlu0.b32.cont [3/16] 0.0, 128
  %153 = vxpose.xlu0.b32.cont [4/16] 0.0, 128
  %154 = vxpose.xlu0.b32.cont [5/16] 0.0, 128
  %155 = vxpose.xlu0.b32.cont [6/16] 0.0, 128
  %156 = vxpose.xlu0.b32.cont [7/16] 0.0, 128
  %157 = vxpose.xlu0.b32.cont [8/16] 0.0, 128
  %158 = vxpose.xlu0.b32.cont [9/16] 0.0, 128
  %159 = vxpose.xlu0.b32.cont [10/16] 0.0, 128
  %160 = vxpose.xlu0.b32.cont [11/16] 0.0, 128
  %161 = vxpose.xlu0.b32.cont [12/16] 0.0, 128
  %162 = vxpose.xlu0.b32.cont [13/16] 0.0, 128
  %163 = vxpose.xlu0.b32.cont [14/16] 0.0, 128
  %164 = vxpose.xlu0.b32.cont [15/16] 0.0, 128
  %165 = vxpose.xlu0.b32.end [16/16] 0.0, 128
  %v166 = vpop.trf.xlu0
  %v167 = vpop.trf.xlu0
  %v168 = vpop.trf.xlu0
  %v169 = vpop.trf.xlu0
  %v170 = vpop.trf.xlu0
  %v171 = vpop.trf.xlu0
  %v172 = vpop.trf.xlu0
  %v173 = vpop.trf.xlu0
  %v174 = vpop.trf.xlu0
  %v175 = vpop.trf.xlu0
  %v176 = vpop.trf.xlu0
  %v177 = vpop.trf.xlu0
  %v178 = vpop.trf.xlu0
  %v179 = vpop.trf.xlu0
  %v180 = vpop.trf.xlu0
  %v181 = vpop.trf.xlu0
  %vm182 = vcmask 130048
  %v184 = vsel %vm182, %v166, 0
  %186 = vmatprep.subr.mxu0 0.0
  %187 = vmatpush1.msra.mxu0 %v148
  %188 = vmatprep.subr.mxu0 0.0
  %189 = vmatpush1.msra.mxu0 %v149
  %190 = vmatprep.subr.mxu0 0.0
  %191 = vmatpush1.msra.mxu0 0.0
  %192 = vmatprep.subr.mxu0 0.0
  %193 = vmatpush1.msra.mxu0 0.0
  %194 = vmatprep.subr.mxu0 0.0
  %195 = vmatpush1.msra.mxu0 0.0
  %196 = vmatprep.subr.mxu0 0.0
  %197 = vmatpush1.msra.mxu0 0.0
  %198 = vmatprep.subr.mxu0 0.0
  %199 = vmatpush1.msra.mxu0 0.0
  %200 = vmatprep.subr.mxu0 0.0
  %201 = vmatpush1.msra.mxu0 0.0
  %202 = vmatprep.subr.mxu0 0.0
  %203 = vmatpush1.msra.mxu0 0.0
  %204 = vmatprep.subr.mxu0 0.0
  %205 = vmatpush1.msra.mxu0 0.0
  %206 = vmatprep.subr.mxu0 0.0
  %207 = vmatpush1.msra.mxu0 0.0
  %208 = vmatprep.subr.mxu0 0.0
  %209 = vmatpush1.msra.mxu0 0.0
  %210 = vmatprep.subr.mxu0 0.0
  %211 = vmatpush1.msra.mxu0 0.0
  %212 = vmatprep.subr.mxu0 0.0
  %213 = vmatpush1.msra.mxu0 0.0
  %214 = vmatprep.subr.mxu0 0.0
  %215 = vmatpush1.msra.mxu0 0.0
  %216 = vmatprep.subr.mxu0 0.0
  %217 = vmatpush1.msra.mxu0 0.0
  %218 = vmatprep.subr.mxu0 0.0
  %219 = vmatpush1.msra.mxu0 0.0
  %220 = vmatprep.subr.mxu0 0.0
  %221 = vmatpush1.msra.mxu0 0.0
  %222 = vmatprep.subr.mxu0 0.0
  %223 = vmatpush1.msra.mxu0 0.0
  %224 = vmatprep.subr.mxu0 0.0
  %225 = vmatpush1.msra.mxu0 0.0
  %226 = vmatprep.subr.mxu0 0.0
  %227 = vmatpush1.msra.mxu0 0.0
  %228 = vmatprep.subr.mxu0 0.0
  %229 = vmatpush1.msra.mxu0 0.0
  %230 = vmatprep.subr.mxu0 0.0
  %231 = vmatpush1.msra.mxu0 0.0
  %232 = vmatprep.subr.mxu0 0.0
  %233 = vmatpush1.msra.mxu0 0.0
  %234 = vmatprep.subr.mxu0 0.0
  %235 = vmatpush1.msra.mxu0 0.0
  %236 = vmatprep.subr.mxu0 0.0
  %237 = vmatpush1.msra.mxu0 0.0
  %238 = vmatprep.subr.mxu0 0.0
  %239 = vmatpush1.msra.mxu0 0.0
  %240 = vmatprep.subr.mxu0 0.0
  %241 = vmatpush1.msra.mxu0 0.0
  %242 = vmatprep.subr.mxu0 0.0
  %243 = vmatpush1.msra.mxu0 0.0
  %244 = vmatprep.subr.mxu0 0.0
  %245 = vmatpush1.msra.mxu0 0.0
  %246 = vmatprep.subr.mxu0 0.0
  %247 = vmatpush1.msra.mxu0 0.0
  %248 = vmatprep.subr.mxu0 0.0
  %249 = vmatpush1.msra.mxu0 0.0
  %250 = vmatprep.mubr.f32.mxu0 0.0
  %251 = vmatmul.mubr.f32.gmra.mrb[0].mxu0 %v184
  %v252 = vpop.f32.mrb[0].mxu0
  %v253 = vadd.f32 0.0, %v252
  %v254 = vpop.f32.mrb[0].mxu0
  %255 = vdwg.mxu0
  %256 = vst [vmem:[%s3] sm:$0xff] %v253
  %v257 = vsub.f32 %v17, %v253
  %v258 = vmul.f32 %v257, %v257
  %v259 = vrot.slane %v258, 4
  %v260 = vadd.f32 %v258, %v259
  %v261 = vrot.slane %v260, 2
  %v262 = vadd.f32 %v260, %v261
  %v263 = vrot.slane %v262, 1
  %v264 = vadd.f32 %v262, %v263
  %265 = vst [vmem:[%s5] sm:$0x1] %v264
  // Predicated region
  $region14: #{vq_vae_forward.15} parent=0 // pred_check
    _
  $region15: #{vq_vae_forward.15} parent=0 // pred_check_branch
    %267 = sbr.rel (0) target = $region17
  $region16: #{vq_vae_forward.15} parent=0 // pred_region
    _
  $region17: #{vq_vae_forward.15} parent=0 // pred_fallthru
    _
  // Predicated region
  $region18: #{vq_vae_forward.15} parent=0 // pred_check
    _
  $region19: #{vq_vae_forward.15} parent=0 // pred_check_branch
    %269 = sbr.rel (0) target = $region21
  $region20: #{vq_vae_forward.15} parent=0 // pred_region
    _
  $region21: #{vq_vae_forward.15} parent=0 // pred_fallthru
    _
  // Predicated region
  $region22: #{vq_vae_forward.15} parent=0 // pred_check
    _
  $region23: #{vq_vae_forward.15} parent=0 // pred_check_branch
    %271 = sbr.rel (0) target = $region25
  $region24: #{vq_vae_forward.15} parent=0 // pred_region
    _
  $region25: #{vq_vae_forward.15} parent=0 // pred_fallthru
    _
  // Predicated region
  $region26: #{vq_vae_forward.15} parent=0 // pred_check
    _
  $region27: #{vq_vae_forward.15} parent=0 // pred_check_branch
    %273 = sbr.rel (0) target = $region29
  $region28: #{vq_vae_forward.15} parent=0 // pred_region
    _
  $region29: #{vq_vae_forward.15} parent=0 // pred_fallthru
    _
  // Predicated region
  $region30: #{vq_vae_forward.15} parent=0 // pred_check
    _
  $region31: #{vq_vae_forward.15} parent=0 // pred_check_branch
    %275 = sbr.rel (0) target = $region33
  $region32: #{vq_vae_forward.15} parent=0 // pred_region
    _
  $region33: #{vq_vae_forward.15} parent=0 // pred_fallthru
    _
  // Predicated region
  $region34: #{vq_vae_forward.15} parent=0 // pred_check
    _
  $region35: #{vq_vae_forward.15} parent=0 // pred_check_branch
    %277 = sbr.rel (0) target = $region37
  $region36: #{vq_vae_forward.15} parent=0 // pred_region
    _
  $region37: #{vq_vae_forward.15} parent=0 // pred_fallthru
    _

// kernel: vq_vae_forward.16
$region0: #{vq_vae_forward.16}
  #allocation0 [shape = 'u32[]', space=smem, size = 0x4, offset = 0x4, fixed_abs, tag = 'smem constant byte address 0x4 - core index']
  #allocation1 [shape = 'u32[144,128]{1,0:T(1,128)}', space=vmem, size = 0x12000, scoped, tag = 'internal scratch']
  %s0 = inlined_call_operand.vmem [shape: bf16[32,128], index: 0, kind: input, shape index: {}]
  %s1 = inlined_call_operand.vmem [shape: bf16[128,128], index: 1, kind: input, shape index: {}]
  %s2 = inlined_call_operand.vmem [shape: f32[1,128], index: 2, kind: input, shape index: {}]
  %s3 = inlined_call_operand.vmem [shape: bf16[128,128], index: 3, kind: input, shape index: {}]
  %s4 = inlined_call_operand.vmem [shape: f32[1,128], index: 4, kind: input, shape index: {}]
  %s5 = inlined_call_operand.vmem [shape: f32[32,128], index: 5, kind: input, shape index: {}]
  %s6 = inlined_call_operand.vmem [shape: bf16[32,128], index: 6, kind: output, shape index: {}]
  %s7 = sld [smem:[#allocation0]]
  $region34: #{vq_vae_forward.16} parent=0
    _
  %s9 = ssub.s32 1, %s7
  %s10 = scalar_select 0, %s9, %s7
  // Predicated region
  $region2: #{vq_vae_forward.16} parent=0 // pred_check
    _
  $region3: #{vq_vae_forward.16} parent=0 // pred_check_branch
    %12 = sbr.rel (0) target = $region5
  $region4: #{vq_vae_forward.16} parent=0 // pred_region
    _
  $region5: #{vq_vae_forward.16} parent=0 // pred_fallthru
    _
  // Predicated region
  $region6: #{vq_vae_forward.16} parent=0 // pred_check
    _
  $region7: #{vq_vae_forward.16} parent=0 // pred_check_branch
    %14 = sbr.rel (0) target = $region9
  $region8: #{vq_vae_forward.16} parent=0 // pred_region
    _
  $region9: #{vq_vae_forward.16} parent=0 // pred_fallthru
    _
  // Predicated region
  $region10: #{vq_vae_forward.16} parent=0 // pred_check
    _
  $region11: #{vq_vae_forward.16} parent=0 // pred_check_branch
    %16 = sbr.rel (0) target = $region13
  $region12: #{vq_vae_forward.16} parent=0 // pred_region
    _
  $region13: #{vq_vae_forward.16} parent=0 // pred_fallthru
    _
  // Predicated region
  $region14: #{vq_vae_forward.16} parent=0 // pred_check
    _
  $region15: #{vq_vae_forward.16} parent=0 // pred_check_branch
    %18 = sbr.rel (0) target = $region17
  $region16: #{vq_vae_forward.16} parent=0 // pred_region
    _
  $region17: #{vq_vae_forward.16} parent=0 // pred_fallthru
    _
  // Predicated region
  $region18: #{vq_vae_forward.16} parent=0 // pred_check
    _
  $region19: #{vq_vae_forward.16} parent=0 // pred_check_branch
    %20 = sbr.rel (0) target = $region21
  $region20: #{vq_vae_forward.16} parent=0 // pred_region
    _
  $region21: #{vq_vae_forward.16} parent=0 // pred_fallthru
    _
  // Predicated region
  $region22: #{vq_vae_forward.16} parent=0 // pred_check
    _
  $region23: #{vq_vae_forward.16} parent=0 // pred_check_branch
    %22 = sbr.rel (0) target = $region25
  $region24: #{vq_vae_forward.16} parent=0 // pred_region
    _
  $region25: #{vq_vae_forward.16} parent=0 // pred_fallthru
    _
  %v24 = vld [vmem:[%s0] sm:$0xf]
  %v25 = vld [vmem:[%s0 + $0x4] sm:$0xf]
  %v26 = vld [vmem:[%s0 + $0x8] sm:$0xf]
  %v27 = vld [vmem:[%s0 + $0xc] sm:$0xf]
  %v28 = vmax.bf16 %v24, 0
  %v29 = vmax.bf16 %v25, 0
  %v30 = vmax.bf16 %v26, 0
  %v31 = vmax.bf16 %v27, 0
  %v32 = vld [vmem:[%s1] sm:$0xf]
  %v33 = vld [vmem:[%s1 + $0x4] sm:$0xf]
  %v34 = vld [vmem:[%s1 + $0x8] sm:$0xf]
  %v35 = vld [vmem:[%s1 + $0xc] sm:$0xf]
  %v36 = vld [vmem:[%s1 + $0x10] sm:$0xf]
  %v37 = vld [vmem:[%s1 + $0x14] sm:$0xf]
  %v38 = vld [vmem:[%s1 + $0x18] sm:$0xf]
  %v39 = vld [vmem:[%s1 + $0x1c] sm:$0xf]
  %v40 = vld [vmem:[%s1 + $0x20] sm:$0xf]
  %v41 = vld [vmem:[%s1 + $0x24] sm:$0xf]
  %v42 = vld [vmem:[%s1 + $0x28] sm:$0xf]
  %v43 = vld [vmem:[%s1 + $0x2c] sm:$0xf]
  %v44 = vld [vmem:[%s1 + $0x30] sm:$0xf]
  %v45 = vld [vmem:[%s1 + $0x34] sm:$0xf]
  %v46 = vld [vmem:[%s1 + $0x38] sm:$0xf]
  %v47 = vld [vmem:[%s1 + $0x3c] sm:$0xf]
  %v48 = vld [vmem:[%s2] sm:$0x1]
  %v50 = vlaneseq
  %v51 = vshrl.u32 %v50, 7
  %v52 = vsub.s32 0, %v51
  %v53 = vrot.slane %v48, %v52
  %v59 = vunpack.c.l.b16 %v28
  %v60 = vunpack.c.l.b16 %v29
  %v61 = vunpack.c.l.b16 %v30
  %v62 = vunpack.c.l.b16 %v31
  %v63 = vpack.c.b16 %v60, %v59
  %v64 = vpack.c.b16 %v62, %v61
  %v83 = vunpack.c.l.b16 %v32
  %v84 = vunpack.c.l.b16 %v33
  %v85 = vunpack.c.l.b16 %v34
  %v86 = vunpack.c.l.b16 %v35
  %v87 = vunpack.c.l.b16 %v36
  %v88 = vunpack.c.l.b16 %v37
  %v89 = vunpack.c.l.b16 %v38
  %v90 = vunpack.c.l.b16 %v39
  %v91 = vunpack.c.l.b16 %v40
  %v92 = vunpack.c.l.b16 %v41
  %v93 = vunpack.c.l.b16 %v42
  %v94 = vunpack.c.l.b16 %v43
  %v95 = vunpack.c.l.b16 %v44
  %v96 = vunpack.c.l.b16 %v45
  %v97 = vunpack.c.l.b16 %v46
  %v98 = vunpack.c.l.b16 %v47
  %v99 = vpack.c.b16 %v84, %v83
  %v100 = vpack.c.b16 %v86, %v85
  %v101 = vpack.c.b16 %v88, %v87
  %v102 = vpack.c.b16 %v90, %v89
  %v103 = vpack.c.b16 %v92, %v91
  %v104 = vpack.c.b16 %v94, %v93
  %v105 = vpack.c.b16 %v96, %v95
  %v106 = vpack.c.b16 %v98, %v97
  %115 = vmatprep.subr.bf16.mxu0 0
  %116 = vmatpush1.bf16.msra.mxu0 %v99
  %117 = vmatprep.subr.bf16.mxu0 0
  %118 = vmatpush1.bf16.msra.mxu0 %v100
  %119 = vmatprep.subr.bf16.mxu0 0
  %120 = vmatpush1.bf16.msra.mxu0 %v101
  %121 = vmatprep.subr.bf16.mxu0 0
  %122 = vmatpush1.bf16.msra.mxu0 %v102
  %123 = vmatprep.subr.bf16.mxu0 0
  %124 = vmatpush1.bf16.msra.mxu0 %v103
  %125 = vmatprep.subr.bf16.mxu0 0
  %126 = vmatpush1.bf16.msra.mxu0 %v104
  %127 = vmatprep.subr.bf16.mxu0 0
  %128 = vmatpush1.bf16.msra.mxu0 %v105
  %129 = vmatprep.subr.bf16.mxu0 0
  %130 = vmatpush1.bf16.msra.mxu0 %v106
  %131 = vmatprep.subr.bf16.mxu0 0
  %132 = vmatpush1.bf16.msra.mxu0 0
  %133 = vmatprep.subr.bf16.mxu0 0
  %134 = vmatpush1.bf16.msra.mxu0 0
  %135 = vmatprep.subr.bf16.mxu0 0
  %136 = vmatpush1.bf16.msra.mxu0 0
  %137 = vmatprep.subr.bf16.mxu0 0
  %138 = vmatpush1.bf16.msra.mxu0 0
  %139 = vmatprep.subr.bf16.mxu0 0
  %140 = vmatpush1.bf16.msra.mxu0 0
  %141 = vmatprep.subr.bf16.mxu0 0
  %142 = vmatpush1.bf16.msra.mxu0 0
  %143 = vmatprep.subr.bf16.mxu0 0
  %144 = vmatpush1.bf16.msra.mxu0 0
  %145 = vmatprep.subr.bf16.mxu0 0
  %146 = vmatpush1.bf16.msra.mxu0 0
  %147 = vmatprep.mubr.bf16.mxu0 0
  %148 = vmatmul.mubr.bf16.gmra.mrb[0].mxu0 %v63
  %v149 = vpop.f32.mrb[0].mxu0
  %v150 = vadd.f32 %v53, %v149
  %v151 = vpop.f32.mrb[0].mxu0
  %v152 = vpop.f32.mrb[0].mxu0
  %v153 = vadd.f32 %v53, %v152
  %v154 = vpop.f32.mrb[0].mxu0
  %155 = vmatprep.mubr.bf16.mxu0 0
  %156 = vmatmul.mubr.bf16.gmra.mrb[0].mxu0 %v64
  %v157 = vpop.f32.mrb[0].mxu0
  %v158 = vadd.f32 %v53, %v157
  %v159 = vpop.f32.mrb[0].mxu0
  %v160 = vpop.f32.mrb[0].mxu0
  %v161 = vadd.f32 %v53, %v160
  %v162 = vpop.f32.mrb[0].mxu0
  %163 = vdwg.mxu0
  %v164 = vmax.f32 %v150, 0.0
  %v165 = vmax.f32 %v153, 0.0
  %v166 = vmax.f32 %v158, 0.0
  %v167 = vmax.f32 %v161, 0.0
  %v168 = vpack.c.bf16 %v165, %v164
  %v169 = vpack.c.bf16 %v167, %v166
  %v170 = vld [vmem:[%s3] sm:$0xf]
  %v171 = vld [vmem:[%s3 + $0x4] sm:$0xf]
  %v172 = vld [vmem:[%s3 + $0x8] sm:$0xf]
  %v173 = vld [vmem:[%s3 + $0xc] sm:$0xf]
  %v174 = vld [vmem:[%s3 + $0x10] sm:$0xf]
  %v175 = vld [vmem:[%s3 + $0x14] sm:$0xf]
  %v176 = vld [vmem:[%s3 + $0x18] sm:$0xf]
  %v177 = vld [vmem:[%s3 + $0x1c] sm:$0xf]
  %v178 = vld [vmem:[%s3 + $0x20] sm:$0xf]
  %v179 = vld [vmem:[%s3 + $0x24] sm:$0xf]
  %v180 = vld [vmem:[%s3 + $0x28] sm:$0xf]
  %v181 = vld [vmem:[%s3 + $0x2c] sm:$0xf]
  %v182 = vld [vmem:[%s3 + $0x30] sm:$0xf]
  %v183 = vld [vmem:[%s3 + $0x34] sm:$0xf]
  %v184 = vld [vmem:[%s3 + $0x38] sm:$0xf]
  %v185 = vld [vmem:[%s3 + $0x3c] sm:$0xf]
  %v186 = vld [vmem:[%s4] sm:$0x1]
  %v188 = vlaneseq
  %v189 = vshrl.u32 %v188, 7
  %v190 = vsub.s32 0, %v189
  %v191 = vrot.slane %v186, %v190
  %v209 = vunpack.c.l.b16 %v170
  %v210 = vunpack.c.l.b16 %v171
  %v211 = vunpack.c.l.b16 %v172
  %v212 = vunpack.c.l.b16 %v173
  %v213 = vunpack.c.l.b16 %v174
  %v214 = vunpack.c.l.b16 %v175
  %v215 = vunpack.c.l.b16 %v176
  %v216 = vunpack.c.l.b16 %v177
  %v217 = vunpack.c.l.b16 %v178
  %v218 = vunpack.c.l.b16 %v179
  %v219 = vunpack.c.l.b16 %v180
  %v220 = vunpack.c.l.b16 %v181
  %v221 = vunpack.c.l.b16 %v182
  %v222 = vunpack.c.l.b16 %v183
  %v223 = vunpack.c.l.b16 %v184
  %v224 = vunpack.c.l.b16 %v185
  %v225 = vpack.c.b16 %v210, %v209
  %v226 = vpack.c.b16 %v212, %v211
  %v227 = vpack.c.b16 %v214, %v213
  %v228 = vpack.c.b16 %v216, %v215
  %v229 = vpack.c.b16 %v218, %v217
  %v230 = vpack.c.b16 %v220, %v219
  %v231 = vpack.c.b16 %v222, %v221
  %v232 = vpack.c.b16 %v224, %v223
  %241 = vmatprep.subr.bf16.mxu0 0
  %242 = vmatpush1.bf16.msra.mxu0 %v225
  %243 = vmatprep.subr.bf16.mxu0 0
  %244 = vmatpush1.bf16.msra.mxu0 %v226
  %245 = vmatprep.subr.bf16.mxu0 0
  %246 = vmatpush1.bf16.msra.mxu0 %v227
  %247 = vmatprep.subr.bf16.mxu0 0
  %248 = vmatpush1.bf16.msra.mxu0 %v228
  %249 = vmatprep.subr.bf16.mxu0 0
  %250 = vmatpush1.bf16.msra.mxu0 %v229
  %251 = vmatprep.subr.bf16.mxu0 0
  %252 = vmatpush1.bf16.msra.mxu0 %v230
  %253 = vmatprep.subr.bf16.mxu0 0
  %254 = vmatpush1.bf16.msra.mxu0 %v231
  %255 = vmatprep.subr.bf16.mxu0 0
  %256 = vmatpush1.bf16.msra.mxu0 %v232
  %257 = vmatprep.subr.bf16.mxu0 0
  %258 = vmatpush1.bf16.msra.mxu0 0
  %259 = vmatprep.subr.bf16.mxu0 0
  %260 = vmatpush1.bf16.msra.mxu0 0
  %261 = vmatprep.subr.bf16.mxu0 0
  %262 = vmatpush1.bf16.msra.mxu0 0
  %263 = vmatprep.subr.bf16.mxu0 0
  %264 = vmatpush1.bf16.msra.mxu0 0
  %265 = vmatprep.subr.bf16.mxu0 0
  %266 = vmatpush1.bf16.msra.mxu0 0
  %267 = vmatprep.subr.bf16.mxu0 0
  %268 = vmatpush1.bf16.msra.mxu0 0
  %269 = vmatprep.subr.bf16.mxu0 0
  %270 = vmatpush1.bf16.msra.mxu0 0
  %271 = vmatprep.subr.bf16.mxu0 0
  %272 = vmatpush1.bf16.msra.mxu0 0
  %273 = vmatprep.mubr.bf16.mxu0 0
  %274 = vmatmul.mubr.bf16.gmra.mrb[0].mxu0 %v168
  %v275 = vpop.f32.mrb[0].mxu0
  %v276 = vadd.f32 %v191, %v275
  %v277 = vpop.f32.mrb[0].mxu0
  %v278 = vpop.f32.mrb[0].mxu0
  %v279 = vadd.f32 %v191, %v278
  %v280 = vpop.f32.mrb[0].mxu0
  %281 = vmatprep.mubr.bf16.mxu0 0
  %282 = vmatmul.mubr.bf16.gmra.mrb[0].mxu0 %v169
  %v283 = vpop.f32.mrb[0].mxu0
  %v284 = vadd.f32 %v191, %v283
  %v285 = vpop.f32.mrb[0].mxu0
  %v286 = vpop.f32.mrb[0].mxu0
  %v287 = vadd.f32 %v191, %v286
  %v288 = vpop.f32.mrb[0].mxu0
  %289 = vdwg.mxu0
  %v290 = vld [vmem:[%s5] sm:$0xff]
  %v291 = vld [vmem:[%s5 + $0x8] sm:$0xff]
  %v292 = vld [vmem:[%s5 + $0x10] sm:$0xff]
  %v293 = vld [vmem:[%s5 + $0x18] sm:$0xff]
  %v294 = vadd.f32 %v276, %v290
  %v295 = vadd.f32 %v279, %v291
  %v296 = vadd.f32 %v284, %v292
  %v297 = vadd.f32 %v287, %v293
  %v298 = vpack.c.bf16 %v295, %v294
  %v299 = vpack.c.bf16 %v297, %v296
  %v302 = vunpack.c.l.b16 %v298
  %v303 = vunpack.c.h.b16 %v298
  %v304 = vunpack.c.l.b16 %v299
  %v305 = vunpack.c.h.b16 %v299
  %v306 = vpack.c.b16 %v302, %v302
  %v307 = vpack.c.b16 %v303, %v303
  %v308 = vpack.c.b16 %v304, %v304
  %v309 = vpack.c.b16 %v305, %v305
  %314 = vst [vmem:[%s6] sm:$0xf] %v306
  %315 = vst [vmem:[%s6 + $0x4] sm:$0xf] %v307
  %316 = vst [vmem:[%s6 + $0x8] sm:$0xf] %v308
  %317 = vst [vmem:[%s6 + $0xc] sm:$0xf] %v309
  // Predicated region
  $region26: #{vq_vae_forward.16} parent=0 // pred_check
    _
  $region27: #{vq_vae_forward.16} parent=0 // pred_check_branch
    %319 = sbr.rel (0) target = $region29
  $region28: #{vq_vae_forward.16} parent=0 // pred_region
    _
  $region29: #{vq_vae_forward.16} parent=0 // pred_fallthru
    _
  // Predicated region
  $region30: #{vq_vae_forward.16} parent=0 // pred_check
    _
  $region31: #{vq_vae_forward.16} parent=0 // pred_check_branch
    %321 = sbr.rel (0) target = $region33
  $region32: #{vq_vae_forward.16} parent=0 // pred_region
    _
  $region33: #{vq_vae_forward.16} parent=0 // pred_fallthru
    _

// kernel: vq_vae_forward.17
$region0: #{vq_vae_forward.17}
  #allocation0 [shape = 'u32[]', space=smem, size = 0x4, offset = 0x4, fixed_abs, tag = 'smem constant byte address 0x4 - core index']
  #allocation1 [shape = 'u32[144,128]{1,0:T(1,128)}', space=vmem, size = 0x12000, scoped, tag = 'internal scratch']
  %s0 = inlined_call_operand.vmem [shape: bf16[32,128], index: 0, kind: input, shape index: {}]
  %s1 = inlined_call_operand.vmem [shape: bf16[128,128], index: 1, kind: input, shape index: {}]
  %s2 = inlined_call_operand.vmem [shape: f32[1,128], index: 2, kind: input, shape index: {}]
  %s3 = inlined_call_operand.vmem [shape: bf16[128,128], index: 3, kind: input, shape index: {}]
  %s4 = inlined_call_operand.vmem [shape: f32[1,128], index: 4, kind: input, shape index: {}]
  %s5 = inlined_call_operand.vmem [shape: bf16[32,128], index: 5, kind: input, shape index: {}]
  %s6 = inlined_call_operand.vmem [shape: bf16[32,128], index: 6, kind: output, shape index: {}]
  %s7 = sld [smem:[#allocation0]]
  $region34: #{vq_vae_forward.17} parent=0
    _
  %s9 = ssub.s32 1, %s7
  %s10 = scalar_select 0, %s9, %s7
  // Predicated region
  $region2: #{vq_vae_forward.17} parent=0 // pred_check
    _
  $region3: #{vq_vae_forward.17} parent=0 // pred_check_branch
    %12 = sbr.rel (0) target = $region5
  $region4: #{vq_vae_forward.17} parent=0 // pred_region
    _
  $region5: #{vq_vae_forward.17} parent=0 // pred_fallthru
    _
  // Predicated region
  $region6: #{vq_vae_forward.17} parent=0 // pred_check
    _
  $region7: #{vq_vae_forward.17} parent=0 // pred_check_branch
    %14 = sbr.rel (0) target = $region9
  $region8: #{vq_vae_forward.17} parent=0 // pred_region
    _
  $region9: #{vq_vae_forward.17} parent=0 // pred_fallthru
    _
  // Predicated region
  $region10: #{vq_vae_forward.17} parent=0 // pred_check
    _
  $region11: #{vq_vae_forward.17} parent=0 // pred_check_branch
    %16 = sbr.rel (0) target = $region13
  $region12: #{vq_vae_forward.17} parent=0 // pred_region
    _
  $region13: #{vq_vae_forward.17} parent=0 // pred_fallthru
    _
  // Predicated region
  $region14: #{vq_vae_forward.17} parent=0 // pred_check
    _
  $region15: #{vq_vae_forward.17} parent=0 // pred_check_branch
    %18 = sbr.rel (0) target = $region17
  $region16: #{vq_vae_forward.17} parent=0 // pred_region
    _
  $region17: #{vq_vae_forward.17} parent=0 // pred_fallthru
    _
  // Predicated region
  $region18: #{vq_vae_forward.17} parent=0 // pred_check
    _
  $region19: #{vq_vae_forward.17} parent=0 // pred_check_branch
    %20 = sbr.rel (0) target = $region21
  $region20: #{vq_vae_forward.17} parent=0 // pred_region
    _
  $region21: #{vq_vae_forward.17} parent=0 // pred_fallthru
    _
  // Predicated region
  $region22: #{vq_vae_forward.17} parent=0 // pred_check
    _
  $region23: #{vq_vae_forward.17} parent=0 // pred_check_branch
    %22 = sbr.rel (0) target = $region25
  $region24: #{vq_vae_forward.17} parent=0 // pred_region
    _
  $region25: #{vq_vae_forward.17} parent=0 // pred_fallthru
    _
  %v24 = vld [vmem:[%s0] sm:$0xf]
  %v25 = vld [vmem:[%s0 + $0x4] sm:$0xf]
  %v26 = vld [vmem:[%s0 + $0x8] sm:$0xf]
  %v27 = vld [vmem:[%s0 + $0xc] sm:$0xf]
  %v28 = vmax.bf16 %v24, 0
  %v29 = vmax.bf16 %v25, 0
  %v30 = vmax.bf16 %v26, 0
  %v31 = vmax.bf16 %v27, 0
  %v32 = vld [vmem:[%s1] sm:$0xf]
  %v33 = vld [vmem:[%s1 + $0x4] sm:$0xf]
  %v34 = vld [vmem:[%s1 + $0x8] sm:$0xf]
  %v35 = vld [vmem:[%s1 + $0xc] sm:$0xf]
  %v36 = vld [vmem:[%s1 + $0x10] sm:$0xf]
  %v37 = vld [vmem:[%s1 + $0x14] sm:$0xf]
  %v38 = vld [vmem:[%s1 + $0x18] sm:$0xf]
  %v39 = vld [vmem:[%s1 + $0x1c] sm:$0xf]
  %v40 = vld [vmem:[%s1 + $0x20] sm:$0xf]
  %v41 = vld [vmem:[%s1 + $0x24] sm:$0xf]
  %v42 = vld [vmem:[%s1 + $0x28] sm:$0xf]
  %v43 = vld [vmem:[%s1 + $0x2c] sm:$0xf]
  %v44 = vld [vmem:[%s1 + $0x30] sm:$0xf]
  %v45 = vld [vmem:[%s1 + $0x34] sm:$0xf]
  %v46 = vld [vmem:[%s1 + $0x38] sm:$0xf]
  %v47 = vld [vmem:[%s1 + $0x3c] sm:$0xf]
  %v48 = vld [vmem:[%s2] sm:$0x1]
  %v50 = vlaneseq
  %v51 = vshrl.u32 %v50, 7
  %v52 = vsub.s32 0, %v51
  %v53 = vrot.slane %v48, %v52
  %v59 = vunpack.c.l.b16 %v28
  %v60 = vunpack.c.l.b16 %v29
  %v61 = vunpack.c.l.b16 %v30
  %v62 = vunpack.c.l.b16 %v31
  %v63 = vpack.c.b16 %v60, %v59
  %v64 = vpack.c.b16 %v62, %v61
  %v83 = vunpack.c.l.b16 %v32
  %v84 = vunpack.c.l.b16 %v33
  %v85 = vunpack.c.l.b16 %v34
  %v86 = vunpack.c.l.b16 %v35
  %v87 = vunpack.c.l.b16 %v36
  %v88 = vunpack.c.l.b16 %v37
  %v89 = vunpack.c.l.b16 %v38
  %v90 = vunpack.c.l.b16 %v39
  %v91 = vunpack.c.l.b16 %v40
  %v92 = vunpack.c.l.b16 %v41
  %v93 = vunpack.c.l.b16 %v42
  %v94 = vunpack.c.l.b16 %v43
  %v95 = vunpack.c.l.b16 %v44
  %v96 = vunpack.c.l.b16 %v45
  %v97 = vunpack.c.l.b16 %v46
  %v98 = vunpack.c.l.b16 %v47
  %v99 = vpack.c.b16 %v84, %v83
  %v100 = vpack.c.b16 %v86, %v85
  %v101 = vpack.c.b16 %v88, %v87
  %v102 = vpack.c.b16 %v90, %v89
  %v103 = vpack.c.b16 %v92, %v91
  %v104 = vpack.c.b16 %v94, %v93
  %v105 = vpack.c.b16 %v96, %v95
  %v106 = vpack.c.b16 %v98, %v97
  %115 = vmatprep.subr.bf16.mxu0 0
  %116 = vmatpush1.bf16.msra.mxu0 %v99
  %117 = vmatprep.subr.bf16.mxu0 0
  %118 = vmatpush1.bf16.msra.mxu0 %v100
  %119 = vmatprep.subr.bf16.mxu0 0
  %120 = vmatpush1.bf16.msra.mxu0 %v101
  %121 = vmatprep.subr.bf16.mxu0 0
  %122 = vmatpush1.bf16.msra.mxu0 %v102
  %123 = vmatprep.subr.bf16.mxu0 0
  %124 = vmatpush1.bf16.msra.mxu0 %v103
  %125 = vmatprep.subr.bf16.mxu0 0
  %126 = vmatpush1.bf16.msra.mxu0 %v104
  %127 = vmatprep.subr.bf16.mxu0 0
  %128 = vmatpush1.bf16.msra.mxu0 %v105
  %129 = vmatprep.subr.bf16.mxu0 0
  %130 = vmatpush1.bf16.msra.mxu0 %v106
  %131 = vmatprep.subr.bf16.mxu0 0
  %132 = vmatpush1.bf16.msra.mxu0 0
  %133 = vmatprep.subr.bf16.mxu0 0
  %134 = vmatpush1.bf16.msra.mxu0 0
  %135 = vmatprep.subr.bf16.mxu0 0
  %136 = vmatpush1.bf16.msra.mxu0 0
  %137 = vmatprep.subr.bf16.mxu0 0
  %138 = vmatpush1.bf16.msra.mxu0 0
  %139 = vmatprep.subr.bf16.mxu0 0
  %140 = vmatpush1.bf16.msra.mxu0 0
  %141 = vmatprep.subr.bf16.mxu0 0
  %142 = vmatpush1.bf16.msra.mxu0 0
  %143 = vmatprep.subr.bf16.mxu0 0
  %144 = vmatpush1.bf16.msra.mxu0 0
  %145 = vmatprep.subr.bf16.mxu0 0
  %146 = vmatpush1.bf16.msra.mxu0 0
  %147 = vmatprep.mubr.bf16.mxu0 0
  %148 = vmatmul.mubr.bf16.gmra.mrb[0].mxu0 %v63
  %v149 = vpop.f32.mrb[0].mxu0
  %v150 = vadd.f32 %v53, %v149
  %v151 = vpop.f32.mrb[0].mxu0
  %v152 = vpop.f32.mrb[0].mxu0
  %v153 = vadd.f32 %v53, %v152
  %v154 = vpop.f32.mrb[0].mxu0
  %155 = vmatprep.mubr.bf16.mxu0 0
  %156 = vmatmul.mubr.bf16.gmra.mrb[0].mxu0 %v64
  %v157 = vpop.f32.mrb[0].mxu0
  %v158 = vadd.f32 %v53, %v157
  %v159 = vpop.f32.mrb[0].mxu0
  %v160 = vpop.f32.mrb[0].mxu0
  %v161 = vadd.f32 %v53, %v160
  %v162 = vpop.f32.mrb[0].mxu0
  %163 = vdwg.mxu0
  %v164 = vmax.f32 %v150, 0.0
  %v165 = vmax.f32 %v153, 0.0
  %v166 = vmax.f32 %v158, 0.0
  %v167 = vmax.f32 %v161, 0.0
  %v168 = vpack.c.bf16 %v165, %v164
  %v169 = vpack.c.bf16 %v167, %v166
  %v170 = vld [vmem:[%s3] sm:$0xf]
  %v171 = vld [vmem:[%s3 + $0x4] sm:$0xf]
  %v172 = vld [vmem:[%s3 + $0x8] sm:$0xf]
  %v173 = vld [vmem:[%s3 + $0xc] sm:$0xf]
  %v174 = vld [vmem:[%s3 + $0x10] sm:$0xf]
  %v175 = vld [vmem:[%s3 + $0x14] sm:$0xf]
  %v176 = vld [vmem:[%s3 + $0x18] sm:$0xf]
  %v177 = vld [vmem:[%s3 + $0x1c] sm:$0xf]
  %v178 = vld [vmem:[%s3 + $0x20] sm:$0xf]
  %v179 = vld [vmem:[%s3 + $0x24] sm:$0xf]
  %v180 = vld [vmem:[%s3 + $0x28] sm:$0xf]
  %v181 = vld [vmem:[%s3 + $0x2c] sm:$0xf]
  %v182 = vld [vmem:[%s3 + $0x30] sm:$0xf]
  %v183 = vld [vmem:[%s3 + $0x34] sm:$0xf]
  %v184 = vld [vmem:[%s3 + $0x38] sm:$0xf]
  %v185 = vld [vmem:[%s3 + $0x3c] sm:$0xf]
  %v186 = vld [vmem:[%s4] sm:$0x1]
  %v188 = vlaneseq
  %v189 = vshrl.u32 %v188, 7
  %v190 = vsub.s32 0, %v189
  %v191 = vrot.slane %v186, %v190
  %v209 = vunpack.c.l.b16 %v170
  %v210 = vunpack.c.l.b16 %v171
  %v211 = vunpack.c.l.b16 %v172
  %v212 = vunpack.c.l.b16 %v173
  %v213 = vunpack.c.l.b16 %v174
  %v214 = vunpack.c.l.b16 %v175
  %v215 = vunpack.c.l.b16 %v176
  %v216 = vunpack.c.l.b16 %v177
  %v217 = vunpack.c.l.b16 %v178
  %v218 = vunpack.c.l.b16 %v179
  %v219 = vunpack.c.l.b16 %v180
  %v220 = vunpack.c.l.b16 %v181
  %v221 = vunpack.c.l.b16 %v182
  %v222 = vunpack.c.l.b16 %v183
  %v223 = vunpack.c.l.b16 %v184
  %v224 = vunpack.c.l.b16 %v185
  %v225 = vpack.c.b16 %v210, %v209
  %v226 = vpack.c.b16 %v212, %v211
  %v227 = vpack.c.b16 %v214, %v213
  %v228 = vpack.c.b16 %v216, %v215
  %v229 = vpack.c.b16 %v218, %v217
  %v230 = vpack.c.b16 %v220, %v219
  %v231 = vpack.c.b16 %v222, %v221
  %v232 = vpack.c.b16 %v224, %v223
  %241 = vmatprep.subr.bf16.mxu0 0
  %242 = vmatpush1.bf16.msra.mxu0 %v225
  %243 = vmatprep.subr.bf16.mxu0 0
  %244 = vmatpush1.bf16.msra.mxu0 %v226
  %245 = vmatprep.subr.bf16.mxu0 0
  %246 = vmatpush1.bf16.msra.mxu0 %v227
  %247 = vmatprep.subr.bf16.mxu0 0
  %248 = vmatpush1.bf16.msra.mxu0 %v228
  %249 = vmatprep.subr.bf16.mxu0 0
  %250 = vmatpush1.bf16.msra.mxu0 %v229
  %251 = vmatprep.subr.bf16.mxu0 0
  %252 = vmatpush1.bf16.msra.mxu0 %v230
  %253 = vmatprep.subr.bf16.mxu0 0
  %254 = vmatpush1.bf16.msra.mxu0 %v231
  %255 = vmatprep.subr.bf16.mxu0 0
  %256 = vmatpush1.bf16.msra.mxu0 %v232
  %257 = vmatprep.subr.bf16.mxu0 0
  %258 = vmatpush1.bf16.msra.mxu0 0
  %259 = vmatprep.subr.bf16.mxu0 0
  %260 = vmatpush1.bf16.msra.mxu0 0
  %261 = vmatprep.subr.bf16.mxu0 0
  %262 = vmatpush1.bf16.msra.mxu0 0
  %263 = vmatprep.subr.bf16.mxu0 0
  %264 = vmatpush1.bf16.msra.mxu0 0
  %265 = vmatprep.subr.bf16.mxu0 0
  %266 = vmatpush1.bf16.msra.mxu0 0
  %267 = vmatprep.subr.bf16.mxu0 0
  %268 = vmatpush1.bf16.msra.mxu0 0
  %269 = vmatprep.subr.bf16.mxu0 0
  %270 = vmatpush1.bf16.msra.mxu0 0
  %271 = vmatprep.subr.bf16.mxu0 0
  %272 = vmatpush1.bf16.msra.mxu0 0
  %273 = vmatprep.mubr.bf16.mxu0 0
  %274 = vmatmul.mubr.bf16.gmra.mrb[0].mxu0 %v168
  %v275 = vpop.f32.mrb[0].mxu0
  %v276 = vadd.f32 %v191, %v275
  %v277 = vpop.f32.mrb[0].mxu0
  %v278 = vpop.f32.mrb[0].mxu0
  %v279 = vadd.f32 %v191, %v278
  %v280 = vpop.f32.mrb[0].mxu0
  %281 = vmatprep.mubr.bf16.mxu0 0
  %282 = vmatmul.mubr.bf16.gmra.mrb[0].mxu0 %v169
  %v283 = vpop.f32.mrb[0].mxu0
  %v284 = vadd.f32 %v191, %v283
  %v285 = vpop.f32.mrb[0].mxu0
  %v286 = vpop.f32.mrb[0].mxu0
  %v287 = vadd.f32 %v191, %v286
  %v288 = vpop.f32.mrb[0].mxu0
  %289 = vdwg.mxu0
  %v290 = vld [vmem:[%s5] sm:$0xf]
  %v291 = vld [vmem:[%s5 + $0x4] sm:$0xf]
  %v292 = vld [vmem:[%s5 + $0x8] sm:$0xf]
  %v293 = vld [vmem:[%s5 + $0xc] sm:$0xf]
  %v294 = vunpack.c.l.bf16 %v290
  %v295 = vunpack.c.l.bf16 %v291
  %v296 = vunpack.c.l.bf16 %v292
  %v297 = vunpack.c.l.bf16 %v293
  %v298 = vadd.f32 %v276, %v294
  %v299 = vadd.f32 %v279, %v295
  %v300 = vadd.f32 %v284, %v296
  %v301 = vadd.f32 %v287, %v297
  %v302 = vpack.c.bf16 %v299, %v298
  %v303 = vpack.c.bf16 %v301, %v300
  %v306 = vunpack.c.l.b16 %v302
  %v307 = vunpack.c.h.b16 %v302
  %v308 = vunpack.c.l.b16 %v303
  %v309 = vunpack.c.h.b16 %v303
  %v310 = vpack.c.b16 %v306, %v306
  %v311 = vpack.c.b16 %v307, %v307
  %v312 = vpack.c.b16 %v308, %v308
  %v313 = vpack.c.b16 %v309, %v309
  %318 = vst [vmem:[%s6] sm:$0xf] %v310
  %319 = vst [vmem:[%s6 + $0x4] sm:$0xf] %v311
  %320 = vst [vmem:[%s6 + $0x8] sm:$0xf] %v312
  %321 = vst [vmem:[%s6 + $0xc] sm:$0xf] %v313
  // Predicated region
  $region26: #{vq_vae_forward.17} parent=0 // pred_check
    _
  $region27: #{vq_vae_forward.17} parent=0 // pred_check_branch
    %323 = sbr.rel (0) target = $region29
  $region28: #{vq_vae_forward.17} parent=0 // pred_region
    _
  $region29: #{vq_vae_forward.17} parent=0 // pred_fallthru
    _
  // Predicated region
  $region30: #{vq_vae_forward.17} parent=0 // pred_check
    _
  $region31: #{vq_vae_forward.17} parent=0 // pred_check_branch
    %325 = sbr.rel (0) target = $region33
  $region32: #{vq_vae_forward.17} parent=0 // pred_region
    _
  $region33: #{vq_vae_forward.17} parent=0 // pred_fallthru
    _

// kernel: tile.13
$region0: #{tile.13}
  #allocation0 [shape = 's32[1]{0}', space=sflag, size = 0x4, scoped, tag = 'scoped memory for tile.13']
  %s0 = inlined_call_operand.vmem [shape: f32[16], index: 0, kind: input, shape index: {}]
  %s1 = inlined_call_operand.vmem [shape: f32[4,16], index: 1, kind: output, shape index: {}]
  // Predicated region
  $region2: #{tile.13} parent=0 // pred_check
    _
  $region3: #{tile.13} parent=0 // pred_check_branch
    %3 = sbr.rel (0) target = $region5
  $region4: #{tile.13} parent=0 // pred_region
    _
  $region5: #{tile.13} parent=0 // pred_fallthru
    _
  %v4 = vld [vmem:[%s0] ss:$0 sm:$0xff]
  %5 = vst [vmem:[%s1] sm:$0xf] %v4

// kernel: tile.14
$region0: #{tile.14}
  %s0 = inlined_call_operand.vmem [shape: f32[4,16], index: 0, kind: input, shape index: {}]
  %s1 = inlined_call_operand.vmem [shape: f32[64], index: 1, kind: output, shape index: {}]
  $region1: #{tile.14} parent=0
    #allocation0 [shape = 'u8[4096]{0}', space=vmem, size = 0x1000, scoped, tag = 'scoped mem for output reshape']
    #allocation1 [shape = 'u8[4096]{0}', space=vmem, size = 0x1000, scoped, tag = 'scoped mem for input reshape']
    %s3 = sshllo.u32 0, 4
    %v4 = vld [vmem:[%s0] sm:%s3]
    %5 = vst [vmem:[#allocation1] sm:%s3] %v4
    %v6 = vld [vmem:[#allocation1] sm:$0x1]
    %vm7 = vcmask 130048
    %8 = vst.msk [vmem:[#allocation0] sm:$0x1] %vm7, %v6
    %s9 = scalar_lea.vmem [#allocation1], 3
    %v10 = vld [vmem:[%s9] sm:$0x1]
    %11 = vrot.lane.b32.xlu0 %v10, 48
    %v12 = vpop.permute.xlu0 %11
    %vm13 = vcmask 523648
    %14 = vst.msk [vmem:[#allocation0] sm:$0x1] %vm13, %v12
    %s15 = scalar_lea.vmem [#allocation1], 2
    %v16 = vld [vmem:[%s15] sm:$0x1]
    %17 = vrot.lane.b32.xlu0 %v16, 32
    %v18 = vpop.permute.xlu0 %17
    %vm19 = vcmask 392448
    %20 = vst.msk [vmem:[#allocation0] sm:$0x1] %vm19, %v18
    %s21 = scalar_lea.vmem [#allocation1], 1
    %v22 = vld [vmem:[%s21] sm:$0x1]
    %23 = vrot.lane.b32.xlu0 %v22, 16
    %v24 = vpop.permute.xlu0 %23
    %vm25 = vcmask 261248
    %26 = vst.msk [vmem:[#allocation0] sm:$0x1] %vm25, %v24
    %s28 = sshllo.u32 0, 1
    %v30 = vld [vmem:[#allocation0] sm:%s28]
    %s31 = sshllo.u32 0, 1
    %32 = vst [vmem:[%s1] sm:%s31] %v30

// kernel: vq_vae_forward.18
$region0: #{vq_vae_forward.18}
  #allocation0 [shape = 'u32[]', space=smem, size = 0x4, offset = 0x4, fixed_abs, tag = 'smem constant byte address 0x4 - core index']
  #allocation1 [shape = 'u32[144,128]{1,0:T(1,128)}', space=vmem, size = 0x12000, scoped, tag = 'internal scratch']
  %s0 = inlined_call_operand.vmem [shape: bf16[32,128], index: 0, kind: input, shape index: {}]
  %s1 = inlined_call_operand.vmem [shape: bf16[128,128], index: 1, kind: input, shape index: {}]
  %s2 = inlined_call_operand.vmem [shape: f32[1,128], index: 2, kind: input, shape index: {}]
  %s3 = inlined_call_operand.vmem [shape: bf16[32,128], index: 3, kind: output, shape index: {}]
  %s4 = sld [smem:[#allocation0]]
  $region22: #{vq_vae_forward.18} parent=0
    _
  %s6 = ssub.s32 1, %s4
  %s7 = scalar_select 0, %s6, %s4
  // Predicated region
  $region2: #{vq_vae_forward.18} parent=0 // pred_check
    _
  $region3: #{vq_vae_forward.18} parent=0 // pred_check_branch
    %9 = sbr.rel (0) target = $region5
  $region4: #{vq_vae_forward.18} parent=0 // pred_region
    _
  $region5: #{vq_vae_forward.18} parent=0 // pred_fallthru
    _
  // Predicated region
  $region6: #{vq_vae_forward.18} parent=0 // pred_check
    _
  $region7: #{vq_vae_forward.18} parent=0 // pred_check_branch
    %11 = sbr.rel (0) target = $region9
  $region8: #{vq_vae_forward.18} parent=0 // pred_region
    _
  $region9: #{vq_vae_forward.18} parent=0 // pred_fallthru
    _
  // Predicated region
  $region10: #{vq_vae_forward.18} parent=0 // pred_check
    _
  $region11: #{vq_vae_forward.18} parent=0 // pred_check_branch
    %13 = sbr.rel (0) target = $region13
  $region12: #{vq_vae_forward.18} parent=0 // pred_region
    _
  $region13: #{vq_vae_forward.18} parent=0 // pred_fallthru
    _
  %v15 = vld [vmem:[%s0] sm:$0xf]
  %v16 = vld [vmem:[%s0 + $0x4] sm:$0xf]
  %v17 = vld [vmem:[%s0 + $0x8] sm:$0xf]
  %v18 = vld [vmem:[%s0 + $0xc] sm:$0xf]
  %v19 = vmax.bf16 %v15, 0
  %v20 = vmax.bf16 %v16, 0
  %v21 = vmax.bf16 %v17, 0
  %v22 = vmax.bf16 %v18, 0
  %v23 = vld [vmem:[%s1] sm:$0xf]
  %v24 = vld [vmem:[%s1 + $0x4] sm:$0xf]
  %v25 = vld [vmem:[%s1 + $0x8] sm:$0xf]
  %v26 = vld [vmem:[%s1 + $0xc] sm:$0xf]
  %v27 = vld [vmem:[%s1 + $0x10] sm:$0xf]
  %v28 = vld [vmem:[%s1 + $0x14] sm:$0xf]
  %v29 = vld [vmem:[%s1 + $0x18] sm:$0xf]
  %v30 = vld [vmem:[%s1 + $0x1c] sm:$0xf]
  %v31 = vld [vmem:[%s1 + $0x20] sm:$0xf]
  %v32 = vld [vmem:[%s1 + $0x24] sm:$0xf]
  %v33 = vld [vmem:[%s1 + $0x28] sm:$0xf]
  %v34 = vld [vmem:[%s1 + $0x2c] sm:$0xf]
  %v35 = vld [vmem:[%s1 + $0x30] sm:$0xf]
  %v36 = vld [vmem:[%s1 + $0x34] sm:$0xf]
  %v37 = vld [vmem:[%s1 + $0x38] sm:$0xf]
  %v38 = vld [vmem:[%s1 + $0x3c] sm:$0xf]
  %v39 = vld [vmem:[%s2] sm:$0x1]
  %v41 = vlaneseq
  %v42 = vshrl.u32 %v41, 7
  %v43 = vsub.s32 0, %v42
  %v44 = vrot.slane %v39, %v43
  %v50 = vunpack.c.l.b16 %v19
  %v51 = vunpack.c.l.b16 %v20
  %v52 = vunpack.c.l.b16 %v21
  %v53 = vunpack.c.l.b16 %v22
  %v54 = vpack.c.b16 %v51, %v50
  %v55 = vpack.c.b16 %v53, %v52
  %v74 = vunpack.c.l.b16 %v23
  %v75 = vunpack.c.l.b16 %v24
  %v76 = vunpack.c.l.b16 %v25
  %v77 = vunpack.c.l.b16 %v26
  %v78 = vunpack.c.l.b16 %v27
  %v79 = vunpack.c.l.b16 %v28
  %v80 = vunpack.c.l.b16 %v29
  %v81 = vunpack.c.l.b16 %v30
  %v82 = vunpack.c.l.b16 %v31
  %v83 = vunpack.c.l.b16 %v32
  %v84 = vunpack.c.l.b16 %v33
  %v85 = vunpack.c.l.b16 %v34
  %v86 = vunpack.c.l.b16 %v35
  %v87 = vunpack.c.l.b16 %v36
  %v88 = vunpack.c.l.b16 %v37
  %v89 = vunpack.c.l.b16 %v38
  %v90 = vpack.c.b16 %v75, %v74
  %v91 = vpack.c.b16 %v77, %v76
  %v92 = vpack.c.b16 %v79, %v78
  %v93 = vpack.c.b16 %v81, %v80
  %v94 = vpack.c.b16 %v83, %v82
  %v95 = vpack.c.b16 %v85, %v84
  %v96 = vpack.c.b16 %v87, %v86
  %v97 = vpack.c.b16 %v89, %v88
  %106 = vmatprep.subr.bf16.mxu0 0
  %107 = vmatpush1.bf16.msra.mxu0 %v90
  %108 = vmatprep.subr.bf16.mxu0 0
  %109 = vmatpush1.bf16.msra.mxu0 %v91
  %110 = vmatprep.subr.bf16.mxu0 0
  %111 = vmatpush1.bf16.msra.mxu0 %v92
  %112 = vmatprep.subr.bf16.mxu0 0
  %113 = vmatpush1.bf16.msra.mxu0 %v93
  %114 = vmatprep.subr.bf16.mxu0 0
  %115 = vmatpush1.bf16.msra.mxu0 %v94
  %116 = vmatprep.subr.bf16.mxu0 0
  %117 = vmatpush1.bf16.msra.mxu0 %v95
  %118 = vmatprep.subr.bf16.mxu0 0
  %119 = vmatpush1.bf16.msra.mxu0 %v96
  %120 = vmatprep.subr.bf16.mxu0 0
  %121 = vmatpush1.bf16.msra.mxu0 %v97
  %122 = vmatprep.subr.bf16.mxu0 0
  %123 = vmatpush1.bf16.msra.mxu0 0
  %124 = vmatprep.subr.bf16.mxu0 0
  %125 = vmatpush1.bf16.msra.mxu0 0
  %126 = vmatprep.subr.bf16.mxu0 0
  %127 = vmatpush1.bf16.msra.mxu0 0
  %128 = vmatprep.subr.bf16.mxu0 0
  %129 = vmatpush1.bf16.msra.mxu0 0
  %130 = vmatprep.subr.bf16.mxu0 0
  %131 = vmatpush1.bf16.msra.mxu0 0
  %132 = vmatprep.subr.bf16.mxu0 0
  %133 = vmatpush1.bf16.msra.mxu0 0
  %134 = vmatprep.subr.bf16.mxu0 0
  %135 = vmatpush1.bf16.msra.mxu0 0
  %136 = vmatprep.subr.bf16.mxu0 0
  %137 = vmatpush1.bf16.msra.mxu0 0
  %138 = vmatprep.mubr.bf16.mxu0 0
  %139 = vmatmul.mubr.bf16.gmra.mrb[0].mxu0 %v54
  %v140 = vpop.f32.mrb[0].mxu0
  %v141 = vadd.f32 %v44, %v140
  %v142 = vpop.f32.mrb[0].mxu0
  %v143 = vpop.f32.mrb[0].mxu0
  %v144 = vadd.f32 %v44, %v143
  %v145 = vpop.f32.mrb[0].mxu0
  %146 = vmatprep.mubr.bf16.mxu0 0
  %147 = vmatmul.mubr.bf16.gmra.mrb[0].mxu0 %v55
  %v148 = vpop.f32.mrb[0].mxu0
  %v149 = vadd.f32 %v44, %v148
  %v150 = vpop.f32.mrb[0].mxu0
  %v151 = vpop.f32.mrb[0].mxu0
  %v152 = vadd.f32 %v44, %v151
  %v153 = vpop.f32.mrb[0].mxu0
  %154 = vdwg.mxu0
  %v155 = vmax.f32 %v141, 0.0
  %v156 = vmax.f32 %v144, 0.0
  %v157 = vmax.f32 %v149, 0.0
  %v158 = vmax.f32 %v152, 0.0
  %v159 = vpack.c.bf16 %v156, %v155
  %v160 = vpack.c.bf16 %v158, %v157
  %v163 = vunpack.c.l.b16 %v159
  %v164 = vunpack.c.h.b16 %v159
  %v165 = vunpack.c.l.b16 %v160
  %v166 = vunpack.c.h.b16 %v160
  %v167 = vpack.c.b16 %v163, %v163
  %v168 = vpack.c.b16 %v164, %v164
  %v169 = vpack.c.b16 %v165, %v165
  %v170 = vpack.c.b16 %v166, %v166
  %175 = vst [vmem:[%s3] sm:$0xf] %v167
  %176 = vst [vmem:[%s3 + $0x4] sm:$0xf] %v168
  %177 = vst [vmem:[%s3 + $0x8] sm:$0xf] %v169
  %178 = vst [vmem:[%s3 + $0xc] sm:$0xf] %v170
  // Predicated region
  $region14: #{vq_vae_forward.18} parent=0 // pred_check
    _
  $region15: #{vq_vae_forward.18} parent=0 // pred_check_branch
    %180 = sbr.rel (0) target = $region17
  $region16: #{vq_vae_forward.18} parent=0 // pred_region
    _
  $region17: #{vq_vae_forward.18} parent=0 // pred_fallthru
    _
  // Predicated region
  $region18: #{vq_vae_forward.18} parent=0 // pred_check
    _
  $region19: #{vq_vae_forward.18} parent=0 // pred_check_branch
    %182 = sbr.rel (0) target = $region21
  $region20: #{vq_vae_forward.18} parent=0 // pred_region
    _
  $region21: #{vq_vae_forward.18} parent=0 // pred_fallthru
    _

// kernel: tile.18
$region0: #{tile.18}
  #allocation0 [shape = 's32[1]{0}', space=sflag, size = 0x4, scoped, tag = 'scoped memory for tile.18']
  %s0 = inlined_call_operand.vmem [shape: f32[3], index: 0, kind: input, shape index: {}]
  %s1 = inlined_call_operand.vmem [shape: f32[4,3], index: 1, kind: output, shape index: {}]
  // Predicated region
  $region2: #{tile.18} parent=0 // pred_check
    _
  $region3: #{tile.18} parent=0 // pred_check_branch
    %3 = sbr.rel (0) target = $region5
  $region4: #{tile.18} parent=0 // pred_region
    _
  $region5: #{tile.18} parent=0 // pred_fallthru
    _
  %v4 = vld [vmem:[%s0] ss:$0 sm:$0xff]
  %5 = vst [vmem:[%s1] sm:$0xf] %v4

// kernel: tile.19
$region0: #{tile.19}
  %s0 = inlined_call_operand.vmem [shape: f32[4,3], index: 0, kind: input, shape index: {}]
  %s1 = inlined_call_operand.vmem [shape: f32[12], index: 1, kind: output, shape index: {}]
  $region1: #{tile.19} parent=0
    #allocation0 [shape = 'u8[4096]{0}', space=vmem, size = 0x1000, scoped, tag = 'scoped mem for output reshape']
    #allocation1 [shape = 'u8[4096]{0}', space=vmem, size = 0x1000, scoped, tag = 'scoped mem for input reshape']
    %s3 = sshllo.u32 0, 4
    %v4 = vld [vmem:[%s0] sm:%s3]
    %5 = vst [vmem:[#allocation1] sm:%s3] %v4
    %v6 = vld [vmem:[#allocation1] sm:$0x1]
    %vm7 = vcmask 23552
    %8 = vst.msk [vmem:[#allocation0] sm:$0x1] %vm7, %v6
    %s9 = scalar_lea.vmem [#allocation1], 3
    %v10 = vld [vmem:[%s9] sm:$0x1]
    %11 = vrot.lane.b32.xlu0 %v10, 9
    %v12 = vpop.permute.xlu0 %11
    %vm13 = vcmask 97352
    %14 = vst.msk [vmem:[#allocation0] sm:$0x1] %vm13, %v12
    %s15 = scalar_lea.vmem [#allocation1], 2
    %v16 = vld [vmem:[%s15] sm:$0x1]
    %17 = vrot.lane.b32.xlu0 %v16, 6
    %v18 = vpop.permute.xlu0 %17
    %vm19 = vcmask 72752
    %20 = vst.msk [vmem:[#allocation0] sm:$0x1] %vm19, %v18
    %s21 = scalar_lea.vmem [#allocation1], 1
    %v22 = vld [vmem:[%s21] sm:$0x1]
    %23 = vrot.lane.b32.xlu0 %v22, 3
    %v24 = vpop.permute.xlu0 %23
    %vm25 = vcmask 48152
    %26 = vst.msk [vmem:[#allocation0] sm:$0x1] %vm25, %v24
    %s28 = sshllo.u32 0, 1
    %v30 = vld [vmem:[#allocation0] sm:%s28]
    %s31 = sshllo.u32 0, 1
    %32 = vst [vmem:[%s1] sm:%s31] %v30

// kernel: squeeze.34
$region0: #{squeeze.34}
  %s0 = inlined_call_operand.vmem [shape: f32[32], index: 0, kind: input, shape index: {}]
  %s1 = inlined_call_operand.vmem [shape: f32[2,16], index: 1, kind: output, shape index: {}]
  $region1: #{squeeze.34} parent=0
    #allocation0 [shape = 'u8[4096]{0}', space=vmem, size = 0x1000, scoped, tag = 'scoped mem for output reshape']
    #allocation1 [shape = 'u8[4096]{0}', space=vmem, size = 0x1000, scoped, tag = 'scoped mem for input reshape']
    %s3 = sshllo.u32 0, 1
    %v4 = vld [vmem:[%s0] sm:%s3]
    %5 = vst [vmem:[#allocation1] sm:%s3] %v4
    %v6 = vld [vmem:[#allocation1] sm:$0x1]
    %vm7 = vcmask 130048
    %8 = vst.msk [vmem:[#allocation0] sm:$0x1] %vm7, %v6
    %v9 = vld [vmem:[#allocation1] sm:$0x1]
    %10 = vrot.lane.b32.xlu0 %v9, 112
    %v11 = vpop.permute.xlu0 %10
    %vm12 = vcmask 130048
    %s13 = scalar_lea.vmem [#allocation0], 1
    %14 = vst.msk [vmem:[%s13] sm:$0x1] %vm12, %v11
    %s16 = sshllo.u32 0, 2
    %v18 = vld [vmem:[#allocation0] sm:%s16]
    %s19 = sshllo.u32 0, 2
    %20 = vst [vmem:[%s1] sm:%s19] %v18

// kernel: vq_vae_forward.19
$region0: #{vq_vae_forward.19}
  #allocation0 [shape = 'u32[]', space=smem, size = 0x4, offset = 0x4, fixed_abs, tag = 'smem constant byte address 0x4 - core index']
  #allocation1 [shape = 'u32[144,128]{1,0:T(1,128)}', space=vmem, size = 0x12000, scoped, tag = 'internal scratch']
  %s0 = inlined_call_operand.vmem [shape: bf16[128,256], index: 0, kind: input, shape index: {}]
  %s1 = inlined_call_operand.vmem [shape: bf16[256,128], index: 1, kind: input, shape index: {}]
  %s2 = inlined_call_operand.vmem [shape: f32[1,128], index: 2, kind: input, shape index: {}]
  %s3 = inlined_call_operand.vmem [shape: f32[128,128], index: 3, kind: output, shape index: {}]
  %s4 = sld [smem:[#allocation0]]
  $region22: #{vq_vae_forward.19} parent=0
    _
  %s6 = ssub.s32 1, %s4
  %s7 = scalar_select 0, %s6, %s4
  // Predicated region
  $region2: #{vq_vae_forward.19} parent=0 // pred_check
    _
  $region3: #{vq_vae_forward.19} parent=0 // pred_check_branch
    %9 = sbr.rel (0) target = $region5
  $region4: #{vq_vae_forward.19} parent=0 // pred_region
    _
  $region5: #{vq_vae_forward.19} parent=0 // pred_fallthru
    _
  // Predicated region
  $region6: #{vq_vae_forward.19} parent=0 // pred_check
    _
  $region7: #{vq_vae_forward.19} parent=0 // pred_check_branch
    %11 = sbr.rel (0) target = $region9
  $region8: #{vq_vae_forward.19} parent=0 // pred_region
    _
  $region9: #{vq_vae_forward.19} parent=0 // pred_fallthru
    _
  // Predicated region
  $region10: #{vq_vae_forward.19} parent=0 // pred_check
    _
  $region11: #{vq_vae_forward.19} parent=0 // pred_check_branch
    %13 = sbr.rel (0) target = $region13
  $region12: #{vq_vae_forward.19} parent=0 // pred_region
    _
  $region13: #{vq_vae_forward.19} parent=0 // pred_fallthru
    _
  %v15 = vld [vmem:[%s0] sm:$0xff]
  %v16 = vld [vmem:[%s0 + $0x8] sm:$0xff]
  %v17 = vld [vmem:[%s0 + $0x10] sm:$0xff]
  %v18 = vld [vmem:[%s0 + $0x18] sm:$0xff]
  %v19 = vld [vmem:[%s0 + $0x20] sm:$0xff]
  %v20 = vld [vmem:[%s0 + $0x28] sm:$0xff]
  %v21 = vld [vmem:[%s0 + $0x30] sm:$0xff]
  %v22 = vld [vmem:[%s0 + $0x38] sm:$0xff]
  %v23 = vld [vmem:[%s0 + $0x40] sm:$0xff]
  %v24 = vld [vmem:[%s0 + $0x48] sm:$0xff]
  %v25 = vld [vmem:[%s0 + $0x50] sm:$0xff]
  %v26 = vld [vmem:[%s0 + $0x58] sm:$0xff]
  %v27 = vld [vmem:[%s0 + $0x60] sm:$0xff]
  %v28 = vld [vmem:[%s0 + $0x68] sm:$0xff]
  %v29 = vld [vmem:[%s0 + $0x70] sm:$0xff]
  %v30 = vld [vmem:[%s0 + $0x78] sm:$0xff]
  %v31 = vld [vmem:[%s1] sm:$0xf]
  %v32 = vld [vmem:[%s1 + $0x4] sm:$0xf]
  %v33 = vld [vmem:[%s1 + $0x8] sm:$0xf]
  %v34 = vld [vmem:[%s1 + $0xc] sm:$0xf]
  %v35 = vld [vmem:[%s1 + $0x10] sm:$0xf]
  %v36 = vld [vmem:[%s1 + $0x14] sm:$0xf]
  %v37 = vld [vmem:[%s1 + $0x18] sm:$0xf]
  %v38 = vld [vmem:[%s1 + $0x1c] sm:$0xf]
  %v39 = vld [vmem:[%s1 + $0x20] sm:$0xf]
  %v40 = vld [vmem:[%s1 + $0x24] sm:$0xf]
  %v41 = vld [vmem:[%s1 + $0x28] sm:$0xf]
  %v42 = vld [vmem:[%s1 + $0x2c] sm:$0xf]
  %v43 = vld [vmem:[%s1 + $0x30] sm:$0xf]
  %v44 = vld [vmem:[%s1 + $0x34] sm:$0xf]
  %v45 = vld [vmem:[%s1 + $0x38] sm:$0xf]
  %v46 = vld [vmem:[%s1 + $0x3c] sm:$0xf]
  %v47 = vld [vmem:[%s1 + $0x40] sm:$0xf]
  %v48 = vld [vmem:[%s1 + $0x44] sm:$0xf]
  %v49 = vld [vmem:[%s1 + $0x48] sm:$0xf]
  %v50 = vld [vmem:[%s1 + $0x4c] sm:$0xf]
  %v51 = vld [vmem:[%s1 + $0x50] sm:$0xf]
  %v52 = vld [vmem:[%s1 + $0x54] sm:$0xf]
  %v53 = vld [vmem:[%s1 + $0x58] sm:$0xf]
  %v54 = vld [vmem:[%s1 + $0x5c] sm:$0xf]
  %v55 = vld [vmem:[%s1 + $0x60] sm:$0xf]
  %v56 = vld [vmem:[%s1 + $0x64] sm:$0xf]
  %v57 = vld [vmem:[%s1 + $0x68] sm:$0xf]
  %v58 = vld [vmem:[%s1 + $0x6c] sm:$0xf]
  %v59 = vld [vmem:[%s1 + $0x70] sm:$0xf]
  %v60 = vld [vmem:[%s1 + $0x74] sm:$0xf]
  %v61 = vld [vmem:[%s1 + $0x78] sm:$0xf]
  %v62 = vld [vmem:[%s1 + $0x7c] sm:$0xf]
  %v63 = vld [vmem:[%s2] sm:$0x1]
  %v65 = vlaneseq
  %v66 = vshrl.u32 %v65, 7
  %v67 = vsub.s32 0, %v66
  %v68 = vrot.slane %v63, %v67
  %v86 = vunpack.c.l.b16 %v15
  %v87 = vunpack.c.h.b16 %v15
  %v88 = vunpack.c.l.b16 %v16
  %v89 = vunpack.c.h.b16 %v16
  %v90 = vunpack.c.l.b16 %v17
  %v91 = vunpack.c.h.b16 %v17
  %v92 = vunpack.c.l.b16 %v18
  %v93 = vunpack.c.h.b16 %v18
  %v94 = vunpack.c.l.b16 %v19
  %v95 = vunpack.c.h.b16 %v19
  %v96 = vunpack.c.l.b16 %v20
  %v97 = vunpack.c.h.b16 %v20
  %v98 = vunpack.c.l.b16 %v21
  %v99 = vunpack.c.h.b16 %v21
  %v100 = vunpack.c.l.b16 %v22
  %v101 = vunpack.c.h.b16 %v22
  %v102 = vunpack.c.l.b16 %v23
  %v103 = vunpack.c.h.b16 %v23
  %v104 = vunpack.c.l.b16 %v24
  %v105 = vunpack.c.h.b16 %v24
  %v106 = vunpack.c.l.b16 %v25
  %v107 = vunpack.c.h.b16 %v25
  %v108 = vunpack.c.l.b16 %v26
  %v109 = vunpack.c.h.b16 %v26
  %v110 = vunpack.c.l.b16 %v27
  %v111 = vunpack.c.h.b16 %v27
  %v112 = vunpack.c.l.b16 %v28
  %v113 = vunpack.c.h.b16 %v28
  %v114 = vunpack.c.l.b16 %v29
  %v115 = vunpack.c.h.b16 %v29
  %v116 = vunpack.c.l.b16 %v30
  %v117 = vunpack.c.h.b16 %v30
  %v118 = vpack.c.b16 %v88, %v86
  %v119 = vpack.c.b16 %v89, %v87
  %v120 = vpack.c.b16 %v92, %v90
  %v121 = vpack.c.b16 %v93, %v91
  %v122 = vpack.c.b16 %v96, %v94
  %v123 = vpack.c.b16 %v97, %v95
  %v124 = vpack.c.b16 %v100, %v98
  %v125 = vpack.c.b16 %v101, %v99
  %v126 = vpack.c.b16 %v104, %v102
  %v127 = vpack.c.b16 %v105, %v103
  %v128 = vpack.c.b16 %v108, %v106
  %v129 = vpack.c.b16 %v109, %v107
  %v130 = vpack.c.b16 %v112, %v110
  %v131 = vpack.c.b16 %v113, %v111
  %v132 = vpack.c.b16 %v116, %v114
  %v133 = vpack.c.b16 %v117, %v115
  %v182 = vunpack.c.l.b16 %v31
  %v183 = vunpack.c.l.b16 %v32
  %v184 = vunpack.c.l.b16 %v33
  %v185 = vunpack.c.l.b16 %v34
  %v186 = vunpack.c.l.b16 %v35
  %v187 = vunpack.c.l.b16 %v36
  %v188 = vunpack.c.l.b16 %v37
  %v189 = vunpack.c.l.b16 %v38
  %v190 = vunpack.c.l.b16 %v39
  %v191 = vunpack.c.l.b16 %v40
  %v192 = vunpack.c.l.b16 %v41
  %v193 = vunpack.c.l.b16 %v42
  %v194 = vunpack.c.l.b16 %v43
  %v195 = vunpack.c.l.b16 %v44
  %v196 = vunpack.c.l.b16 %v45
  %v197 = vunpack.c.l.b16 %v46
  %v198 = vunpack.c.l.b16 %v47
  %v199 = vunpack.c.l.b16 %v48
  %v200 = vunpack.c.l.b16 %v49
  %v201 = vunpack.c.l.b16 %v50
  %v202 = vunpack.c.l.b16 %v51
  %v203 = vunpack.c.l.b16 %v52
  %v204 = vunpack.c.l.b16 %v53
  %v205 = vunpack.c.l.b16 %v54
  %v206 = vunpack.c.l.b16 %v55
  %v207 = vunpack.c.l.b16 %v56
  %v208 = vunpack.c.l.b16 %v57
  %v209 = vunpack.c.l.b16 %v58
  %v210 = vunpack.c.l.b16 %v59
  %v211 = vunpack.c.l.b16 %v60
  %v212 = vunpack.c.l.b16 %v61
  %v213 = vunpack.c.l.b16 %v62
  %v214 = vpack.c.b16 %v183, %v182
  %v215 = vpack.c.b16 %v185, %v184
  %v216 = vpack.c.b16 %v187, %v186
  %v217 = vpack.c.b16 %v189, %v188
  %v218 = vpack.c.b16 %v191, %v190
  %v219 = vpack.c.b16 %v193, %v192
  %v220 = vpack.c.b16 %v195, %v194
  %v221 = vpack.c.b16 %v197, %v196
  %v222 = vpack.c.b16 %v199, %v198
  %v223 = vpack.c.b16 %v201, %v200
  %v224 = vpack.c.b16 %v203, %v202
  %v225 = vpack.c.b16 %v205, %v204
  %v226 = vpack.c.b16 %v207, %v206
  %v227 = vpack.c.b16 %v209, %v208
  %v228 = vpack.c.b16 %v211, %v210
  %v229 = vpack.c.b16 %v213, %v212
  %246 = vmatprep.subr.bf16.mxu0 0
  %247 = vmatpush1.bf16.msra.mxu0 %v214
  %248 = vmatprep.subr.bf16.mxu0 0
  %249 = vmatpush1.bf16.msra.mxu0 %v215
  %250 = vmatprep.subr.bf16.mxu0 0
  %251 = vmatpush1.bf16.msra.mxu0 %v216
  %252 = vmatprep.subr.bf16.mxu0 0
  %253 = vmatpush1.bf16.msra.mxu0 %v217
  %254 = vmatprep.subr.bf16.mxu0 0
  %255 = vmatpush1.bf16.msra.mxu0 %v218
  %256 = vmatprep.subr.bf16.mxu0 0
  %257 = vmatpush1.bf16.msra.mxu0 %v219
  %258 = vmatprep.subr.bf16.mxu0 0
  %259 = vmatpush1.bf16.msra.mxu0 %v220
  %260 = vmatprep.subr.bf16.mxu0 0
  %261 = vmatpush1.bf16.msra.mxu0 %v221
  %262 = vmatprep.subr.bf16.mxu0 0
  %263 = vmatpush1.bf16.msra.mxu0 %v222
  %264 = vmatprep.subr.bf16.mxu0 0
  %265 = vmatpush1.bf16.msra.mxu0 %v223
  %266 = vmatprep.subr.bf16.mxu0 0
  %267 = vmatpush1.bf16.msra.mxu0 %v224
  %268 = vmatprep.subr.bf16.mxu0 0
  %269 = vmatpush1.bf16.msra.mxu0 %v225
  %270 = vmatprep.subr.bf16.mxu0 0
  %271 = vmatpush1.bf16.msra.mxu0 %v226
  %272 = vmatprep.subr.bf16.mxu0 0
  %273 = vmatpush1.bf16.msra.mxu0 %v227
  %274 = vmatprep.subr.bf16.mxu0 0
  %275 = vmatpush1.bf16.msra.mxu0 %v228
  %276 = vmatprep.subr.bf16.mxu0 0
  %277 = vmatpush1.bf16.msra.mxu0 %v229
  %278 = vmatprep.mubr.bf16.mxu0 %v119
  %279 = vmatmul.mubr.bf16.gmra.mrb[0].mxu0 %v118
  %v280 = vpop.f32.mrb[0].mxu0
  %v281 = vadd.f32 %v68, %v280
  %v282 = vpop.f32.mrb[0].mxu0
  %v283 = vpop.f32.mrb[0].mxu0
  %v284 = vadd.f32 %v68, %v283
  %v285 = vpop.f32.mrb[0].mxu0
  %286 = vmatprep.mubr.bf16.mxu0 %v121
  %287 = vmatmul.mubr.bf16.gmra.mrb[0].mxu0 %v120
  %v288 = vpop.f32.mrb[0].mxu0
  %v289 = vadd.f32 %v68, %v288
  %v290 = vpop.f32.mrb[0].mxu0
  %v291 = vpop.f32.mrb[0].mxu0
  %v292 = vadd.f32 %v68, %v291
  %v293 = vpop.f32.mrb[0].mxu0
  %294 = vmatprep.mubr.bf16.mxu0 %v123
  %295 = vmatmul.mubr.bf16.gmra.mrb[0].mxu0 %v122
  %v296 = vpop.f32.mrb[0].mxu0
  %v297 = vadd.f32 %v68, %v296
  %v298 = vpop.f32.mrb[0].mxu0
  %v299 = vpop.f32.mrb[0].mxu0
  %v300 = vadd.f32 %v68, %v299
  %v301 = vpop.f32.mrb[0].mxu0
  %302 = vmatprep.mubr.bf16.mxu0 %v125
  %303 = vmatmul.mubr.bf16.gmra.mrb[0].mxu0 %v124
  %v304 = vpop.f32.mrb[0].mxu0
  %v305 = vadd.f32 %v68, %v304
  %v306 = vpop.f32.mrb[0].mxu0
  %v307 = vpop.f32.mrb[0].mxu0
  %v308 = vadd.f32 %v68, %v307
  %v309 = vpop.f32.mrb[0].mxu0
  %310 = vmatprep.mubr.bf16.mxu0 %v127
  %311 = vmatmul.mubr.bf16.gmra.mrb[0].mxu0 %v126
  %v312 = vpop.f32.mrb[0].mxu0
  %v313 = vadd.f32 %v68, %v312
  %v314 = vpop.f32.mrb[0].mxu0
  %v315 = vpop.f32.mrb[0].mxu0
  %v316 = vadd.f32 %v68, %v315
  %v317 = vpop.f32.mrb[0].mxu0
  %318 = vmatprep.mubr.bf16.mxu0 %v129
  %319 = vmatmul.mubr.bf16.gmra.mrb[0].mxu0 %v128
  %v320 = vpop.f32.mrb[0].mxu0
  %v321 = vadd.f32 %v68, %v320
  %v322 = vpop.f32.mrb[0].mxu0
  %v323 = vpop.f32.mrb[0].mxu0
  %v324 = vadd.f32 %v68, %v323
  %v325 = vpop.f32.mrb[0].mxu0
  %326 = vmatprep.mubr.bf16.mxu0 %v131
  %327 = vmatmul.mubr.bf16.gmra.mrb[0].mxu0 %v130
  %v328 = vpop.f32.mrb[0].mxu0
  %v329 = vadd.f32 %v68, %v328
  %v330 = vpop.f32.mrb[0].mxu0
  %v331 = vpop.f32.mrb[0].mxu0
  %v332 = vadd.f32 %v68, %v331
  %v333 = vpop.f32.mrb[0].mxu0
  %334 = vmatprep.mubr.bf16.mxu0 %v133
  %335 = vmatmul.mubr.bf16.gmra.mrb[0].mxu0 %v132
  %v336 = vpop.f32.mrb[0].mxu0
  %v337 = vadd.f32 %v68, %v336
  %v338 = vpop.f32.mrb[0].mxu0
  %v339 = vpop.f32.mrb[0].mxu0
  %v340 = vadd.f32 %v68, %v339
  %v341 = vpop.f32.mrb[0].mxu0
  %342 = vdwg.mxu0
  %343 = vst [vmem:[%s3] sm:$0xff] %v281
  %344 = vst [vmem:[%s3 + $0x8] sm:$0xff] %v284
  %345 = vst [vmem:[%s3 + $0x10] sm:$0xff] %v289
  %346 = vst [vmem:[%s3 + $0x18] sm:$0xff] %v292
  %347 = vst [vmem:[%s3 + $0x20] sm:$0xff] %v297
  %348 = vst [vmem:[%s3 + $0x28] sm:$0xff] %v300
  %349 = vst [vmem:[%s3 + $0x30] sm:$0xff] %v305
  %350 = vst [vmem:[%s3 + $0x38] sm:$0xff] %v308
  %351 = vst [vmem:[%s3 + $0x40] sm:$0xff] %v313
  %352 = vst [vmem:[%s3 + $0x48] sm:$0xff] %v316
  %353 = vst [vmem:[%s3 + $0x50] sm:$0xff] %v321
  %354 = vst [vmem:[%s3 + $0x58] sm:$0xff] %v324
  %355 = vst [vmem:[%s3 + $0x60] sm:$0xff] %v329
  %356 = vst [vmem:[%s3 + $0x68] sm:$0xff] %v332
  %357 = vst [vmem:[%s3 + $0x70] sm:$0xff] %v337
  %358 = vst [vmem:[%s3 + $0x78] sm:$0xff] %v340
  // Predicated region
  $region14: #{vq_vae_forward.19} parent=0 // pred_check
    _
  $region15: #{vq_vae_forward.19} parent=0 // pred_check_branch
    %360 = sbr.rel (0) target = $region17
  $region16: #{vq_vae_forward.19} parent=0 // pred_region
    _
  $region17: #{vq_vae_forward.19} parent=0 // pred_fallthru
    _
  // Predicated region
  $region18: #{vq_vae_forward.19} parent=0 // pred_check
    _
  $region19: #{vq_vae_forward.19} parent=0 // pred_check_branch
    %362 = sbr.rel (0) target = $region21
  $region20: #{vq_vae_forward.19} parent=0 // pred_region
    _
  $region21: #{vq_vae_forward.19} parent=0 // pred_fallthru
    _

</llo_original>
